<compile_context>
chip_gen: v5e
topology: v5e:2x2
jax: 0.10.0
libtpu: 0.0.40
codegen_flags: <defaults>
</compile_context>

<pallas_src>
import functools

import jax
import jax.numpy as jnp
from jax.experimental import pallas as pl
from jax.experimental.pallas import tpu as pltpu


# ----------------------------------------------------------------------------
# Fused kernel: runs once, on batch element 0 (the only one reaching outputs).
# ----------------------------------------------------------------------------
def _msa_yolov_kernel(scale, sim_thresh, num_heads,
                      xcls_ref, xreg_ref,
                      wqkv_c_ref, wqkv_r_ref,
                      w1_ref, b1_ref, rw1_ref, rb1_ref,
                      w2_ref, b2_ref, rw2_ref, rb2_ref,
                      out_ref, reg_out_ref):
    _, N, C = xcls_ref.shape
    hd = C // num_heads
    inv_h = 1.0 / num_heads

    def mm_bf16(a, b):
        # Feature-path matmul: bf16 operands, f32 accumulation on the MXU.
        return jnp.dot(a.astype(jnp.bfloat16), b.astype(jnp.bfloat16),
                       preferred_element_type=jnp.float32)

    def mm_f32(a, b):
        # Precision-critical matmul kept in f32.
        return jnp.dot(a, b, preferred_element_type=jnp.float32)

    def mm_t_f32(a, b):
        # a @ b.T (contract last dims) in f32 without materializing a transpose.
        return jax.lax.dot_general(
            a, b, dimension_numbers=(((1,), (1,)), ((), ())),
            preferred_element_type=jnp.float32)

    def l2n(x):
        # x / torch.norm(x, dim=-1, keepdim=True); no eps, matching the ref.
        return x * jax.lax.rsqrt(jnp.sum(x * x, axis=-1, keepdims=True))

    def softmax(x):
        m = jnp.max(x, axis=-1, keepdims=True)
        e = jnp.exp(x - m)
        return e * pl.reciprocal(jnp.sum(e, axis=-1, keepdims=True), approx=True)

    x_cls = xcls_ref[0]                        # (N, C) f32, batch 0
    x_reg = xreg_ref[0]

    # qkv projections (qkv_bias=False).  Columns: [q | k | v], heads contiguous.
    qkv_c = mm_f32(x_cls, wqkv_c_ref[...])     # (N, 3C) f32
    qkv_r = mm_f32(x_reg, wqkv_r_ref[...])

    v_cls_full = qkv_c[:, 2 * C:3 * C]         # == x_ori   (N, C)
    v_reg_full = qkv_r[:, 2 * C:3 * C]

    w1 = w1_ref[...]                           # (2C, 2C) bf16, resident in VMEM
    rw1 = rw1_ref[...]

    # linear1 of trans_cls = [attn@v_cls | v_cls] without materializing the
    # concat:  msa = sum_h (attn_h @ v_h) @ W1[h*hd:(h+1)*hd] + v @ W1[C:] + b1
    msa = mm_bf16(v_cls_full, w1[C:, :]) + b1_ref[...]      # (N, 2C) f32
    reg_msa = mm_bf16(v_reg_full, rw1[C:, :]) + rb1_ref[...]

    attn_sum = jnp.zeros((N, N), jnp.float32)
    raw_sum = jnp.zeros((N, N), jnp.float32)

    for h in range(num_heads):                 # static unroll over heads (H=4)
        lo, hi = h * hd, (h + 1) * hd
        q_c = l2n(qkv_c[:, lo:hi])
        k_c = l2n(qkv_c[:, C + lo:C + hi])
        q_r = l2n(qkv_r[:, lo:hi])
        k_r = l2n(qkv_r[:, C + lo:C + hi])
        v_c = v_cls_full[:, lo:hi]
        v_r = v_reg_full[:, lo:hi]

        v_cn = l2n(v_c)
        raw_sum += mm_t_f32(v_cn, v_cn)        # cosine similarity of v_cls

        attn_c = softmax(mm_t_f32(q_c, k_c) * scale)
        attn_r = softmax(mm_t_f32(q_r, k_r) * scale)
        attn_h = 0.5 * (attn_c + attn_r)
        attn_sum += attn_h

        msa += mm_bf16(mm_bf16(attn_h, v_c), w1[lo:hi, :])
        reg_msa += mm_bf16(mm_bf16(attn_h, v_r), rw1[lo:hi, :])

    # sim_round2 (the reference keys on batch 0, which is what we computed).
    sim_mask = jnp.where(raw_sum * inv_h > sim_thresh, 1.0, 0.0).astype(jnp.float32)
    sim_r2 = softmax(attn_sum * inv_h)
    masked = sim_mask * sim_r2
    sim = masked * pl.reciprocal(jnp.sum(masked, axis=-1, keepdims=True),
                                 approx=True)

    # find_similar_round2 + linear2, again without materializing the concat:
    #   out = (sim @ msa) @ W2[:2C] + msa @ W2[2C:] + b2
    w2 = w2_ref[...]                           # (4C, 4C) bf16
    rw2 = rw2_ref[...]
    soft_sim = mm_bf16(sim, msa)
    # TODO(synk): reference Attention_msa returns 3 values but MSA_yolov unpacks
    # 4; the reg branch reuses the cls-derived sim_round2 (reg_sim_round2 := sim).
    reg_soft_sim = mm_bf16(sim, reg_msa)

    out_ref[...] = (mm_bf16(soft_sim, w2[:2 * C, :])
                    + mm_bf16(msa, w2[2 * C:, :]) + b2_ref[...])
    reg_out_ref[...] = (mm_bf16(reg_soft_sim, rw2[:2 * C, :])
                        + mm_bf16(reg_msa, rw2[2 * C:, :]) + rb2_ref[...])


# ----------------------------------------------------------------------------
# Wrapper
# ----------------------------------------------------------------------------
def msa_yolov_forward(params, x_cls, x_reg, sim_thresh=0.75):
    B, N, C = x_cls.shape
    H = int(params["num_heads"])
    assert C % H == 0

    kernel = functools.partial(_msa_yolov_kernel, float(params["scale"]),
                               float(sim_thresh), H)

    f32, bf16 = jnp.float32, jnp.bfloat16
    weights = (
        params["qkv_cls_w"].astype(f32),                       # f32: feeds logits
        params["qkv_reg_w"].astype(f32),
        params["linear1_w"].astype(bf16),                      # bf16 feature path
        params["linear1_b"].reshape(1, 2 * C).astype(f32),
        params["reg_linear1_w"].astype(bf16),
        params["reg_linear1_b"].reshape(1, 2 * C).astype(f32),
        params["linear2_w"].astype(bf16),
        params["linear2_b"].reshape(1, 4 * C).astype(f32),
        params["reg_linear2_w"].astype(bf16),
        params["reg_linear2_b"].reshape(1, 4 * C).astype(f32),
    )

    batch0_map = lambda i: (0, 0, 0)   # only batch 0 is ever DMA'd in
    const_map = lambda i: (0, 0)

    out, reg_out = pl.pallas_call(
        kernel,
        grid=(1,),
        in_specs=[pl.BlockSpec((1, N, C), batch0_map),
                  pl.BlockSpec((1, N, C), batch0_map)]
                 + [pl.BlockSpec(w.shape, const_map) for w in weights],
        out_specs=(pl.BlockSpec((N, 4 * C), const_map),
                   pl.BlockSpec((N, 4 * C), const_map)),
        out_shape=(jax.ShapeDtypeStruct((N, 4 * C), f32),
                   jax.ShapeDtypeStruct((N, 4 * C), f32)),
        compiler_params=pltpu.CompilerParams(
            dimension_semantics=("arbitrary",),
            vmem_limit_bytes=32 * 1024 * 1024),
        # TODO(synk): for very large N (~>1k proposals) the (N, N) attention
        # should be tiled flash-style along the query axis (v7x: 64 MiB VMEM).
    )(x_cls.astype(f32), x_reg.astype(f32), *weights)

    # Matches the reference: find_similar_round2 / sim_round2 use batch 0 only,
    # so the module output is exactly the batch-0 result, shape (N, 4C).
    return out, reg_out


# ----------------------------------------------------------------------------
# Parameters
# ----------------------------------------------------------------------------
def init_params(key, dim, num_heads=4, scale=25):
    ks = jax.random.split(key, 10)

    def w(k, shape):
        return jax.random.normal(k, shape, jnp.float32) * 0.02

    return {
        "num_heads": num_heads,
        "scale": float(scale),
        # weights stored as (in_features, out_features), i.e. torch W.T
        "qkv_cls_w": w(ks[0], (dim, 3 * dim)),       # qkv_bias=False
        "qkv_reg_w": w(ks[1], (dim, 3 * dim)),
        "linear1_w": w(ks[2], (2 * dim, 2 * dim)),
        "linear1_b": w(ks[3], (2 * dim,)),
        "reg_linear1_w": w(ks[4], (2 * dim, 2 * dim)),
        "reg_linear1_b": w(ks[5], (2 * dim,)),
        "linear2_w": w(ks[6], (4 * dim, 4 * dim)),
        "linear2_b": w(ks[7], (4 * dim,)),
        "reg_linear2_w": w(ks[8], (4 * dim, 4 * dim)),
        "reg_linear2_b": w(ks[9], (4 * dim,)),
    }


# ----------------------------------------------------------------------------
if __name__ == "__main__":
    key = jax.random.PRNGKey(0)
    dim = 32        # C
    B, N = 2, 16    # batch of frames / proposals per frame
    kp, kc, kr = jax.random.split(key, 3)

    params = init_params(kp, dim, num_heads=4, scale=25)
    x_cls = jax.random.normal(kc, (B, N, dim), jnp.float32)
    x_reg = jax.random.normal(kr, (B, N, dim), jnp.float32)

    fwd = jax.jit(functools.partial(msa_yolov_forward, params))
    out, reg_out = fwd(x_cls, x_reg)
    jax.block_until_ready((out, reg_out))
    assert out.shape == (N, 4 * dim) and reg_out.shape == (N, 4 * dim)
    assert bool(jnp.all(jnp.isfinite(out))) and bool(jnp.all(jnp.isfinite(reg_out)))
    print("KERNEL_OK")
</pallas_src>

<mosaic_0001>
module attributes {stable_mosaic.version = 11 : i64} {
  func.func @_msa_yolov_kernel(%arg0: i32, %arg1: memref<1x16x32xf32, #tpu.memory_space<vmem>>, %arg2: memref<1x16x32xf32, #tpu.memory_space<vmem>>, %arg3: memref<32x96xf32, #tpu.memory_space<vmem>>, %arg4: memref<32x96xf32, #tpu.memory_space<vmem>>, %arg5: memref<64x64xbf16, #tpu.memory_space<vmem>>, %arg6: memref<1x64xf32, #tpu.memory_space<vmem>>, %arg7: memref<64x64xbf16, #tpu.memory_space<vmem>>, %arg8: memref<1x64xf32, #tpu.memory_space<vmem>>, %arg9: memref<128x128xbf16, #tpu.memory_space<vmem>>, %arg10: memref<1x128xf32, #tpu.memory_space<vmem>>, %arg11: memref<128x128xbf16, #tpu.memory_space<vmem>>, %arg12: memref<1x128xf32, #tpu.memory_space<vmem>>, %arg13: memref<16x128xf32, #tpu.memory_space<vmem>>, %arg14: memref<16x128xf32, #tpu.memory_space<vmem>>) attributes {dimension_semantics = [#tpu.dimension_semantics<arbitrary>], iteration_bounds = array<i64: 1>, scalar_prefetch = 0 : i64, scratch_operands = 0 : i64, tpu.core_type = #tpu.core_type<tc>, window_params = [{transform_indices = @transform_0, window_bounds = array<i64: 1, 16, 32>}, {transform_indices = @transform_1, window_bounds = array<i64: 1, 16, 32>}, {pipeline_mode = #tpu.pipeline_mode<synchronous>, transform_indices = @transform_2, window_bounds = array<i64: 32, 96>}, {pipeline_mode = #tpu.pipeline_mode<synchronous>, transform_indices = @transform_3, window_bounds = array<i64: 32, 96>}, {pipeline_mode = #tpu.pipeline_mode<synchronous>, transform_indices = @transform_4, window_bounds = array<i64: 64, 64>}, {pipeline_mode = #tpu.pipeline_mode<synchronous>, transform_indices = @transform_5, window_bounds = array<i64: 1, 64>}, {pipeline_mode = #tpu.pipeline_mode<synchronous>, transform_indices = @transform_6, window_bounds = array<i64: 64, 64>}, {pipeline_mode = #tpu.pipeline_mode<synchronous>, transform_indices = @transform_7, window_bounds = array<i64: 1, 64>}, {pipeline_mode = #tpu.pipeline_mode<synchronous>, transform_indices = @transform_8, window_bounds = array<i64: 128, 128>}, {pipeline_mode = #tpu.pipeline_mode<synchronous>, transform_indices = @transform_9, window_bounds = array<i64: 1, 128>}, {pipeline_mode = #tpu.pipeline_mode<synchronous>, transform_indices = @transform_10, window_bounds = array<i64: 128, 128>}, {pipeline_mode = #tpu.pipeline_mode<synchronous>, transform_indices = @transform_11, window_bounds = array<i64: 1, 128>}, {pipeline_mode = #tpu.pipeline_mode<synchronous>, transform_indices = @transform_12, window_bounds = array<i64: 16, 128>}, {pipeline_mode = #tpu.pipeline_mode<synchronous>, transform_indices = @transform_13, window_bounds = array<i64: 16, 128>}]} {
    %c0 = arith.constant 0 : index
    %c0_0 = arith.constant 0 : index
    %c0_1 = arith.constant 0 : index
    %0 = vector.load %arg1[%c0, %c0_0, %c0_1] : memref<1x16x32xf32, #tpu.memory_space<vmem>>, vector<1x16x32xf32>
    %1 = vector.shape_cast %0 : vector<1x16x32xf32> to vector<16x32xf32>
    %c0_2 = arith.constant 0 : index
    %c0_3 = arith.constant 0 : index
    %c0_4 = arith.constant 0 : index
    %2 = vector.load %arg2[%c0_2, %c0_3, %c0_4] : memref<1x16x32xf32, #tpu.memory_space<vmem>>, vector<1x16x32xf32>
    %3 = vector.shape_cast %2 : vector<1x16x32xf32> to vector<16x32xf32>
    %c0_5 = arith.constant 0 : index
    %c0_6 = arith.constant 0 : index
    %4 = vector.load %arg3[%c0_5, %c0_6] : memref<32x96xf32, #tpu.memory_space<vmem>>, vector<32x96xf32>
    %cst = arith.constant dense<0.000000e+00> : vector<16x96xf32>
    %5 = tpu.matmul %1, %4, %cst {dimension_numbers = #tpu.dot_dimension_numbers<[1], [0], [0], [1], [0, 0, 1, 1], [], []>} : vector<16x32xf32>, vector<32x96xf32>, vector<16x96xf32> -> vector<16x96xf32>
    %c0_7 = arith.constant 0 : index
    %c0_8 = arith.constant 0 : index
    %6 = vector.load %arg4[%c0_7, %c0_8] : memref<32x96xf32, #tpu.memory_space<vmem>>, vector<32x96xf32>
    %cst_9 = arith.constant dense<0.000000e+00> : vector<16x96xf32>
    %7 = tpu.matmul %3, %6, %cst_9 {dimension_numbers = #tpu.dot_dimension_numbers<[1], [0], [0], [1], [0, 0, 1, 1], [], []>} : vector<16x32xf32>, vector<32x96xf32>, vector<16x96xf32> -> vector<16x96xf32>
    %8 = vector.extract_strided_slice %5 {offsets = [0, 64], sizes = [16, 32], strides = [1, 1]} : vector<16x96xf32> to vector<16x32xf32>
    %9 = vector.extract_strided_slice %7 {offsets = [0, 64], sizes = [16, 32], strides = [1, 1]} : vector<16x96xf32> to vector<16x32xf32>
    %c0_10 = arith.constant 0 : index
    %c0_11 = arith.constant 0 : index
    %10 = vector.load %arg5[%c0_10, %c0_11] : memref<64x64xbf16, #tpu.memory_space<vmem>>, vector<64x64xbf16>
    %c0_12 = arith.constant 0 : index
    %c0_13 = arith.constant 0 : index
    %11 = vector.load %arg7[%c0_12, %c0_13] : memref<64x64xbf16, #tpu.memory_space<vmem>>, vector<64x64xbf16>
    %12 = vector.extract_strided_slice %10 {offsets = [32, 0], sizes = [32, 64], strides = [1, 1]} : vector<64x64xbf16> to vector<32x64xbf16>
    %13 = arith.truncf %8 : vector<16x32xf32> to vector<16x32xbf16>
    %cst_14 = arith.constant dense<0.000000e+00> : vector<16x64xf32>
    %14 = tpu.matmul %13, %12, %cst_14 {dimension_numbers = #tpu.dot_dimension_numbers<[1], [0], [0], [1], [0, 0, 1, 1], [], []>} : vector<16x32xbf16>, vector<32x64xbf16>, vector<16x64xf32> -> vector<16x64xf32>
    %c0_15 = arith.constant 0 : index
    %c0_16 = arith.constant 0 : index
    %15 = vector.load %arg6[%c0_15, %c0_16] : memref<1x64xf32, #tpu.memory_space<vmem>>, vector<1x64xf32>
    %16 = vector.broadcast %15 : vector<1x64xf32> to vector<16x64xf32>
    %17 = arith.addf %14, %16 : vector<16x64xf32>
    %18 = vector.extract_strided_slice %11 {offsets = [32, 0], sizes = [32, 64], strides = [1, 1]} : vector<64x64xbf16> to vector<32x64xbf16>
    %19 = arith.truncf %9 : vector<16x32xf32> to vector<16x32xbf16>
    %cst_17 = arith.constant dense<0.000000e+00> : vector<16x64xf32>
    %20 = tpu.matmul %19, %18, %cst_17 {dimension_numbers = #tpu.dot_dimension_numbers<[1], [0], [0], [1], [0, 0, 1, 1], [], []>} : vector<16x32xbf16>, vector<32x64xbf16>, vector<16x64xf32> -> vector<16x64xf32>
    %c0_18 = arith.constant 0 : index
    %c0_19 = arith.constant 0 : index
    %21 = vector.load %arg8[%c0_18, %c0_19] : memref<1x64xf32, #tpu.memory_space<vmem>>, vector<1x64xf32>
    %22 = vector.broadcast %21 : vector<1x64xf32> to vector<16x64xf32>
    %23 = arith.addf %20, %22 : vector<16x64xf32>
    %cst_20 = arith.constant 0.000000e+00 : f32
    %24 = vector.broadcast %cst_20 : f32 to vector<16x16xf32>
    %cst_21 = arith.constant 0.000000e+00 : f32
    %25 = vector.broadcast %cst_21 : f32 to vector<16x16xf32>
    %26 = vector.extract_strided_slice %5 {offsets = [0, 0], sizes = [16, 8], strides = [1, 1]} : vector<16x96xf32> to vector<16x8xf32>
    %27 = arith.mulf %26, %26 : vector<16x8xf32>
    %cst_22 = arith.constant dense<0.000000e+00> : vector<16xf32>
    %28 = vector.multi_reduction <add>, %27, %cst_22 [1] : vector<16x8xf32> to vector<16xf32>
    %29 = vector.shape_cast %28 : vector<16xf32> to vector<16x1xf32>
    %30 = math.rsqrt %29 : vector<16x1xf32>
    %31 = vector.broadcast %30 : vector<16x1xf32> to vector<16x8xf32>
    %32 = arith.mulf %26, %31 : vector<16x8xf32>
    %33 = vector.extract_strided_slice %5 {offsets = [0, 32], sizes = [16, 8], strides = [1, 1]} : vector<16x96xf32> to vector<16x8xf32>
    %34 = arith.mulf %33, %33 : vector<16x8xf32>
    %cst_23 = arith.constant dense<0.000000e+00> : vector<16xf32>
    %35 = vector.multi_reduction <add>, %34, %cst_23 [1] : vector<16x8xf32> to vector<16xf32>
    %36 = vector.shape_cast %35 : vector<16xf32> to vector<16x1xf32>
    %37 = math.rsqrt %36 : vector<16x1xf32>
    %38 = vector.broadcast %37 : vector<16x1xf32> to vector<16x8xf32>
    %39 = arith.mulf %33, %38 : vector<16x8xf32>
    %40 = vector.extract_strided_slice %7 {offsets = [0, 0], sizes = [16, 8], strides = [1, 1]} : vector<16x96xf32> to vector<16x8xf32>
    %41 = arith.mulf %40, %40 : vector<16x8xf32>
    %cst_24 = arith.constant dense<0.000000e+00> : vector<16xf32>
    %42 = vector.multi_reduction <add>, %41, %cst_24 [1] : vector<16x8xf32> to vector<16xf32>
    %43 = vector.shape_cast %42 : vector<16xf32> to vector<16x1xf32>
    %44 = math.rsqrt %43 : vector<16x1xf32>
    %45 = vector.broadcast %44 : vector<16x1xf32> to vector<16x8xf32>
    %46 = arith.mulf %40, %45 : vector<16x8xf32>
    %47 = vector.extract_strided_slice %7 {offsets = [0, 32], sizes = [16, 8], strides = [1, 1]} : vector<16x96xf32> to vector<16x8xf32>
    %48 = arith.mulf %47, %47 : vector<16x8xf32>
    %cst_25 = arith.constant dense<0.000000e+00> : vector<16xf32>
    %49 = vector.multi_reduction <add>, %48, %cst_25 [1] : vector<16x8xf32> to vector<16xf32>
    %50 = vector.shape_cast %49 : vector<16xf32> to vector<16x1xf32>
    %51 = math.rsqrt %50 : vector<16x1xf32>
    %52 = vector.broadcast %51 : vector<16x1xf32> to vector<16x8xf32>
    %53 = arith.mulf %47, %52 : vector<16x8xf32>
    %54 = vector.extract_strided_slice %8 {offsets = [0, 0], sizes = [16, 8], strides = [1, 1]} : vector<16x32xf32> to vector<16x8xf32>
    %55 = vector.extract_strided_slice %9 {offsets = [0, 0], sizes = [16, 8], strides = [1, 1]} : vector<16x32xf32> to vector<16x8xf32>
    %56 = arith.mulf %54, %54 : vector<16x8xf32>
    %cst_26 = arith.constant dense<0.000000e+00> : vector<16xf32>
    %57 = vector.multi_reduction <add>, %56, %cst_26 [1] : vector<16x8xf32> to vector<16xf32>
    %58 = vector.shape_cast %57 : vector<16xf32> to vector<16x1xf32>
    %59 = math.rsqrt %58 : vector<16x1xf32>
    %60 = vector.broadcast %59 : vector<16x1xf32> to vector<16x8xf32>
    %61 = arith.mulf %54, %60 : vector<16x8xf32>
    %cst_27 = arith.constant dense<0.000000e+00> : vector<16x16xf32>
    %62 = tpu.matmul %61, %61, %cst_27 {dimension_numbers = #tpu.dot_dimension_numbers<[1], [1], [0], [0], [0, 0, 1, 0], [], []>} : vector<16x8xf32>, vector<16x8xf32>, vector<16x16xf32> -> vector<16x16xf32>
    %63 = arith.addf %25, %62 : vector<16x16xf32>
    %cst_28 = arith.constant dense<0.000000e+00> : vector<16x16xf32>
    %64 = tpu.matmul %32, %39, %cst_28 {dimension_numbers = #tpu.dot_dimension_numbers<[1], [1], [0], [0], [0, 0, 1, 0], [], []>} : vector<16x8xf32>, vector<16x8xf32>, vector<16x16xf32> -> vector<16x16xf32>
    %cst_29 = arith.constant 2.500000e+01 : f32
    %65 = vector.broadcast %cst_29 : f32 to vector<16x16xf32>
    %66 = arith.mulf %64, %65 : vector<16x16xf32>
    %cst_30 = arith.constant dense<0xFF800000> : vector<16xf32>
    %67 = vector.multi_reduction <maximumf>, %66, %cst_30 [1] : vector<16x16xf32> to vector<16xf32>
    %68 = vector.shape_cast %67 : vector<16xf32> to vector<16x1xf32>
    %69 = vector.broadcast %68 : vector<16x1xf32> to vector<16x16xf32>
    %70 = arith.subf %66, %69 : vector<16x16xf32>
    %71 = math.exp %70 : vector<16x16xf32>
    %cst_31 = arith.constant dense<0.000000e+00> : vector<16xf32>
    %72 = vector.multi_reduction <add>, %71, %cst_31 [1] : vector<16x16xf32> to vector<16xf32>
    %73 = vector.shape_cast %72 : vector<16xf32> to vector<16x1xf32>
    %74 = tpu.reciprocal %73 {approx = true} : vector<16x1xf32> -> vector<16x1xf32>
    %75 = vector.broadcast %74 : vector<16x1xf32> to vector<16x16xf32>
    %76 = arith.mulf %71, %75 : vector<16x16xf32>
    %cst_32 = arith.constant dense<0.000000e+00> : vector<16x16xf32>
    %77 = tpu.matmul %46, %53, %cst_32 {dimension_numbers = #tpu.dot_dimension_numbers<[1], [1], [0], [0], [0, 0, 1, 0], [], []>} : vector<16x8xf32>, vector<16x8xf32>, vector<16x16xf32> -> vector<16x16xf32>
    %cst_33 = arith.constant 2.500000e+01 : f32
    %78 = vector.broadcast %cst_33 : f32 to vector<16x16xf32>
    %79 = arith.mulf %77, %78 : vector<16x16xf32>
    %cst_34 = arith.constant dense<0xFF800000> : vector<16xf32>
    %80 = vector.multi_reduction <maximumf>, %79, %cst_34 [1] : vector<16x16xf32> to vector<16xf32>
    %81 = vector.shape_cast %80 : vector<16xf32> to vector<16x1xf32>
    %82 = vector.broadcast %81 : vector<16x1xf32> to vector<16x16xf32>
    %83 = arith.subf %79, %82 : vector<16x16xf32>
    %84 = math.exp %83 : vector<16x16xf32>
    %cst_35 = arith.constant dense<0.000000e+00> : vector<16xf32>
    %85 = vector.multi_reduction <add>, %84, %cst_35 [1] : vector<16x16xf32> to vector<16xf32>
    %86 = vector.shape_cast %85 : vector<16xf32> to vector<16x1xf32>
    %87 = tpu.reciprocal %86 {approx = true} : vector<16x1xf32> -> vector<16x1xf32>
    %88 = vector.broadcast %87 : vector<16x1xf32> to vector<16x16xf32>
    %89 = arith.mulf %84, %88 : vector<16x16xf32>
    %90 = arith.addf %76, %89 : vector<16x16xf32>
    %cst_36 = arith.constant 5.000000e-01 : f32
    %91 = vector.broadcast %cst_36 : f32 to vector<16x16xf32>
    %92 = arith.mulf %91, %90 : vector<16x16xf32>
    %93 = arith.addf %24, %92 : vector<16x16xf32>
    %94 = arith.truncf %92 : vector<16x16xf32> to vector<16x16xbf16>
    %95 = arith.truncf %54 : vector<16x8xf32> to vector<16x8xbf16>
    %cst_37 = arith.constant dense<0.000000e+00> : vector<16x8xf32>
    %96 = tpu.matmul %94, %95, %cst_37 {dimension_numbers = #tpu.dot_dimension_numbers<[1], [0], [0], [1], [0, 0, 1, 1], [], []>} : vector<16x16xbf16>, vector<16x8xbf16>, vector<16x8xf32> -> vector<16x8xf32>
    %97 = vector.extract_strided_slice %10 {offsets = [0, 0], sizes = [8, 64], strides = [1, 1]} : vector<64x64xbf16> to vector<8x64xbf16>
    %98 = arith.truncf %96 : vector<16x8xf32> to vector<16x8xbf16>
    %cst_38 = arith.constant dense<0.000000e+00> : vector<16x64xf32>
    %99 = tpu.matmul %98, %97, %cst_38 {dimension_numbers = #tpu.dot_dimension_numbers<[1], [0], [0], [1], [0, 0, 1, 1], [], []>} : vector<16x8xbf16>, vector<8x64xbf16>, vector<16x64xf32> -> vector<16x64xf32>
    %100 = arith.addf %17, %99 : vector<16x64xf32>
    %101 = arith.truncf %92 : vector<16x16xf32> to vector<16x16xbf16>
    %102 = arith.truncf %55 : vector<16x8xf32> to vector<16x8xbf16>
    %cst_39 = arith.constant dense<0.000000e+00> : vector<16x8xf32>
    %103 = tpu.matmul %101, %102, %cst_39 {dimension_numbers = #tpu.dot_dimension_numbers<[1], [0], [0], [1], [0, 0, 1, 1], [], []>} : vector<16x16xbf16>, vector<16x8xbf16>, vector<16x8xf32> -> vector<16x8xf32>
    %104 = vector.extract_strided_slice %11 {offsets = [0, 0], sizes = [8, 64], strides = [1, 1]} : vector<64x64xbf16> to vector<8x64xbf16>
    %105 = arith.truncf %103 : vector<16x8xf32> to vector<16x8xbf16>
    %cst_40 = arith.constant dense<0.000000e+00> : vector<16x64xf32>
    %106 = tpu.matmul %105, %104, %cst_40 {dimension_numbers = #tpu.dot_dimension_numbers<[1], [0], [0], [1], [0, 0, 1, 1], [], []>} : vector<16x8xbf16>, vector<8x64xbf16>, vector<16x64xf32> -> vector<16x64xf32>
    %107 = arith.addf %23, %106 : vector<16x64xf32>
    %108 = vector.extract_strided_slice %5 {offsets = [0, 8], sizes = [16, 8], strides = [1, 1]} : vector<16x96xf32> to vector<16x8xf32>
    %109 = arith.mulf %108, %108 : vector<16x8xf32>
    %cst_41 = arith.constant dense<0.000000e+00> : vector<16xf32>
    %110 = vector.multi_reduction <add>, %109, %cst_41 [1] : vector<16x8xf32> to vector<16xf32>
    %111 = vector.shape_cast %110 : vector<16xf32> to vector<16x1xf32>
    %112 = math.rsqrt %111 : vector<16x1xf32>
    %113 = vector.broadcast %112 : vector<16x1xf32> to vector<16x8xf32>
    %114 = arith.mulf %108, %113 : vector<16x8xf32>
    %115 = vector.extract_strided_slice %5 {offsets = [0, 40], sizes = [16, 8], strides = [1, 1]} : vector<16x96xf32> to vector<16x8xf32>
    %116 = arith.mulf %115, %115 : vector<16x8xf32>
    %cst_42 = arith.constant dense<0.000000e+00> : vector<16xf32>
    %117 = vector.multi_reduction <add>, %116, %cst_42 [1] : vector<16x8xf32> to vector<16xf32>
    %118 = vector.shape_cast %117 : vector<16xf32> to vector<16x1xf32>
    %119 = math.rsqrt %118 : vector<16x1xf32>
    %120 = vector.broadcast %119 : vector<16x1xf32> to vector<16x8xf32>
    %121 = arith.mulf %115, %120 : vector<16x8xf32>
    %122 = vector.extract_strided_slice %7 {offsets = [0, 8], sizes = [16, 8], strides = [1, 1]} : vector<16x96xf32> to vector<16x8xf32>
    %123 = arith.mulf %122, %122 : vector<16x8xf32>
    %cst_43 = arith.constant dense<0.000000e+00> : vector<16xf32>
    %124 = vector.multi_reduction <add>, %123, %cst_43 [1] : vector<16x8xf32> to vector<16xf32>
    %125 = vector.shape_cast %124 : vector<16xf32> to vector<16x1xf32>
    %126 = math.rsqrt %125 : vector<16x1xf32>
    %127 = vector.broadcast %126 : vector<16x1xf32> to vector<16x8xf32>
    %128 = arith.mulf %122, %127 : vector<16x8xf32>
    %129 = vector.extract_strided_slice %7 {offsets = [0, 40], sizes = [16, 8], strides = [1, 1]} : vector<16x96xf32> to vector<16x8xf32>
    %130 = arith.mulf %129, %129 : vector<16x8xf32>
    %cst_44 = arith.constant dense<0.000000e+00> : vector<16xf32>
    %131 = vector.multi_reduction <add>, %130, %cst_44 [1] : vector<16x8xf32> to vector<16xf32>
    %132 = vector.shape_cast %131 : vector<16xf32> to vector<16x1xf32>
    %133 = math.rsqrt %132 : vector<16x1xf32>
    %134 = vector.broadcast %133 : vector<16x1xf32> to vector<16x8xf32>
    %135 = arith.mulf %129, %134 : vector<16x8xf32>
    %136 = vector.extract_strided_slice %8 {offsets = [0, 8], sizes = [16, 8], strides = [1, 1]} : vector<16x32xf32> to vector<16x8xf32>
    %137 = vector.extract_strided_slice %9 {offsets = [0, 8], sizes = [16, 8], strides = [1, 1]} : vector<16x32xf32> to vector<16x8xf32>
    %138 = arith.mulf %136, %136 : vector<16x8xf32>
    %cst_45 = arith.constant dense<0.000000e+00> : vector<16xf32>
    %139 = vector.multi_reduction <add>, %138, %cst_45 [1] : vector<16x8xf32> to vector<16xf32>
    %140 = vector.shape_cast %139 : vector<16xf32> to vector<16x1xf32>
    %141 = math.rsqrt %140 : vector<16x1xf32>
    %142 = vector.broadcast %141 : vector<16x1xf32> to vector<16x8xf32>
    %143 = arith.mulf %136, %142 : vector<16x8xf32>
    %cst_46 = arith.constant dense<0.000000e+00> : vector<16x16xf32>
    %144 = tpu.matmul %143, %143, %cst_46 {dimension_numbers = #tpu.dot_dimension_numbers<[1], [1], [0], [0], [0, 0, 1, 0], [], []>} : vector<16x8xf32>, vector<16x8xf32>, vector<16x16xf32> -> vector<16x16xf32>
    %145 = arith.addf %63, %144 : vector<16x16xf32>
    %cst_47 = arith.constant dense<0.000000e+00> : vector<16x16xf32>
    %146 = tpu.matmul %114, %121, %cst_47 {dimension_numbers = #tpu.dot_dimension_numbers<[1], [1], [0], [0], [0, 0, 1, 0], [], []>} : vector<16x8xf32>, vector<16x8xf32>, vector<16x16xf32> -> vector<16x16xf32>
    %cst_48 = arith.constant 2.500000e+01 : f32
    %147 = vector.broadcast %cst_48 : f32 to vector<16x16xf32>
    %148 = arith.mulf %146, %147 : vector<16x16xf32>
    %cst_49 = arith.constant dense<0xFF800000> : vector<16xf32>
    %149 = vector.multi_reduction <maximumf>, %148, %cst_49 [1] : vector<16x16xf32> to vector<16xf32>
    %150 = vector.shape_cast %149 : vector<16xf32> to vector<16x1xf32>
    %151 = vector.broadcast %150 : vector<16x1xf32> to vector<16x16xf32>
    %152 = arith.subf %148, %151 : vector<16x16xf32>
    %153 = math.exp %152 : vector<16x16xf32>
    %cst_50 = arith.constant dense<0.000000e+00> : vector<16xf32>
    %154 = vector.multi_reduction <add>, %153, %cst_50 [1] : vector<16x16xf32> to vector<16xf32>
    %155 = vector.shape_cast %154 : vector<16xf32> to vector<16x1xf32>
    %156 = tpu.reciprocal %155 {approx = true} : vector<16x1xf32> -> vector<16x1xf32>
    %157 = vector.broadcast %156 : vector<16x1xf32> to vector<16x16xf32>
    %158 = arith.mulf %153, %157 : vector<16x16xf32>
    %cst_51 = arith.constant dense<0.000000e+00> : vector<16x16xf32>
    %159 = tpu.matmul %128, %135, %cst_51 {dimension_numbers = #tpu.dot_dimension_numbers<[1], [1], [0], [0], [0, 0, 1, 0], [], []>} : vector<16x8xf32>, vector<16x8xf32>, vector<16x16xf32> -> vector<16x16xf32>
    %cst_52 = arith.constant 2.500000e+01 : f32
    %160 = vector.broadcast %cst_52 : f32 to vector<16x16xf32>
    %161 = arith.mulf %159, %160 : vector<16x16xf32>
    %cst_53 = arith.constant dense<0xFF800000> : vector<16xf32>
    %162 = vector.multi_reduction <maximumf>, %161, %cst_53 [1] : vector<16x16xf32> to vector<16xf32>
    %163 = vector.shape_cast %162 : vector<16xf32> to vector<16x1xf32>
    %164 = vector.broadcast %163 : vector<16x1xf32> to vector<16x16xf32>
    %165 = arith.subf %161, %164 : vector<16x16xf32>
    %166 = math.exp %165 : vector<16x16xf32>
    %cst_54 = arith.constant dense<0.000000e+00> : vector<16xf32>
    %167 = vector.multi_reduction <add>, %166, %cst_54 [1] : vector<16x16xf32> to vector<16xf32>
    %168 = vector.shape_cast %167 : vector<16xf32> to vector<16x1xf32>
    %169 = tpu.reciprocal %168 {approx = true} : vector<16x1xf32> -> vector<16x1xf32>
    %170 = vector.broadcast %169 : vector<16x1xf32> to vector<16x16xf32>
    %171 = arith.mulf %166, %170 : vector<16x16xf32>
    %172 = arith.addf %158, %171 : vector<16x16xf32>
    %cst_55 = arith.constant 5.000000e-01 : f32
    %173 = vector.broadcast %cst_55 : f32 to vector<16x16xf32>
    %174 = arith.mulf %173, %172 : vector<16x16xf32>
    %175 = arith.addf %93, %174 : vector<16x16xf32>
    %176 = arith.truncf %174 : vector<16x16xf32> to vector<16x16xbf16>
    %177 = arith.truncf %136 : vector<16x8xf32> to vector<16x8xbf16>
    %cst_56 = arith.constant dense<0.000000e+00> : vector<16x8xf32>
    %178 = tpu.matmul %176, %177, %cst_56 {dimension_numbers = #tpu.dot_dimension_numbers<[1], [0], [0], [1], [0, 0, 1, 1], [], []>} : vector<16x16xbf16>, vector<16x8xbf16>, vector<16x8xf32> -> vector<16x8xf32>
    %179 = vector.extract_strided_slice %10 {offsets = [8, 0], sizes = [8, 64], strides = [1, 1]} : vector<64x64xbf16> to vector<8x64xbf16>
    %180 = arith.truncf %178 : vector<16x8xf32> to vector<16x8xbf16>
    %cst_57 = arith.constant dense<0.000000e+00> : vector<16x64xf32>
    %181 = tpu.matmul %180, %179, %cst_57 {dimension_numbers = #tpu.dot_dimension_numbers<[1], [0], [0], [1], [0, 0, 1, 1], [], []>} : vector<16x8xbf16>, vector<8x64xbf16>, vector<16x64xf32> -> vector<16x64xf32>
    %182 = arith.addf %100, %181 : vector<16x64xf32>
    %183 = arith.truncf %174 : vector<16x16xf32> to vector<16x16xbf16>
    %184 = arith.truncf %137 : vector<16x8xf32> to vector<16x8xbf16>
    %cst_58 = arith.constant dense<0.000000e+00> : vector<16x8xf32>
    %185 = tpu.matmul %183, %184, %cst_58 {dimension_numbers = #tpu.dot_dimension_numbers<[1], [0], [0], [1], [0, 0, 1, 1], [], []>} : vector<16x16xbf16>, vector<16x8xbf16>, vector<16x8xf32> -> vector<16x8xf32>
    %186 = vector.extract_strided_slice %11 {offsets = [8, 0], sizes = [8, 64], strides = [1, 1]} : vector<64x64xbf16> to vector<8x64xbf16>
    %187 = arith.truncf %185 : vector<16x8xf32> to vector<16x8xbf16>
    %cst_59 = arith.constant dense<0.000000e+00> : vector<16x64xf32>
    %188 = tpu.matmul %187, %186, %cst_59 {dimension_numbers = #tpu.dot_dimension_numbers<[1], [0], [0], [1], [0, 0, 1, 1], [], []>} : vector<16x8xbf16>, vector<8x64xbf16>, vector<16x64xf32> -> vector<16x64xf32>
    %189 = arith.addf %107, %188 : vector<16x64xf32>
    %190 = vector.extract_strided_slice %5 {offsets = [0, 16], sizes = [16, 8], strides = [1, 1]} : vector<16x96xf32> to vector<16x8xf32>
    %191 = arith.mulf %190, %190 : vector<16x8xf32>
    %cst_60 = arith.constant dense<0.000000e+00> : vector<16xf32>
    %192 = vector.multi_reduction <add>, %191, %cst_60 [1] : vector<16x8xf32> to vector<16xf32>
    %193 = vector.shape_cast %192 : vector<16xf32> to vector<16x1xf32>
    %194 = math.rsqrt %193 : vector<16x1xf32>
    %195 = vector.broadcast %194 : vector<16x1xf32> to vector<16x8xf32>
    %196 = arith.mulf %190, %195 : vector<16x8xf32>
    %197 = vector.extract_strided_slice %5 {offsets = [0, 48], sizes = [16, 8], strides = [1, 1]} : vector<16x96xf32> to vector<16x8xf32>
    %198 = arith.mulf %197, %197 : vector<16x8xf32>
    %cst_61 = arith.constant dense<0.000000e+00> : vector<16xf32>
    %199 = vector.multi_reduction <add>, %198, %cst_61 [1] : vector<16x8xf32> to vector<16xf32>
    %200 = vector.shape_cast %199 : vector<16xf32> to vector<16x1xf32>
    %201 = math.rsqrt %200 : vector<16x1xf32>
    %202 = vector.broadcast %201 : vector<16x1xf32> to vector<16x8xf32>
    %203 = arith.mulf %197, %202 : vector<16x8xf32>
    %204 = vector.extract_strided_slice %7 {offsets = [0, 16], sizes = [16, 8], strides = [1, 1]} : vector<16x96xf32> to vector<16x8xf32>
    %205 = arith.mulf %204, %204 : vector<16x8xf32>
    %cst_62 = arith.constant dense<0.000000e+00> : vector<16xf32>
    %206 = vector.multi_reduction <add>, %205, %cst_62 [1] : vector<16x8xf32> to vector<16xf32>
    %207 = vector.shape_cast %206 : vector<16xf32> to vector<16x1xf32>
    %208 = math.rsqrt %207 : vector<16x1xf32>
    %209 = vector.broadcast %208 : vector<16x1xf32> to vector<16x8xf32>
    %210 = arith.mulf %204, %209 : vector<16x8xf32>
    %211 = vector.extract_strided_slice %7 {offsets = [0, 48], sizes = [16, 8], strides = [1, 1]} : vector<16x96xf32> to vector<16x8xf32>
    %212 = arith.mulf %211, %211 : vector<16x8xf32>
    %cst_63 = arith.constant dense<0.000000e+00> : vector<16xf32>
    %213 = vector.multi_reduction <add>, %212, %cst_63 [1] : vector<16x8xf32> to vector<16xf32>
    %214 = vector.shape_cast %213 : vector<16xf32> to vector<16x1xf32>
    %215 = math.rsqrt %214 : vector<16x1xf32>
    %216 = vector.broadcast %215 : vector<16x1xf32> to vector<16x8xf32>
    %217 = arith.mulf %211, %216 : vector<16x8xf32>
    %218 = vector.extract_strided_slice %8 {offsets = [0, 16], sizes = [16, 8], strides = [1, 1]} : vector<16x32xf32> to vector<16x8xf32>
    %219 = vector.extract_strided_slice %9 {offsets = [0, 16], sizes = [16, 8], strides = [1, 1]} : vector<16x32xf32> to vector<16x8xf32>
    %220 = arith.mulf %218, %218 : vector<16x8xf32>
    %cst_64 = arith.constant dense<0.000000e+00> : vector<16xf32>
    %221 = vector.multi_reduction <add>, %220, %cst_64 [1] : vector<16x8xf32> to vector<16xf32>
    %222 = vector.shape_cast %221 : vector<16xf32> to vector<16x1xf32>
    %223 = math.rsqrt %222 : vector<16x1xf32>
    %224 = vector.broadcast %223 : vector<16x1xf32> to vector<16x8xf32>
    %225 = arith.mulf %218, %224 : vector<16x8xf32>
    %cst_65 = arith.constant dense<0.000000e+00> : vector<16x16xf32>
    %226 = tpu.matmul %225, %225, %cst_65 {dimension_numbers = #tpu.dot_dimension_numbers<[1], [1], [0], [0], [0, 0, 1, 0], [], []>} : vector<16x8xf32>, vector<16x8xf32>, vector<16x16xf32> -> vector<16x16xf32>
    %227 = arith.addf %145, %226 : vector<16x16xf32>
    %cst_66 = arith.constant dense<0.000000e+00> : vector<16x16xf32>
    %228 = tpu.matmul %196, %203, %cst_66 {dimension_numbers = #tpu.dot_dimension_numbers<[1], [1], [0], [0], [0, 0, 1, 0], [], []>} : vector<16x8xf32>, vector<16x8xf32>, vector<16x16xf32> -> vector<16x16xf32>
    %cst_67 = arith.constant 2.500000e+01 : f32
    %229 = vector.broadcast %cst_67 : f32 to vector<16x16xf32>
    %230 = arith.mulf %228, %229 : vector<16x16xf32>
    %cst_68 = arith.constant dense<0xFF800000> : vector<16xf32>
    %231 = vector.multi_reduction <maximumf>, %230, %cst_68 [1] : vector<16x16xf32> to vector<16xf32>
    %232 = vector.shape_cast %231 : vector<16xf32> to vector<16x1xf32>
    %233 = vector.broadcast %232 : vector<16x1xf32> to vector<16x16xf32>
    %234 = arith.subf %230, %233 : vector<16x16xf32>
    %235 = math.exp %234 : vector<16x16xf32>
    %cst_69 = arith.constant dense<0.000000e+00> : vector<16xf32>
    %236 = vector.multi_reduction <add>, %235, %cst_69 [1] : vector<16x16xf32> to vector<16xf32>
    %237 = vector.shape_cast %236 : vector<16xf32> to vector<16x1xf32>
    %238 = tpu.reciprocal %237 {approx = true} : vector<16x1xf32> -> vector<16x1xf32>
    %239 = vector.broadcast %238 : vector<16x1xf32> to vector<16x16xf32>
    %240 = arith.mulf %235, %239 : vector<16x16xf32>
    %cst_70 = arith.constant dense<0.000000e+00> : vector<16x16xf32>
    %241 = tpu.matmul %210, %217, %cst_70 {dimension_numbers = #tpu.dot_dimension_numbers<[1], [1], [0], [0], [0, 0, 1, 0], [], []>} : vector<16x8xf32>, vector<16x8xf32>, vector<16x16xf32> -> vector<16x16xf32>
    %cst_71 = arith.constant 2.500000e+01 : f32
    %242 = vector.broadcast %cst_71 : f32 to vector<16x16xf32>
    %243 = arith.mulf %241, %242 : vector<16x16xf32>
    %cst_72 = arith.constant dense<0xFF800000> : vector<16xf32>
    %244 = vector.multi_reduction <maximumf>, %243, %cst_72 [1] : vector<16x16xf32> to vector<16xf32>
    %245 = vector.shape_cast %244 : vector<16xf32> to vector<16x1xf32>
    %246 = vector.broadcast %245 : vector<16x1xf32> to vector<16x16xf32>
    %247 = arith.subf %243, %246 : vector<16x16xf32>
    %248 = math.exp %247 : vector<16x16xf32>
    %cst_73 = arith.constant dense<0.000000e+00> : vector<16xf32>
    %249 = vector.multi_reduction <add>, %248, %cst_73 [1] : vector<16x16xf32> to vector<16xf32>
    %250 = vector.shape_cast %249 : vector<16xf32> to vector<16x1xf32>
    %251 = tpu.reciprocal %250 {approx = true} : vector<16x1xf32> -> vector<16x1xf32>
    %252 = vector.broadcast %251 : vector<16x1xf32> to vector<16x16xf32>
    %253 = arith.mulf %248, %252 : vector<16x16xf32>
    %254 = arith.addf %240, %253 : vector<16x16xf32>
    %cst_74 = arith.constant 5.000000e-01 : f32
    %255 = vector.broadcast %cst_74 : f32 to vector<16x16xf32>
    %256 = arith.mulf %255, %254 : vector<16x16xf32>
    %257 = arith.addf %175, %256 : vector<16x16xf32>
    %258 = arith.truncf %256 : vector<16x16xf32> to vector<16x16xbf16>
    %259 = arith.truncf %218 : vector<16x8xf32> to vector<16x8xbf16>
    %cst_75 = arith.constant dense<0.000000e+00> : vector<16x8xf32>
    %260 = tpu.matmul %258, %259, %cst_75 {dimension_numbers = #tpu.dot_dimension_numbers<[1], [0], [0], [1], [0, 0, 1, 1], [], []>} : vector<16x16xbf16>, vector<16x8xbf16>, vector<16x8xf32> -> vector<16x8xf32>
    %261 = vector.extract_strided_slice %10 {offsets = [16, 0], sizes = [8, 64], strides = [1, 1]} : vector<64x64xbf16> to vector<8x64xbf16>
    %262 = arith.truncf %260 : vector<16x8xf32> to vector<16x8xbf16>
    %cst_76 = arith.constant dense<0.000000e+00> : vector<16x64xf32>
    %263 = tpu.matmul %262, %261, %cst_76 {dimension_numbers = #tpu.dot_dimension_numbers<[1], [0], [0], [1], [0, 0, 1, 1], [], []>} : vector<16x8xbf16>, vector<8x64xbf16>, vector<16x64xf32> -> vector<16x64xf32>
    %264 = arith.addf %182, %263 : vector<16x64xf32>
    %265 = arith.truncf %256 : vector<16x16xf32> to vector<16x16xbf16>
    %266 = arith.truncf %219 : vector<16x8xf32> to vector<16x8xbf16>
    %cst_77 = arith.constant dense<0.000000e+00> : vector<16x8xf32>
    %267 = tpu.matmul %265, %266, %cst_77 {dimension_numbers = #tpu.dot_dimension_numbers<[1], [0], [0], [1], [0, 0, 1, 1], [], []>} : vector<16x16xbf16>, vector<16x8xbf16>, vector<16x8xf32> -> vector<16x8xf32>
    %268 = vector.extract_strided_slice %11 {offsets = [16, 0], sizes = [8, 64], strides = [1, 1]} : vector<64x64xbf16> to vector<8x64xbf16>
    %269 = arith.truncf %267 : vector<16x8xf32> to vector<16x8xbf16>
    %cst_78 = arith.constant dense<0.000000e+00> : vector<16x64xf32>
    %270 = tpu.matmul %269, %268, %cst_78 {dimension_numbers = #tpu.dot_dimension_numbers<[1], [0], [0], [1], [0, 0, 1, 1], [], []>} : vector<16x8xbf16>, vector<8x64xbf16>, vector<16x64xf32> -> vector<16x64xf32>
    %271 = arith.addf %189, %270 : vector<16x64xf32>
    %272 = vector.extract_strided_slice %5 {offsets = [0, 24], sizes = [16, 8], strides = [1, 1]} : vector<16x96xf32> to vector<16x8xf32>
    %273 = arith.mulf %272, %272 : vector<16x8xf32>
    %cst_79 = arith.constant dense<0.000000e+00> : vector<16xf32>
    %274 = vector.multi_reduction <add>, %273, %cst_79 [1] : vector<16x8xf32> to vector<16xf32>
    %275 = vector.shape_cast %274 : vector<16xf32> to vector<16x1xf32>
    %276 = math.rsqrt %275 : vector<16x1xf32>
    %277 = vector.broadcast %276 : vector<16x1xf32> to vector<16x8xf32>
    %278 = arith.mulf %272, %277 : vector<16x8xf32>
    %279 = vector.extract_strided_slice %5 {offsets = [0, 56], sizes = [16, 8], strides = [1, 1]} : vector<16x96xf32> to vector<16x8xf32>
    %280 = arith.mulf %279, %279 : vector<16x8xf32>
    %cst_80 = arith.constant dense<0.000000e+00> : vector<16xf32>
    %281 = vector.multi_reduction <add>, %280, %cst_80 [1] : vector<16x8xf32> to vector<16xf32>
    %282 = vector.shape_cast %281 : vector<16xf32> to vector<16x1xf32>
    %283 = math.rsqrt %282 : vector<16x1xf32>
    %284 = vector.broadcast %283 : vector<16x1xf32> to vector<16x8xf32>
    %285 = arith.mulf %279, %284 : vector<16x8xf32>
    %286 = vector.extract_strided_slice %7 {offsets = [0, 24], sizes = [16, 8], strides = [1, 1]} : vector<16x96xf32> to vector<16x8xf32>
    %287 = arith.mulf %286, %286 : vector<16x8xf32>
    %cst_81 = arith.constant dense<0.000000e+00> : vector<16xf32>
    %288 = vector.multi_reduction <add>, %287, %cst_81 [1] : vector<16x8xf32> to vector<16xf32>
    %289 = vector.shape_cast %288 : vector<16xf32> to vector<16x1xf32>
    %290 = math.rsqrt %289 : vector<16x1xf32>
    %291 = vector.broadcast %290 : vector<16x1xf32> to vector<16x8xf32>
    %292 = arith.mulf %286, %291 : vector<16x8xf32>
    %293 = vector.extract_strided_slice %7 {offsets = [0, 56], sizes = [16, 8], strides = [1, 1]} : vector<16x96xf32> to vector<16x8xf32>
    %294 = arith.mulf %293, %293 : vector<16x8xf32>
    %cst_82 = arith.constant dense<0.000000e+00> : vector<16xf32>
    %295 = vector.multi_reduction <add>, %294, %cst_82 [1] : vector<16x8xf32> to vector<16xf32>
    %296 = vector.shape_cast %295 : vector<16xf32> to vector<16x1xf32>
    %297 = math.rsqrt %296 : vector<16x1xf32>
    %298 = vector.broadcast %297 : vector<16x1xf32> to vector<16x8xf32>
    %299 = arith.mulf %293, %298 : vector<16x8xf32>
    %300 = vector.extract_strided_slice %8 {offsets = [0, 24], sizes = [16, 8], strides = [1, 1]} : vector<16x32xf32> to vector<16x8xf32>
    %301 = vector.extract_strided_slice %9 {offsets = [0, 24], sizes = [16, 8], strides = [1, 1]} : vector<16x32xf32> to vector<16x8xf32>
    %302 = arith.mulf %300, %300 : vector<16x8xf32>
    %cst_83 = arith.constant dense<0.000000e+00> : vector<16xf32>
    %303 = vector.multi_reduction <add>, %302, %cst_83 [1] : vector<16x8xf32> to vector<16xf32>
    %304 = vector.shape_cast %303 : vector<16xf32> to vector<16x1xf32>
    %305 = math.rsqrt %304 : vector<16x1xf32>
    %306 = vector.broadcast %305 : vector<16x1xf32> to vector<16x8xf32>
    %307 = arith.mulf %300, %306 : vector<16x8xf32>
    %cst_84 = arith.constant dense<0.000000e+00> : vector<16x16xf32>
    %308 = tpu.matmul %307, %307, %cst_84 {dimension_numbers = #tpu.dot_dimension_numbers<[1], [1], [0], [0], [0, 0, 1, 0], [], []>} : vector<16x8xf32>, vector<16x8xf32>, vector<16x16xf32> -> vector<16x16xf32>
    %309 = arith.addf %227, %308 : vector<16x16xf32>
    %cst_85 = arith.constant dense<0.000000e+00> : vector<16x16xf32>
    %310 = tpu.matmul %278, %285, %cst_85 {dimension_numbers = #tpu.dot_dimension_numbers<[1], [1], [0], [0], [0, 0, 1, 0], [], []>} : vector<16x8xf32>, vector<16x8xf32>, vector<16x16xf32> -> vector<16x16xf32>
    %cst_86 = arith.constant 2.500000e+01 : f32
    %311 = vector.broadcast %cst_86 : f32 to vector<16x16xf32>
    %312 = arith.mulf %310, %311 : vector<16x16xf32>
    %cst_87 = arith.constant dense<0xFF800000> : vector<16xf32>
    %313 = vector.multi_reduction <maximumf>, %312, %cst_87 [1] : vector<16x16xf32> to vector<16xf32>
    %314 = vector.shape_cast %313 : vector<16xf32> to vector<16x1xf32>
    %315 = vector.broadcast %314 : vector<16x1xf32> to vector<16x16xf32>
    %316 = arith.subf %312, %315 : vector<16x16xf32>
    %317 = math.exp %316 : vector<16x16xf32>
    %cst_88 = arith.constant dense<0.000000e+00> : vector<16xf32>
    %318 = vector.multi_reduction <add>, %317, %cst_88 [1] : vector<16x16xf32> to vector<16xf32>
    %319 = vector.shape_cast %318 : vector<16xf32> to vector<16x1xf32>
    %320 = tpu.reciprocal %319 {approx = true} : vector<16x1xf32> -> vector<16x1xf32>
    %321 = vector.broadcast %320 : vector<16x1xf32> to vector<16x16xf32>
    %322 = arith.mulf %317, %321 : vector<16x16xf32>
    %cst_89 = arith.constant dense<0.000000e+00> : vector<16x16xf32>
    %323 = tpu.matmul %292, %299, %cst_89 {dimension_numbers = #tpu.dot_dimension_numbers<[1], [1], [0], [0], [0, 0, 1, 0], [], []>} : vector<16x8xf32>, vector<16x8xf32>, vector<16x16xf32> -> vector<16x16xf32>
    %cst_90 = arith.constant 2.500000e+01 : f32
    %324 = vector.broadcast %cst_90 : f32 to vector<16x16xf32>
    %325 = arith.mulf %323, %324 : vector<16x16xf32>
    %cst_91 = arith.constant dense<0xFF800000> : vector<16xf32>
    %326 = vector.multi_reduction <maximumf>, %325, %cst_91 [1] : vector<16x16xf32> to vector<16xf32>
    %327 = vector.shape_cast %326 : vector<16xf32> to vector<16x1xf32>
    %328 = vector.broadcast %327 : vector<16x1xf32> to vector<16x16xf32>
    %329 = arith.subf %325, %328 : vector<16x16xf32>
    %330 = math.exp %329 : vector<16x16xf32>
    %cst_92 = arith.constant dense<0.000000e+00> : vector<16xf32>
    %331 = vector.multi_reduction <add>, %330, %cst_92 [1] : vector<16x16xf32> to vector<16xf32>
    %332 = vector.shape_cast %331 : vector<16xf32> to vector<16x1xf32>
    %333 = tpu.reciprocal %332 {approx = true} : vector<16x1xf32> -> vector<16x1xf32>
    %334 = vector.broadcast %333 : vector<16x1xf32> to vector<16x16xf32>
    %335 = arith.mulf %330, %334 : vector<16x16xf32>
    %336 = arith.addf %322, %335 : vector<16x16xf32>
    %cst_93 = arith.constant 5.000000e-01 : f32
    %337 = vector.broadcast %cst_93 : f32 to vector<16x16xf32>
    %338 = arith.mulf %337, %336 : vector<16x16xf32>
    %339 = arith.addf %257, %338 : vector<16x16xf32>
    %340 = arith.truncf %338 : vector<16x16xf32> to vector<16x16xbf16>
    %341 = arith.truncf %300 : vector<16x8xf32> to vector<16x8xbf16>
    %cst_94 = arith.constant dense<0.000000e+00> : vector<16x8xf32>
    %342 = tpu.matmul %340, %341, %cst_94 {dimension_numbers = #tpu.dot_dimension_numbers<[1], [0], [0], [1], [0, 0, 1, 1], [], []>} : vector<16x16xbf16>, vector<16x8xbf16>, vector<16x8xf32> -> vector<16x8xf32>
    %343 = vector.extract_strided_slice %10 {offsets = [24, 0], sizes = [8, 64], strides = [1, 1]} : vector<64x64xbf16> to vector<8x64xbf16>
    %344 = arith.truncf %342 : vector<16x8xf32> to vector<16x8xbf16>
    %cst_95 = arith.constant dense<0.000000e+00> : vector<16x64xf32>
    %345 = tpu.matmul %344, %343, %cst_95 {dimension_numbers = #tpu.dot_dimension_numbers<[1], [0], [0], [1], [0, 0, 1, 1], [], []>} : vector<16x8xbf16>, vector<8x64xbf16>, vector<16x64xf32> -> vector<16x64xf32>
    %346 = arith.addf %264, %345 : vector<16x64xf32>
    %347 = arith.truncf %338 : vector<16x16xf32> to vector<16x16xbf16>
    %348 = arith.truncf %301 : vector<16x8xf32> to vector<16x8xbf16>
    %cst_96 = arith.constant dense<0.000000e+00> : vector<16x8xf32>
    %349 = tpu.matmul %347, %348, %cst_96 {dimension_numbers = #tpu.dot_dimension_numbers<[1], [0], [0], [1], [0, 0, 1, 1], [], []>} : vector<16x16xbf16>, vector<16x8xbf16>, vector<16x8xf32> -> vector<16x8xf32>
    %350 = vector.extract_strided_slice %11 {offsets = [24, 0], sizes = [8, 64], strides = [1, 1]} : vector<64x64xbf16> to vector<8x64xbf16>
    %351 = arith.truncf %349 : vector<16x8xf32> to vector<16x8xbf16>
    %cst_97 = arith.constant dense<0.000000e+00> : vector<16x64xf32>
    %352 = tpu.matmul %351, %350, %cst_97 {dimension_numbers = #tpu.dot_dimension_numbers<[1], [0], [0], [1], [0, 0, 1, 1], [], []>} : vector<16x8xbf16>, vector<8x64xbf16>, vector<16x64xf32> -> vector<16x64xf32>
    %353 = arith.addf %271, %352 : vector<16x64xf32>
    %cst_98 = arith.constant 2.500000e-01 : f32
    %354 = vector.broadcast %cst_98 : f32 to vector<16x16xf32>
    %355 = arith.mulf %309, %354 : vector<16x16xf32>
    %cst_99 = arith.constant 7.500000e-01 : f32
    %356 = vector.broadcast %cst_99 : f32 to vector<16x16xf32>
    %357 = arith.cmpf ogt, %355, %356 : vector<16x16xf32>
    %cst_100 = arith.constant 1.000000e+00 : f32
    %cst_101 = arith.constant 0.000000e+00 : f32
    %358 = vector.broadcast %cst_100 : f32 to vector<16x16xf32>
    %359 = vector.broadcast %cst_101 : f32 to vector<16x16xf32>
    %360 = arith.select %357, %358, %359 : vector<16x16xi1>, vector<16x16xf32>
    %cst_102 = arith.constant 2.500000e-01 : f32
    %361 = vector.broadcast %cst_102 : f32 to vector<16x16xf32>
    %362 = arith.mulf %339, %361 : vector<16x16xf32>
    %cst_103 = arith.constant dense<0xFF800000> : vector<16xf32>
    %363 = vector.multi_reduction <maximumf>, %362, %cst_103 [1] : vector<16x16xf32> to vector<16xf32>
    %364 = vector.shape_cast %363 : vector<16xf32> to vector<16x1xf32>
    %365 = vector.broadcast %364 : vector<16x1xf32> to vector<16x16xf32>
    %366 = arith.subf %362, %365 : vector<16x16xf32>
    %367 = math.exp %366 : vector<16x16xf32>
    %cst_104 = arith.constant dense<0.000000e+00> : vector<16xf32>
    %368 = vector.multi_reduction <add>, %367, %cst_104 [1] : vector<16x16xf32> to vector<16xf32>
    %369 = vector.shape_cast %368 : vector<16xf32> to vector<16x1xf32>
    %370 = tpu.reciprocal %369 {approx = true} : vector<16x1xf32> -> vector<16x1xf32>
    %371 = vector.broadcast %370 : vector<16x1xf32> to vector<16x16xf32>
    %372 = arith.mulf %367, %371 : vector<16x16xf32>
    %373 = arith.mulf %360, %372 : vector<16x16xf32>
    %cst_105 = arith.constant dense<0.000000e+00> : vector<16xf32>
    %374 = vector.multi_reduction <add>, %373, %cst_105 [1] : vector<16x16xf32> to vector<16xf32>
    %375 = vector.shape_cast %374 : vector<16xf32> to vector<16x1xf32>
    %376 = tpu.reciprocal %375 {approx = true} : vector<16x1xf32> -> vector<16x1xf32>
    %377 = vector.broadcast %376 : vector<16x1xf32> to vector<16x16xf32>
    %378 = arith.mulf %373, %377 : vector<16x16xf32>
    %c0_106 = arith.constant 0 : index
    %c0_107 = arith.constant 0 : index
    %379 = vector.load %arg9[%c0_106, %c0_107] : memref<128x128xbf16, #tpu.memory_space<vmem>>, vector<128x128xbf16>
    %c0_108 = arith.constant 0 : index
    %c0_109 = arith.constant 0 : index
    %380 = vector.load %arg11[%c0_108, %c0_109] : memref<128x128xbf16, #tpu.memory_space<vmem>>, vector<128x128xbf16>
    %381 = arith.truncf %378 : vector<16x16xf32> to vector<16x16xbf16>
    %382 = arith.truncf %346 : vector<16x64xf32> to vector<16x64xbf16>
    %cst_110 = arith.constant dense<0.000000e+00> : vector<16x64xf32>
    %383 = tpu.matmul %381, %382, %cst_110 {dimension_numbers = #tpu.dot_dimension_numbers<[1], [0], [0], [1], [0, 0, 1, 1], [], []>} : vector<16x16xbf16>, vector<16x64xbf16>, vector<16x64xf32> -> vector<16x64xf32>
    %384 = arith.truncf %378 : vector<16x16xf32> to vector<16x16xbf16>
    %385 = arith.truncf %353 : vector<16x64xf32> to vector<16x64xbf16>
    %cst_111 = arith.constant dense<0.000000e+00> : vector<16x64xf32>
    %386 = tpu.matmul %384, %385, %cst_111 {dimension_numbers = #tpu.dot_dimension_numbers<[1], [0], [0], [1], [0, 0, 1, 1], [], []>} : vector<16x16xbf16>, vector<16x64xbf16>, vector<16x64xf32> -> vector<16x64xf32>
    %387 = vector.extract_strided_slice %379 {offsets = [0, 0], sizes = [64, 128], strides = [1, 1]} : vector<128x128xbf16> to vector<64x128xbf16>
    %388 = arith.truncf %383 : vector<16x64xf32> to vector<16x64xbf16>
    %cst_112 = arith.constant dense<0.000000e+00> : vector<16x128xf32>
    %389 = tpu.matmul %388, %387, %cst_112 {dimension_numbers = #tpu.dot_dimension_numbers<[1], [0], [0], [1], [0, 0, 1, 1], [], []>} : vector<16x64xbf16>, vector<64x128xbf16>, vector<16x128xf32> -> vector<16x128xf32>
    %390 = vector.extract_strided_slice %379 {offsets = [64, 0], sizes = [64, 128], strides = [1, 1]} : vector<128x128xbf16> to vector<64x128xbf16>
    %391 = arith.truncf %346 : vector<16x64xf32> to vector<16x64xbf16>
    %cst_113 = arith.constant dense<0.000000e+00> : vector<16x128xf32>
    %392 = tpu.matmul %391, %390, %cst_113 {dimension_numbers = #tpu.dot_dimension_numbers<[1], [0], [0], [1], [0, 0, 1, 1], [], []>} : vector<16x64xbf16>, vector<64x128xbf16>, vector<16x128xf32> -> vector<16x128xf32>
    %393 = arith.addf %389, %392 : vector<16x128xf32>
    %c0_114 = arith.constant 0 : index
    %c0_115 = arith.constant 0 : index
    %394 = vector.load %arg10[%c0_114, %c0_115] : memref<1x128xf32, #tpu.memory_space<vmem>>, vector<1x128xf32>
    %395 = vector.broadcast %394 : vector<1x128xf32> to vector<16x128xf32>
    %396 = arith.addf %393, %395 : vector<16x128xf32>
    %c0_116 = arith.constant 0 : index
    %c0_117 = arith.constant 0 : index
    %397 = vector.load %arg13[%c0_116, %c0_117] : memref<16x128xf32, #tpu.memory_space<vmem>>, vector<16x128xf32>
    tpu.vector_store %arg13[%c0_116, %c0_117], %396 {strides = array<i32>} : memref<16x128xf32, #tpu.memory_space<vmem>>, vector<16x128xf32>,
    %398 = vector.extract_strided_slice %380 {offsets = [0, 0], sizes = [64, 128], strides = [1, 1]} : vector<128x128xbf16> to vector<64x128xbf16>
    %399 = arith.truncf %386 : vector<16x64xf32> to vector<16x64xbf16>
    %cst_118 = arith.constant dense<0.000000e+00> : vector<16x128xf32>
    %400 = tpu.matmul %399, %398, %cst_118 {dimension_numbers = #tpu.dot_dimension_numbers<[1], [0], [0], [1], [0, 0, 1, 1], [], []>} : vector<16x64xbf16>, vector<64x128xbf16>, vector<16x128xf32> -> vector<16x128xf32>
    %401 = vector.extract_strided_slice %380 {offsets = [64, 0], sizes = [64, 128], strides = [1, 1]} : vector<128x128xbf16> to vector<64x128xbf16>
    %402 = arith.truncf %353 : vector<16x64xf32> to vector<16x64xbf16>
    %cst_119 = arith.constant dense<0.000000e+00> : vector<16x128xf32>
    %403 = tpu.matmul %402, %401, %cst_119 {dimension_numbers = #tpu.dot_dimension_numbers<[1], [0], [0], [1], [0, 0, 1, 1], [], []>} : vector<16x64xbf16>, vector<64x128xbf16>, vector<16x128xf32> -> vector<16x128xf32>
    %404 = arith.addf %400, %403 : vector<16x128xf32>
    %c0_120 = arith.constant 0 : index
    %c0_121 = arith.constant 0 : index
    %405 = vector.load %arg12[%c0_120, %c0_121] : memref<1x128xf32, #tpu.memory_space<vmem>>, vector<1x128xf32>
    %406 = vector.broadcast %405 : vector<1x128xf32> to vector<16x128xf32>
    %407 = arith.addf %404, %406 : vector<16x128xf32>
    %c0_122 = arith.constant 0 : index
    %c0_123 = arith.constant 0 : index
    %408 = vector.load %arg14[%c0_122, %c0_123] : memref<16x128xf32, #tpu.memory_space<vmem>>, vector<16x128xf32>
    tpu.vector_store %arg14[%c0_122, %c0_123], %407 {strides = array<i32>} : memref<16x128xf32, #tpu.memory_space<vmem>>, vector<16x128xf32>,
    return
  }
  func.func @transform_0(%arg0: i32) -> (i32, i32, i32) {
    %c0_i32 = arith.constant 0 : i32
    %c0_i32_0 = arith.constant 0 : i32
    %c0_i32_1 = arith.constant 0 : i32
    %c0_i32_2 = arith.constant 0 : i32
    return %c0_i32, %c0_i32_0, %c0_i32_1 : i32, i32, i32
  }
  func.func @transform_1(%arg0: i32) -> (i32, i32, i32) {
    %c0_i32 = arith.constant 0 : i32
    %c0_i32_0 = arith.constant 0 : i32
    %c0_i32_1 = arith.constant 0 : i32
    %c0_i32_2 = arith.constant 0 : i32
    return %c0_i32, %c0_i32_0, %c0_i32_1 : i32, i32, i32
  }
  func.func @transform_2(%arg0: i32) -> (i32, i32) {
    %c0_i32 = arith.constant 0 : i32
    %c0_i32_0 = arith.constant 0 : i32
    %c0_i32_1 = arith.constant 0 : i32
    return %c0_i32, %c0_i32_0 : i32, i32
  }
  func.func @transform_3(%arg0: i32) -> (i32, i32) {
    %c0_i32 = arith.constant 0 : i32
    %c0_i32_0 = arith.constant 0 : i32
    %c0_i32_1 = arith.constant 0 : i32
    return %c0_i32, %c0_i32_0 : i32, i32
  }
  func.func @transform_4(%arg0: i32) -> (i32, i32) {
    %c0_i32 = arith.constant 0 : i32
    %c0_i32_0 = arith.constant 0 : i32
    %c0_i32_1 = arith.constant 0 : i32
    return %c0_i32, %c0_i32_0 : i32, i32
  }
  func.func @transform_5(%arg0: i32) -> (i32, i32) {
    %c0_i32 = arith.constant 0 : i32
    %c0_i32_0 = arith.constant 0 : i32
    %c0_i32_1 = arith.constant 0 : i32
    return %c0_i32, %c0_i32_0 : i32, i32
  }
  func.func @transform_6(%arg0: i32) -> (i32, i32) {
    %c0_i32 = arith.constant 0 : i32
    %c0_i32_0 = arith.constant 0 : i32
    %c0_i32_1 = arith.constant 0 : i32
    return %c0_i32, %c0_i32_0 : i32, i32
  }
  func.func @transform_7(%arg0: i32) -> (i32, i32) {
    %c0_i32 = arith.constant 0 : i32
    %c0_i32_0 = arith.constant 0 : i32
    %c0_i32_1 = arith.constant 0 : i32
    return %c0_i32, %c0_i32_0 : i32, i32
  }
  func.func @transform_8(%arg0: i32) -> (i32, i32) {
    %c0_i32 = arith.constant 0 : i32
    %c0_i32_0 = arith.constant 0 : i32
    %c0_i32_1 = arith.constant 0 : i32
    return %c0_i32, %c0_i32_0 : i32, i32
  }
  func.func @transform_9(%arg0: i32) -> (i32, i32) {
    %c0_i32 = arith.constant 0 : i32
    %c0_i32_0 = arith.constant 0 : i32
    %c0_i32_1 = arith.constant 0 : i32
    return %c0_i32, %c0_i32_0 : i32, i32
  }
  func.func @transform_10(%arg0: i32) -> (i32, i32) {
    %c0_i32 = arith.constant 0 : i32
    %c0_i32_0 = arith.constant 0 : i32
    %c0_i32_1 = arith.constant 0 : i32
    return %c0_i32, %c0_i32_0 : i32, i32
  }
  func.func @transform_11(%arg0: i32) -> (i32, i32) {
    %c0_i32 = arith.constant 0 : i32
    %c0_i32_0 = arith.constant 0 : i32
    %c0_i32_1 = arith.constant 0 : i32
    return %c0_i32, %c0_i32_0 : i32, i32
  }
  func.func @transform_12(%arg0: i32) -> (i32, i32) {
    %c0_i32 = arith.constant 0 : i32
    %c0_i32_0 = arith.constant 0 : i32
    %c0_i32_1 = arith.constant 0 : i32
    return %c0_i32, %c0_i32_0 : i32, i32
  }
  func.func @transform_13(%arg0: i32) -> (i32, i32) {
    %c0_i32 = arith.constant 0 : i32
    %c0_i32_0 = arith.constant 0 : i32
    %c0_i32_1 = arith.constant 0 : i32
    return %c0_i32, %c0_i32_0 : i32, i32
  }
}

</mosaic_0001>

<llo_original>
// kernel: msa_yolov_forward.1
$region0: #{msa_yolov_forward.1}
  #allocation0 [shape = 'u32[]', space=smem, size = 0x4, offset = 0x4, fixed_abs, tag = 'smem constant byte address 0x4 - core index']
  #allocation1 [shape = 'u32[72,128]{1,0:T(1,128)}', space=vmem, size = 0x9000, scoped, tag = 'internal scratch']
  %s0 = inlined_call_operand.hbm [shape: f32[2,16,32], index: 0, kind: input, shape index: {}]
  %s1 = inlined_call_operand.hbm [shape: f32[2,16,32], index: 1, kind: input, shape index: {}]
  %s2 = inlined_call_operand.hbm [shape: f32[32,96], index: 2, kind: input, shape index: {}]
  %s3 = inlined_call_operand.hbm [shape: f32[32,96], index: 3, kind: input, shape index: {}]
  %s4 = inlined_call_operand.hbm [shape: bf16[64,64], index: 4, kind: input, shape index: {}]
  %s5 = inlined_call_operand.vmem [shape: f32[1,64], index: 5, kind: input, shape index: {}]
  %s6 = inlined_call_operand.hbm [shape: bf16[64,64], index: 6, kind: input, shape index: {}]
  %s7 = inlined_call_operand.vmem [shape: f32[1,64], index: 7, kind: input, shape index: {}]
  %s8 = inlined_call_operand.hbm [shape: bf16[128,128], index: 8, kind: input, shape index: {}]
  %s9 = inlined_call_operand.vmem [shape: f32[1,128], index: 9, kind: input, shape index: {}]
  %s10 = inlined_call_operand.hbm [shape: bf16[128,128], index: 10, kind: input, shape index: {}]
  %s11 = inlined_call_operand.vmem [shape: f32[1,128], index: 11, kind: input, shape index: {}]
  %s12 = inlined_call_operand.hbm [shape: f32[16,128], index: 12, kind: output, shape index: {0}]
  %s13 = inlined_call_operand.hbm [shape: f32[16,128], index: 13, kind: output, shape index: {1}]
  %14 = xla_tuple %s12, %s13
  %s15 = sld [smem:[#allocation0]]
  $region98: #{msa_yolov_forward.1} parent=0
    _
  %s17 = ssub.s32 1, %s15
  %s18 = scalar_select 0, %s17, %s15
  $region1: #{msa_yolov_forward.1} parent=0
    #allocation2 [shape = 'u8[8192]{0}', space=vmem, size = 0x2000, scoped, tag = 'input window, operand 0, single buffered']
    #allocation3 [shape = 's32[1]{0}', space=sflag, size = 0x4, scoped, tag = 'scoped memory for msa_yolov_forward.1']
    #allocation4 [shape = 's32[1]{0}', space=sflag, size = 0x4, scoped, tag = 'scoped memory for msa_yolov_forward.1']
    #allocation5 [shape = 'u8[8192]{0}', space=vmem, size = 0x2000, scoped, tag = 'input window, operand 1, single buffered']
    #allocation6 [shape = 's32[1]{0}', space=sflag, size = 0x4, scoped, tag = 'scoped memory for msa_yolov_forward.1']
    #allocation7 [shape = 'u8[16384]{0}', space=vmem, size = 0x4000, scoped, tag = 'input window, operand 2, single buffered']
    #allocation8 [shape = 'u8[16384]{0}', space=vmem, size = 0x4000, scoped, tag = 'input window, operand 3, single buffered']
    #allocation9 [shape = 's32[1]{0}', space=sflag, size = 0x4, scoped, tag = 'scoped memory for msa_yolov_forward.1']
    #allocation10 [shape = 'u8[16384]{0}', space=vmem, size = 0x4000, scoped, tag = 'input window, operand 4, single buffered']
    #allocation11 [shape = 'u8[16384]{0}', space=vmem, size = 0x4000, scoped, tag = 'input window, operand 6, single buffered']
    #allocation12 [shape = 's32[1]{0}', space=sflag, size = 0x4, scoped, tag = 'scoped memory for msa_yolov_forward.1']
    #allocation13 [shape = 'u8[32768]{0}', space=vmem, size = 0x8000, scoped, tag = 'input window, operand 8, single buffered']
    #allocation14 [shape = 'u8[32768]{0}', space=vmem, size = 0x8000, scoped, tag = 'input window, operand 10, single buffered']
    #allocation15 [shape = 's32[1]{0}', space=sflag, size = 0x4, scoped, tag = 'scoped memory for msa_yolov_forward.1']
    #allocation16 [shape = 'u8[8192]{0}', space=vmem, size = 0x2000, scoped, tag = 'output window, operand 0, single buffered']
    #allocation17 [shape = 'u8[8192]{0}', space=vmem, size = 0x2000, scoped, tag = 'output window, operand 1, single buffered']
    #allocation18 [shape = 's32[1]{0}', space=sflag, size = 0x4, scoped, tag = 'scoped memory for msa_yolov_forward.1']
    %19 = vsyncpa [#allocation3], 0
    %20 = vsyncpa [#allocation6], 0
    %21 = vsyncpa [#allocation9], 0
    %22 = vsyncpa [#allocation12], 0
    %23 = vsyncpa [#allocation15], 0
    %24 = vsyncpa [#allocation4], 0
    %25 = vsyncpa [#allocation18], 0
    // Predicated region
    $region2: #{msa_yolov_forward.1} parent=1 // pred_check
      _
    $region3: #{msa_yolov_forward.1} parent=1 // pred_check_branch
      %27 = sbr.rel (0) target = $region5
    $region4: #{msa_yolov_forward.1} parent=1 // pred_region
      %29 = vsyncadd [#allocation3], 0
      %s30 = sshll.u32 %s0, 4
      %s31 = int_to_ptr.hbm [resolvable:$true] %s30
      %s32 = sshll.u32 [#allocation2], 4
      %s33 = int_to_ptr.vmem [resolvable:$true] %s32
      %38 = dma.hbm_to_vmem [thread:$0]  %s31, 256, %s33, [#allocation3], 128, 128, 8
    $region5: #{msa_yolov_forward.1} parent=1 // pred_fallthru
      _
    // Predicated region
    $region6: #{msa_yolov_forward.1} parent=1 // pred_check
      _
    $region7: #{msa_yolov_forward.1} parent=1 // pred_check_branch
      %40 = sbr.rel (0) target = $region9
    $region8: #{msa_yolov_forward.1} parent=1 // pred_region
      %42 = vsyncadd [#allocation6], 0
      %s43 = sshll.u32 %s1, 4
      %s44 = int_to_ptr.hbm [resolvable:$true] %s43
      %s45 = sshll.u32 [#allocation5], 4
      %s46 = int_to_ptr.vmem [resolvable:$true] %s45
      %51 = dma.hbm_to_vmem [thread:$0]  %s44, 256, %s46, [#allocation6], 128, 128, 8
    $region9: #{msa_yolov_forward.1} parent=1 // pred_fallthru
      _
    // Predicated region
    $region10: #{msa_yolov_forward.1} parent=1 // pred_check
      _
    $region11: #{msa_yolov_forward.1} parent=1 // pred_check_branch
      %53 = sbr.rel (0) target = $region13
    $region12: #{msa_yolov_forward.1} parent=1 // pred_region
      %55 = vsyncadd [#allocation6], 0
      %s56 = sshll.u32 %s2, 4
      %s57 = int_to_ptr.hbm [resolvable:$true] %s56
      %s58 = sshll.u32 [#allocation7], 4
      %s59 = int_to_ptr.vmem [resolvable:$true] %s58
      %64 = dma.hbm_to_vmem [thread:$0]  %s57, 512, %s59, [#allocation6], 128, 128, 8
    $region13: #{msa_yolov_forward.1} parent=1 // pred_fallthru
      _
    // Predicated region
    $region14: #{msa_yolov_forward.1} parent=1 // pred_check
      _
    $region15: #{msa_yolov_forward.1} parent=1 // pred_check_branch
      %66 = sbr.rel (0) target = $region17
    $region16: #{msa_yolov_forward.1} parent=1 // pred_region
      %68 = vsyncadd [#allocation9], 0
      %s69 = sshll.u32 %s3, 4
      %s70 = int_to_ptr.hbm [resolvable:$true] %s69
      %s71 = sshll.u32 [#allocation8], 4
      %s72 = int_to_ptr.vmem [resolvable:$true] %s71
      %77 = dma.hbm_to_vmem [thread:$0]  %s70, 512, %s72, [#allocation9], 128, 128, 8
    $region17: #{msa_yolov_forward.1} parent=1 // pred_fallthru
      _
    // Predicated region
    $region18: #{msa_yolov_forward.1} parent=1 // pred_check
      _
    $region19: #{msa_yolov_forward.1} parent=1 // pred_check_branch
      %79 = sbr.rel (0) target = $region21
    $region20: #{msa_yolov_forward.1} parent=1 // pred_region
      %81 = vsyncadd [#allocation9], 0
      %s82 = sshll.u32 %s4, 4
      %s83 = int_to_ptr.hbm [resolvable:$true] %s82
      %s84 = sshll.u32 [#allocation10], 4
      %s85 = int_to_ptr.vmem [resolvable:$true] %s84
      %90 = dma.hbm_to_vmem [thread:$0]  %s83, 512, %s85, [#allocation9], 64, 64, 4
    $region21: #{msa_yolov_forward.1} parent=1 // pred_fallthru
      _
    // Predicated region
    $region22: #{msa_yolov_forward.1} parent=1 // pred_check
      _
    $region23: #{msa_yolov_forward.1} parent=1 // pred_check_branch
      %92 = sbr.rel (0) target = $region25
    $region24: #{msa_yolov_forward.1} parent=1 // pred_region
      _
    $region25: #{msa_yolov_forward.1} parent=1 // pred_fallthru
      _
    // Predicated region
    $region26: #{msa_yolov_forward.1} parent=1 // pred_check
      _
    $region27: #{msa_yolov_forward.1} parent=1 // pred_check_branch
      %94 = sbr.rel (0) target = $region29
    $region28: #{msa_yolov_forward.1} parent=1 // pred_region
      %96 = vsyncadd [#allocation12], 0
      %s97 = sshll.u32 %s6, 4
      %s98 = int_to_ptr.hbm [resolvable:$true] %s97
      %s99 = sshll.u32 [#allocation11], 4
      %s100 = int_to_ptr.vmem [resolvable:$true] %s99
      %105 = dma.hbm_to_vmem [thread:$0]  %s98, 512, %s100, [#allocation12], 64, 64, 4
    $region29: #{msa_yolov_forward.1} parent=1 // pred_fallthru
      _
    // Predicated region
    $region30: #{msa_yolov_forward.1} parent=1 // pred_check
      _
    $region31: #{msa_yolov_forward.1} parent=1 // pred_check_branch
      %107 = sbr.rel (0) target = $region33
    $region32: #{msa_yolov_forward.1} parent=1 // pred_region
      _
    $region33: #{msa_yolov_forward.1} parent=1 // pred_fallthru
      _
    // Predicated region
    $region34: #{msa_yolov_forward.1} parent=1 // pred_check
      _
    $region35: #{msa_yolov_forward.1} parent=1 // pred_check_branch
      %109 = sbr.rel (0) target = $region37
    $region36: #{msa_yolov_forward.1} parent=1 // pred_region
      %111 = vsyncadd [#allocation12], 0
      %s112 = sshll.u32 %s8, 4
      %s113 = int_to_ptr.hbm [resolvable:$true] %s112
      %s114 = sshll.u32 [#allocation13], 4
      %s115 = int_to_ptr.vmem [resolvable:$true] %s114
      %120 = dma.hbm_to_vmem [thread:$0]  %s113, 1024, %s115, [#allocation12], 64, 64, 4
    $region37: #{msa_yolov_forward.1} parent=1 // pred_fallthru
      _
    // Predicated region
    $region38: #{msa_yolov_forward.1} parent=1 // pred_check
      _
    $region39: #{msa_yolov_forward.1} parent=1 // pred_check_branch
      %122 = sbr.rel (0) target = $region41
    $region40: #{msa_yolov_forward.1} parent=1 // pred_region
      _
    $region41: #{msa_yolov_forward.1} parent=1 // pred_fallthru
      _
    // Predicated region
    $region42: #{msa_yolov_forward.1} parent=1 // pred_check
      _
    $region43: #{msa_yolov_forward.1} parent=1 // pred_check_branch
      %124 = sbr.rel (0) target = $region45
    $region44: #{msa_yolov_forward.1} parent=1 // pred_region
      %126 = vsyncadd [#allocation15], 0
      %s127 = sshll.u32 %s10, 4
      %s128 = int_to_ptr.hbm [resolvable:$true] %s127
      %s129 = sshll.u32 [#allocation14], 4
      %s130 = int_to_ptr.vmem [resolvable:$true] %s129
      %135 = dma.hbm_to_vmem [thread:$0]  %s128, 1024, %s130, [#allocation15], 64, 64, 4
    $region45: #{msa_yolov_forward.1} parent=1 // pred_fallthru
      _
    // Predicated region
    $region46: #{msa_yolov_forward.1} parent=1 // pred_check
      _
    $region47: #{msa_yolov_forward.1} parent=1 // pred_check_branch
      %137 = sbr.rel (0) target = $region49
    $region48: #{msa_yolov_forward.1} parent=1 // pred_region
      _
    $region49: #{msa_yolov_forward.1} parent=1 // pred_fallthru
      _
    // Predicated region
    $region50: #{msa_yolov_forward.1} parent=1 // pred_check
      _
    $region51: #{msa_yolov_forward.1} parent=1 // pred_check_branch
      %139 = sbr.rel (0) target = $region53
    $region52: #{msa_yolov_forward.1} parent=1 // pred_region
      %141 = dma.done [#allocation3], 256
    $region53: #{msa_yolov_forward.1} parent=1 // pred_fallthru
      _
    // Predicated region
    $region54: #{msa_yolov_forward.1} parent=1 // pred_check
      _
    $region55: #{msa_yolov_forward.1} parent=1 // pred_check_branch
      %143 = sbr.rel (0) target = $region57
    $region56: #{msa_yolov_forward.1} parent=1 // pred_region
      %145 = dma.done [#allocation6], 256
    $region57: #{msa_yolov_forward.1} parent=1 // pred_fallthru
      _
    // Predicated region
    $region58: #{msa_yolov_forward.1} parent=1 // pred_check
      _
    $region59: #{msa_yolov_forward.1} parent=1 // pred_check_branch
      %147 = sbr.rel (0) target = $region61
    $region60: #{msa_yolov_forward.1} parent=1 // pred_region
      %149 = dma.done [#allocation6], 512
    $region61: #{msa_yolov_forward.1} parent=1 // pred_fallthru
      _
    // Predicated region
    $region62: #{msa_yolov_forward.1} parent=1 // pred_check
      _
    $region63: #{msa_yolov_forward.1} parent=1 // pred_check_branch
      %151 = sbr.rel (0) target = $region65
    $region64: #{msa_yolov_forward.1} parent=1 // pred_region
      %153 = dma.done [#allocation9], 512
    $region65: #{msa_yolov_forward.1} parent=1 // pred_fallthru
      _
    // Predicated region
    $region66: #{msa_yolov_forward.1} parent=1 // pred_check
      _
    $region67: #{msa_yolov_forward.1} parent=1 // pred_check_branch
      %155 = sbr.rel (0) target = $region69
    $region68: #{msa_yolov_forward.1} parent=1 // pred_region
      %157 = dma.done [#allocation9], 512
    $region69: #{msa_yolov_forward.1} parent=1 // pred_fallthru
      _
    // Predicated region
    $region70: #{msa_yolov_forward.1} parent=1 // pred_check
      _
    $region71: #{msa_yolov_forward.1} parent=1 // pred_check_branch
      %159 = sbr.rel (0) target = $region73
    $region72: #{msa_yolov_forward.1} parent=1 // pred_region
      %161 = dma.done [#allocation12], 512
    $region73: #{msa_yolov_forward.1} parent=1 // pred_fallthru
      _
    // Predicated region
    $region74: #{msa_yolov_forward.1} parent=1 // pred_check
      _
    $region75: #{msa_yolov_forward.1} parent=1 // pred_check_branch
      %163 = sbr.rel (0) target = $region77
    $region76: #{msa_yolov_forward.1} parent=1 // pred_region
      %165 = dma.done [#allocation12], 1024
    $region77: #{msa_yolov_forward.1} parent=1 // pred_fallthru
      _
    // Predicated region
    $region78: #{msa_yolov_forward.1} parent=1 // pred_check
      _
    $region79: #{msa_yolov_forward.1} parent=1 // pred_check_branch
      %167 = sbr.rel (0) target = $region81
    $region80: #{msa_yolov_forward.1} parent=1 // pred_region
      %169 = dma.done [#allocation15], 1024
    $region81: #{msa_yolov_forward.1} parent=1 // pred_fallthru
      _
    %v171 = vld [vmem:[#allocation2] sm:$0xff]
    %v172 = vld [vmem:[#allocation2 + $0x8] sm:$0xff]
    %v173 = vld [vmem:[#allocation5] sm:$0xff]
    %v174 = vld [vmem:[#allocation5 + $0x8] sm:$0xff]
    %v175 = vld [vmem:[#allocation7] sm:$0xff]
    %v176 = vld [vmem:[#allocation7 + $0x8] sm:$0xff]
    %v177 = vld [vmem:[#allocation7 + $0x10] sm:$0xff]
    %v178 = vld [vmem:[#allocation7 + $0x18] sm:$0xff]
    %vm179 = vcmask 261120
    %v181 = vsel %vm179, %v171, 0
    %v184 = vsel %vm179, %v172, 0
    %186 = vmatpush.msra.mxu0 0.0
    %187 = vmatpush.msra.mxu0 0.0
    %188 = vmatpush.msra.mxu0 0.0
    %189 = vmatpush.msra.mxu0 0.0
    %190 = vmatpush.msra.mxu0 0.0
    %191 = vmatpush.msra.mxu0 0.0
    %192 = vmatpush.msra.mxu0 0.0
    %193 = vmatpush.msra.mxu0 0.0
    %194 = vmatpush.msra.mxu0 0.0
    %195 = vmatpush.msra.mxu0 0.0
    %196 = vmatpush.msra.mxu0 0.0
    %197 = vmatpush.msra.mxu0 0.0
    %198 = vmatpush.msra.mxu0 %v178
    %199 = vmatpush.msra.mxu0 %v177
    %200 = vmatpush.msra.mxu0 %v176
    %201 = vmatpush.msra.mxu0 %v175
    %202 = vmatmul.f32.gmra.mxu0 %v181
    %v203 = vpop.f32.mrf.mxu0
    %v204 = vadd.f32 0.0, %v203
    %205 = vmatmul.f32.gmra.mxu0 %v184
    %v206 = vpop.f32.mrf.mxu0
    %v207 = vadd.f32 0.0, %v206
    %208 = vdwg.mxu0
    %v209 = vld [vmem:[#allocation8] sm:$0xff]
    %v210 = vld [vmem:[#allocation8 + $0x8] sm:$0xff]
    %v211 = vld [vmem:[#allocation8 + $0x10] sm:$0xff]
    %v212 = vld [vmem:[#allocation8 + $0x18] sm:$0xff]
    %v214 = vsel %vm179, %v173, 0
    %v217 = vsel %vm179, %v174, 0
    %219 = vmatpush.msra.mxu0 0.0
    %220 = vmatpush.msra.mxu0 0.0
    %221 = vmatpush.msra.mxu0 0.0
    %222 = vmatpush.msra.mxu0 0.0
    %223 = vmatpush.msra.mxu0 0.0
    %224 = vmatpush.msra.mxu0 0.0
    %225 = vmatpush.msra.mxu0 0.0
    %226 = vmatpush.msra.mxu0 0.0
    %227 = vmatpush.msra.mxu0 0.0
    %228 = vmatpush.msra.mxu0 0.0
    %229 = vmatpush.msra.mxu0 0.0
    %230 = vmatpush.msra.mxu0 0.0
    %231 = vmatpush.msra.mxu0 %v212
    %232 = vmatpush.msra.mxu0 %v211
    %233 = vmatpush.msra.mxu0 %v210
    %234 = vmatpush.msra.mxu0 %v209
    %235 = vmatmul.f32.gmra.mxu0 %v214
    %v236 = vpop.f32.mrf.mxu0
    %v237 = vadd.f32 0.0, %v236
    %238 = vmatmul.f32.gmra.mxu0 %v217
    %v239 = vpop.f32.mrf.mxu0
    %v240 = vadd.f32 0.0, %v239
    %241 = vdwg.mxu0
    %v242 = vld [vmem:[#allocation10] sm:$0xf]
    %v243 = vld [vmem:[#allocation10 + $0x4] sm:$0xf]
    %v244 = vld [vmem:[#allocation10 + $0x8] sm:$0xf]
    %v245 = vld [vmem:[#allocation10 + $0xc] sm:$0xf]
    %v246 = vld [vmem:[#allocation10 + $0x10] sm:$0xf]
    %v247 = vld [vmem:[#allocation10 + $0x14] sm:$0xf]
    %v248 = vld [vmem:[#allocation10 + $0x18] sm:$0xf]
    %v249 = vld [vmem:[#allocation10 + $0x1c] sm:$0xf]
    %v250 = vld [vmem:[#allocation11] sm:$0xf]
    %v251 = vld [vmem:[#allocation11 + $0x4] sm:$0xf]
    %v252 = vld [vmem:[#allocation11 + $0x8] sm:$0xf]
    %v253 = vld [vmem:[#allocation11 + $0xc] sm:$0xf]
    %v254 = vld [vmem:[#allocation11 + $0x10] sm:$0xf]
    %v255 = vld [vmem:[#allocation11 + $0x14] sm:$0xf]
    %v256 = vld [vmem:[#allocation11 + $0x18] sm:$0xf]
    %v257 = vld [vmem:[#allocation11 + $0x1c] sm:$0xf]
    %v258 = vpack.c.bf16 %v207, %v204
    %v259 = vld [vmem:[%s5] sm:$0x1]
    %v261 = vperm.slane %v259, 0
    %264 = vrot.lane.b32.xlu0 %v258, 64
    %v265 = vpop.permute.xlu0 %264
    %v270 = vunpack.c.l.b16 %v246
    %v271 = vunpack.c.l.b16 %v247
    %v272 = vunpack.c.l.b16 %v248
    %v273 = vunpack.c.l.b16 %v249
    %v274 = vpack.c.b16 %v271, %v270
    %v275 = vpack.c.b16 %v273, %v272
    %v279 = vsel %vm179, %v265, 0
    %281 = vmatpush.bf16.msra.mxu0 0
    %282 = vmatpush.bf16.msra.mxu0 0
    %283 = vmatpush.bf16.msra.mxu0 0
    %284 = vmatpush.bf16.msra.mxu0 0
    %285 = vmatpush.bf16.msra.mxu0 0
    %286 = vmatpush.bf16.msra.mxu0 0
    %287 = vmatpush.bf16.msra.mxu0 %v275
    %288 = vmatpush.bf16.msra.mxu0 %v274
    %289 = vmatmul.bf16.gmra.mxu0 %v279
    %v290 = vpop.f32.mrf.mxu0
    %v291 = vadd.f32 %v261, %v290
    %v292 = vpop.f32.mrf.mxu0
    %v293 = vadd.f32 %v261, %v292
    %294 = vdwg.mxu0
    %v295 = vpack.c.bf16 %v240, %v237
    %v296 = vld [vmem:[%s7] sm:$0x1]
    %v298 = vperm.slane %v296, 0
    %301 = vrot.lane.b32.xlu0 %v295, 64
    %v302 = vpop.permute.xlu0 %301
    %v307 = vunpack.c.l.b16 %v254
    %v308 = vunpack.c.l.b16 %v255
    %v309 = vunpack.c.l.b16 %v256
    %v310 = vunpack.c.l.b16 %v257
    %v311 = vpack.c.b16 %v308, %v307
    %v312 = vpack.c.b16 %v310, %v309
    %v316 = vsel %vm179, %v302, 0
    %318 = vmatpush.bf16.msra.mxu0 0
    %319 = vmatpush.bf16.msra.mxu0 0
    %320 = vmatpush.bf16.msra.mxu0 0
    %321 = vmatpush.bf16.msra.mxu0 0
    %322 = vmatpush.bf16.msra.mxu0 0
    %323 = vmatpush.bf16.msra.mxu0 0
    %324 = vmatpush.bf16.msra.mxu0 %v312
    %325 = vmatpush.bf16.msra.mxu0 %v311
    %326 = vmatmul.bf16.gmra.mxu0 %v316
    %v327 = vpop.f32.mrf.mxu0
    %v328 = vadd.f32 %v298, %v327
    %v329 = vpop.f32.mrf.mxu0
    %v330 = vadd.f32 %v298, %v329
    %331 = vdwg.mxu0
    %v332 = vmul.f32 %v204, %v204
    %v333 = vmul.f32 %v207, %v207
    %vm334 = vcmask 64512
    %v335 = vsel %vm334, %v332, 0.0
    %336 = vadd.xlane.f32.xlu0 %v335
    %v337 = vpop.xlane.xlu0 %336
    %v338 = vsel %vm334, %v333, 0.0
    %339 = vadd.xlane.f32.xlu0 %v338
    %v340 = vpop.xlane.xlu0 %339
    %v341 = vrsqrt.pop %v337
    %v342 = vmul.f32 %v341, %v337
    %v343 = vmul.f32 %v342, %v341
    %v344 = vmul.f32 0.5, %v343
    %v345 = vsub.f32 1.5, %v344
    %v346 = vmul.f32 %v341, %v345
    %vm347 = vweird.f32 %v337
    %vm348 = vweird.f32 %v341
    %vm349 = vmor %vm347, %vm348
    %v350 = vsel %vm349, %v341, %v346
    %v351 = vrsqrt.pop %v340
    %v352 = vmul.f32 %v351, %v340
    %v353 = vmul.f32 %v352, %v351
    %v354 = vmul.f32 0.5, %v353
    %v355 = vsub.f32 1.5, %v354
    %v356 = vmul.f32 %v351, %v355
    %vm357 = vweird.f32 %v340
    %vm358 = vweird.f32 %v351
    %vm359 = vmor %vm357, %vm358
    %v360 = vsel %vm359, %v351, %v356
    %v361 = vmul.f32 %v204, %v350
    %v362 = vmul.f32 %v207, %v360
    %365 = vrot.lane.b32.xlu0 %v332, 96
    %v366 = vpop.permute.xlu0 %365
    %367 = vrot.lane.b32.xlu0 %v333, 96
    %v368 = vpop.permute.xlu0 %367
    %v371 = vsel %vm334, %v366, 0.0
    %372 = vadd.xlane.f32.xlu0 %v371
    %v373 = vpop.xlane.xlu0 %372
    %v374 = vsel %vm334, %v368, 0.0
    %375 = vadd.xlane.f32.xlu0 %v374
    %v376 = vpop.xlane.xlu0 %375
    %v377 = vrsqrt.pop %v373
    %v378 = vmul.f32 %v377, %v373
    %v379 = vmul.f32 %v378, %v377
    %v380 = vmul.f32 0.5, %v379
    %v381 = vsub.f32 1.5, %v380
    %v382 = vmul.f32 %v377, %v381
    %vm383 = vweird.f32 %v373
    %vm384 = vweird.f32 %v377
    %vm385 = vmor %vm383, %vm384
    %v386 = vsel %vm385, %v377, %v382
    %v387 = vrsqrt.pop %v376
    %v388 = vmul.f32 %v387, %v376
    %v389 = vmul.f32 %v388, %v387
    %v390 = vmul.f32 0.5, %v389
    %v391 = vsub.f32 1.5, %v390
    %v392 = vmul.f32 %v387, %v391
    %vm393 = vweird.f32 %v376
    %vm394 = vweird.f32 %v387
    %vm395 = vmor %vm393, %vm394
    %v396 = vsel %vm395, %v387, %v392
    %v397 = vmul.f32 %v204, %v386
    %v398 = vmul.f32 %v207, %v396
    %v399 = vmul.f32 %v237, %v237
    %v400 = vmul.f32 %v240, %v240
    %v401 = vsel %vm334, %v399, 0.0
    %402 = vadd.xlane.f32.xlu0 %v401
    %v403 = vpop.xlane.xlu0 %402
    %v404 = vsel %vm334, %v400, 0.0
    %405 = vadd.xlane.f32.xlu0 %v404
    %v406 = vpop.xlane.xlu0 %405
    %v407 = vrsqrt.pop %v403
    %v408 = vmul.f32 %v407, %v403
    %v409 = vmul.f32 %v408, %v407
    %v410 = vmul.f32 0.5, %v409
    %v411 = vsub.f32 1.5, %v410
    %v412 = vmul.f32 %v407, %v411
    %vm413 = vweird.f32 %v403
    %vm414 = vweird.f32 %v407
    %vm415 = vmor %vm413, %vm414
    %v416 = vsel %vm415, %v407, %v412
    %v417 = vrsqrt.pop %v406
    %v418 = vmul.f32 %v417, %v406
    %v419 = vmul.f32 %v418, %v417
    %v420 = vmul.f32 0.5, %v419
    %v421 = vsub.f32 1.5, %v420
    %v422 = vmul.f32 %v417, %v421
    %vm423 = vweird.f32 %v406
    %vm424 = vweird.f32 %v417
    %vm425 = vmor %vm423, %vm424
    %v426 = vsel %vm425, %v417, %v422
    %v427 = vmul.f32 %v237, %v416
    %v428 = vmul.f32 %v240, %v426
    %431 = vrot.lane.b32.xlu0 %v399, 96
    %v432 = vpop.permute.xlu0 %431
    %433 = vrot.lane.b32.xlu0 %v400, 96
    %v434 = vpop.permute.xlu0 %433
    %v437 = vsel %vm334, %v432, 0.0
    %438 = vadd.xlane.f32.xlu0 %v437
    %v439 = vpop.xlane.xlu0 %438
    %v440 = vsel %vm334, %v434, 0.0
    %441 = vadd.xlane.f32.xlu0 %v440
    %v442 = vpop.xlane.xlu0 %441
    %v443 = vrsqrt.pop %v439
    %v444 = vmul.f32 %v443, %v439
    %v445 = vmul.f32 %v444, %v443
    %v446 = vmul.f32 0.5, %v445
    %v447 = vsub.f32 1.5, %v446
    %v448 = vmul.f32 %v443, %v447
    %vm449 = vweird.f32 %v439
    %vm450 = vweird.f32 %v443
    %vm451 = vmor %vm449, %vm450
    %v452 = vsel %vm451, %v443, %v448
    %v453 = vrsqrt.pop %v442
    %v454 = vmul.f32 %v453, %v442
    %v455 = vmul.f32 %v454, %v453
    %v456 = vmul.f32 0.5, %v455
    %v457 = vsub.f32 1.5, %v456
    %v458 = vmul.f32 %v453, %v457
    %vm459 = vweird.f32 %v442
    %vm460 = vweird.f32 %v453
    %vm461 = vmor %vm459, %vm460
    %v462 = vsel %vm461, %v453, %v458
    %v463 = vmul.f32 %v237, %v452
    %v464 = vmul.f32 %v240, %v462
    %465 = vrot.lane.b32.xlu0 %v332, 64
    %v466 = vpop.permute.xlu0 %465
    %467 = vrot.lane.b32.xlu0 %v333, 64
    %v468 = vpop.permute.xlu0 %467
    %v471 = vsel %vm334, %v466, 0.0
    %472 = vadd.xlane.f32.xlu0 %v471
    %v473 = vpop.xlane.xlu0 %472
    %v474 = vsel %vm334, %v468, 0.0
    %475 = vadd.xlane.f32.xlu0 %v474
    %v476 = vpop.xlane.xlu0 %475
    %v477 = vrsqrt.pop %v473
    %v478 = vmul.f32 %v477, %v473
    %v479 = vmul.f32 %v478, %v477
    %v480 = vmul.f32 0.5, %v479
    %v481 = vsub.f32 1.5, %v480
    %v482 = vmul.f32 %v477, %v481
    %vm483 = vweird.f32 %v473
    %vm484 = vweird.f32 %v477
    %vm485 = vmor %vm483, %vm484
    %v486 = vsel %vm485, %v477, %v482
    %v487 = vrsqrt.pop %v476
    %v488 = vmul.f32 %v487, %v476
    %v489 = vmul.f32 %v488, %v487
    %v490 = vmul.f32 0.5, %v489
    %v491 = vsub.f32 1.5, %v490
    %v492 = vmul.f32 %v487, %v491
    %vm493 = vweird.f32 %v476
    %vm494 = vweird.f32 %v487
    %vm495 = vmor %vm493, %vm494
    %v496 = vsel %vm495, %v487, %v492
    %v497 = vmul.f32 %v204, %v486
    %v498 = vmul.f32 %v207, %v496
    %501 = vrot.lane.b32.xlu0 %v397, 96
    %v502 = vpop.permute.xlu0 %501
    %503 = vrot.lane.b32.xlu0 %v398, 96
    %v504 = vpop.permute.xlu0 %503
    %v506 = vsel %vm334, %v361, 0
    %v509 = vsel %vm334, %v362, 0
    %v511 = vsel %vm334, %v502, 0
    %v513 = vsel %vm334, %v504, 0
    %515 = vmatpush.xpose.msra.mxu0 0.0
    %516 = vmatpush.xpose.msra.mxu0 0.0
    %517 = vmatpush.xpose.msra.mxu0 0.0
    %518 = vmatpush.xpose.msra.mxu0 0.0
    %519 = vmatpush.xpose.msra.mxu0 0.0
    %520 = vmatpush.xpose.msra.mxu0 0.0
    %521 = vmatpush.xpose.msra.mxu0 0.0
    %522 = vmatpush.xpose.msra.mxu0 0.0
    %523 = vmatpush.xpose.msra.mxu0 0.0
    %524 = vmatpush.xpose.msra.mxu0 0.0
    %525 = vmatpush.xpose.msra.mxu0 0.0
    %526 = vmatpush.xpose.msra.mxu0 0.0
    %527 = vmatpush.xpose.msra.mxu0 0.0
    %528 = vmatpush.xpose.msra.mxu0 0.0
    %529 = vmatpush.xpose.msra.mxu0 %v513
    %530 = vmatpush.xpose.msra.mxu0 %v511
    %531 = vmatmul.f32.gmra.mxu0 %v506
    %v532 = vpop.f32.mrf.mxu0
    %v533 = vadd.f32 0.0, %v532
    %534 = vmatmul.f32.gmra.mxu0 %v509
    %v535 = vpop.f32.mrf.mxu0
    %v536 = vadd.f32 0.0, %v535
    %537 = vdwg.mxu0
    %v538 = vmul.f32 %v533, 25.0
    %v539 = vmul.f32 %v536, 25.0
    %vm540 = vcmask 130048
    %v541 = vsel %vm540, %v538, -inf
    %542 = vmax.xlane.f32.xlu0 %v541
    %v543 = vpop.xlane.xlu0 %542
    %v544 = vsel %vm540, %v539, -inf
    %545 = vmax.xlane.f32.xlu0 %v544
    %v546 = vpop.xlane.xlu0 %545
    %v547 = vsub.f32 %v538, %v543
    %v548 = vsub.f32 %v539, %v546
    %v549 = vmul.f32 %v547, 1.442695
    %v550 = vpow.pop %v549
    %v551 = vmul.f32 %v548, 1.442695
    %v552 = vpow.pop %v551
    %v553 = vsel %vm540, %v550, 0.0
    %554 = vadd.xlane.f32.xlu0 %v553
    %v555 = vpop.xlane.xlu0 %554
    %v556 = vsel %vm540, %v552, 0.0
    %557 = vadd.xlane.f32.xlu0 %v556
    %v558 = vpop.xlane.xlu0 %557
    %v559 = vrcp.pop %v555
    %v560 = vrcp.pop %v558
    %v561 = vmul.f32 %v550, %v559
    %v562 = vmul.f32 %v552, %v560
    %565 = vrot.lane.b32.xlu0 %v463, 96
    %v566 = vpop.permute.xlu0 %565
    %567 = vrot.lane.b32.xlu0 %v464, 96
    %v568 = vpop.permute.xlu0 %567
    %v570 = vsel %vm334, %v427, 0
    %v573 = vsel %vm334, %v428, 0
    %v575 = vsel %vm334, %v566, 0
    %v577 = vsel %vm334, %v568, 0
    %579 = vmatpush.xpose.msra.mxu0 0.0
    %580 = vmatpush.xpose.msra.mxu0 0.0
    %581 = vmatpush.xpose.msra.mxu0 0.0
    %582 = vmatpush.xpose.msra.mxu0 0.0
    %583 = vmatpush.xpose.msra.mxu0 0.0
    %584 = vmatpush.xpose.msra.mxu0 0.0
    %585 = vmatpush.xpose.msra.mxu0 0.0
    %586 = vmatpush.xpose.msra.mxu0 0.0
    %587 = vmatpush.xpose.msra.mxu0 0.0
    %588 = vmatpush.xpose.msra.mxu0 0.0
    %589 = vmatpush.xpose.msra.mxu0 0.0
    %590 = vmatpush.xpose.msra.mxu0 0.0
    %591 = vmatpush.xpose.msra.mxu0 0.0
    %592 = vmatpush.xpose.msra.mxu0 0.0
    %593 = vmatpush.xpose.msra.mxu0 %v577
    %594 = vmatpush.xpose.msra.mxu0 %v575
    %595 = vmatmul.f32.gmra.mxu0 %v570
    %v596 = vpop.f32.mrf.mxu0
    %v597 = vadd.f32 0.0, %v596
    %598 = vmatmul.f32.gmra.mxu0 %v573
    %v599 = vpop.f32.mrf.mxu0
    %v600 = vadd.f32 0.0, %v599
    %601 = vdwg.mxu0
    %v602 = vmul.f32 %v597, 25.0
    %v603 = vmul.f32 %v600, 25.0
    %v604 = vsel %vm540, %v602, -inf
    %605 = vmax.xlane.f32.xlu0 %v604
    %v606 = vpop.xlane.xlu0 %605
    %v607 = vsel %vm540, %v603, -inf
    %608 = vmax.xlane.f32.xlu0 %v607
    %v609 = vpop.xlane.xlu0 %608
    %v610 = vsub.f32 %v602, %v606
    %v611 = vsub.f32 %v603, %v609
    %v612 = vmul.f32 %v610, 1.442695
    %v613 = vpow.pop %v612
    %v614 = vmul.f32 %v611, 1.442695
    %v615 = vpow.pop %v614
    %v616 = vsel %vm540, %v613, 0.0
    %617 = vadd.xlane.f32.xlu0 %v616
    %v618 = vpop.xlane.xlu0 %617
    %v619 = vsel %vm540, %v615, 0.0
    %620 = vadd.xlane.f32.xlu0 %v619
    %v621 = vpop.xlane.xlu0 %620
    %v622 = vrcp.pop %v618
    %v623 = vrcp.pop %v621
    %v624 = vmul.f32 %v613, %v622
    %v625 = vmul.f32 %v615, %v623
    %v626 = vadd.f32 %v561, %v624
    %v627 = vadd.f32 %v562, %v625
    %v628 = vmul.f32 %v626, 0.5
    %v629 = vmul.f32 %v627, 0.5
    %v630 = vadd.f32 %v628, 0.0
    %v631 = vadd.f32 %v629, 0.0
    %v632 = vpack.c.bf16 %v629, %v628
    %v635 = vsel %vm540, %v632, 0
    %637 = vmatpush.bf16.msra.mxu0 0
    %638 = vmatpush.bf16.msra.mxu0 0
    %639 = vmatpush.bf16.msra.mxu0 0
    %640 = vmatpush.bf16.msra.mxu0 0
    %641 = vmatpush.bf16.msra.mxu0 0
    %642 = vmatpush.bf16.msra.mxu0 0
    %643 = vmatpush.bf16.msra.mxu0 0
    %644 = vmatpush.bf16.msra.mxu0 %v265
    %645 = vmatmul.bf16.gmra.mxu0 %v635
    %v646 = vpop.f32.mrf.mxu0
    %v647 = vadd.f32 0.0, %v646
    %v648 = vpop.f32.mrf.mxu0
    %v649 = vadd.f32 0.0, %v648
    %650 = vdwg.mxu0
    %v651 = vpack.c.bf16 %v649, %v647
    %v653 = vsel %vm334, %v651, 0
    %vm655 = vcmask 1043456
    %v657 = vsel %vm655, %v242, 0
    %659 = vmatpush.bf16.msra.mxu0 0
    %660 = vmatpush.bf16.msra.mxu0 0
    %661 = vmatpush.bf16.msra.mxu0 0
    %662 = vmatpush.bf16.msra.mxu0 0
    %663 = vmatpush.bf16.msra.mxu0 0
    %664 = vmatpush.bf16.msra.mxu0 0
    %665 = vmatpush.bf16.msra.mxu0 0
    %666 = vmatpush.bf16.msra.mxu0 %v657
    %667 = vmatmul.bf16.gmra.mxu0 %v653
    %v668 = vpop.f32.mrf.mxu0
    %v669 = vadd.f32 0.0, %v668
    %v670 = vpop.f32.mrf.mxu0
    %v671 = vadd.f32 0.0, %v670
    %672 = vdwg.mxu0
    %v673 = vadd.f32 %v291, %v669
    %v674 = vadd.f32 %v293, %v671
    %676 = vmatpush.bf16.msra.mxu0 0
    %677 = vmatpush.bf16.msra.mxu0 0
    %678 = vmatpush.bf16.msra.mxu0 0
    %679 = vmatpush.bf16.msra.mxu0 0
    %680 = vmatpush.bf16.msra.mxu0 0
    %681 = vmatpush.bf16.msra.mxu0 0
    %682 = vmatpush.bf16.msra.mxu0 0
    %683 = vmatpush.bf16.msra.mxu0 %v302
    %684 = vmatmul.bf16.gmra.mxu0 %v635
    %v685 = vpop.f32.mrf.mxu0
    %v686 = vadd.f32 0.0, %v685
    %v687 = vpop.f32.mrf.mxu0
    %v688 = vadd.f32 0.0, %v687
    %689 = vdwg.mxu0
    %v690 = vpack.c.bf16 %v688, %v686
    %v692 = vsel %vm334, %v690, 0
    %v695 = vsel %vm655, %v250, 0
    %697 = vmatpush.bf16.msra.mxu0 0
    %698 = vmatpush.bf16.msra.mxu0 0
    %699 = vmatpush.bf16.msra.mxu0 0
    %700 = vmatpush.bf16.msra.mxu0 0
    %701 = vmatpush.bf16.msra.mxu0 0
    %702 = vmatpush.bf16.msra.mxu0 0
    %703 = vmatpush.bf16.msra.mxu0 0
    %704 = vmatpush.bf16.msra.mxu0 %v695
    %705 = vmatmul.bf16.gmra.mxu0 %v692
    %v706 = vpop.f32.mrf.mxu0
    %v707 = vadd.f32 0.0, %v706
    %v708 = vpop.f32.mrf.mxu0
    %v709 = vadd.f32 0.0, %v708
    %710 = vdwg.mxu0
    %v711 = vadd.f32 %v328, %v707
    %v712 = vadd.f32 %v330, %v709
    %713 = vrot.lane.b32.xlu0 %v332, 120
    %v714 = vpop.permute.xlu0 %713
    %715 = vrot.lane.b32.xlu0 %v333, 120
    %v716 = vpop.permute.xlu0 %715
    %v719 = vsel %vm334, %v714, 0.0
    %720 = vadd.xlane.f32.xlu0 %v719
    %v721 = vpop.xlane.xlu0 %720
    %v722 = vsel %vm334, %v716, 0.0
    %723 = vadd.xlane.f32.xlu0 %v722
    %v724 = vpop.xlane.xlu0 %723
    %v725 = vrsqrt.pop %v721
    %v726 = vmul.f32 %v725, %v721
    %v727 = vmul.f32 %v726, %v725
    %v728 = vmul.f32 0.5, %v727
    %v729 = vsub.f32 1.5, %v728
    %v730 = vmul.f32 %v725, %v729
    %vm731 = vweird.f32 %v721
    %vm732 = vweird.f32 %v725
    %vm733 = vmor %vm731, %vm732
    %v734 = vsel %vm733, %v725, %v730
    %v735 = vrsqrt.pop %v724
    %v736 = vmul.f32 %v735, %v724
    %v737 = vmul.f32 %v736, %v735
    %v738 = vmul.f32 0.5, %v737
    %v739 = vsub.f32 1.5, %v738
    %v740 = vmul.f32 %v735, %v739
    %vm741 = vweird.f32 %v724
    %vm742 = vweird.f32 %v735
    %vm743 = vmor %vm741, %vm742
    %v744 = vsel %vm743, %v735, %v740
    %v745 = vmul.f32 %v204, %v734
    %v746 = vmul.f32 %v207, %v744
    %747 = vrot.lane.b32.xlu0 %v332, 88
    %v748 = vpop.permute.xlu0 %747
    %749 = vrot.lane.b32.xlu0 %v333, 88
    %v750 = vpop.permute.xlu0 %749
    %v753 = vsel %vm334, %v748, 0.0
    %754 = vadd.xlane.f32.xlu0 %v753
    %v755 = vpop.xlane.xlu0 %754
    %v756 = vsel %vm334, %v750, 0.0
    %757 = vadd.xlane.f32.xlu0 %v756
    %v758 = vpop.xlane.xlu0 %757
    %v759 = vrsqrt.pop %v755
    %v760 = vmul.f32 %v759, %v755
    %v761 = vmul.f32 %v760, %v759
    %v762 = vmul.f32 0.5, %v761
    %v763 = vsub.f32 1.5, %v762
    %v764 = vmul.f32 %v759, %v763
    %vm765 = vweird.f32 %v755
    %vm766 = vweird.f32 %v759
    %vm767 = vmor %vm765, %vm766
    %v768 = vsel %vm767, %v759, %v764
    %v769 = vrsqrt.pop %v758
    %v770 = vmul.f32 %v769, %v758
    %v771 = vmul.f32 %v770, %v769
    %v772 = vmul.f32 0.5, %v771
    %v773 = vsub.f32 1.5, %v772
    %v774 = vmul.f32 %v769, %v773
    %vm775 = vweird.f32 %v758
    %vm776 = vweird.f32 %v769
    %vm777 = vmor %vm775, %vm776
    %v778 = vsel %vm777, %v769, %v774
    %v779 = vmul.f32 %v204, %v768
    %v780 = vmul.f32 %v207, %v778
    %781 = vrot.lane.b32.xlu0 %v399, 120
    %v782 = vpop.permute.xlu0 %781
    %783 = vrot.lane.b32.xlu0 %v400, 120
    %v784 = vpop.permute.xlu0 %783
    %v787 = vsel %vm334, %v782, 0.0
    %788 = vadd.xlane.f32.xlu0 %v787
    %v789 = vpop.xlane.xlu0 %788
    %v790 = vsel %vm334, %v784, 0.0
    %791 = vadd.xlane.f32.xlu0 %v790
    %v792 = vpop.xlane.xlu0 %791
    %v793 = vrsqrt.pop %v789
    %v794 = vmul.f32 %v793, %v789
    %v795 = vmul.f32 %v794, %v793
    %v796 = vmul.f32 0.5, %v795
    %v797 = vsub.f32 1.5, %v796
    %v798 = vmul.f32 %v793, %v797
    %vm799 = vweird.f32 %v789
    %vm800 = vweird.f32 %v793
    %vm801 = vmor %vm799, %vm800
    %v802 = vsel %vm801, %v793, %v798
    %v803 = vrsqrt.pop %v792
    %v804 = vmul.f32 %v803, %v792
    %v805 = vmul.f32 %v804, %v803
    %v806 = vmul.f32 0.5, %v805
    %v807 = vsub.f32 1.5, %v806
    %v808 = vmul.f32 %v803, %v807
    %vm809 = vweird.f32 %v792
    %vm810 = vweird.f32 %v803
    %vm811 = vmor %vm809, %vm810
    %v812 = vsel %vm811, %v803, %v808
    %v813 = vmul.f32 %v237, %v802
    %v814 = vmul.f32 %v240, %v812
    %815 = vrot.lane.b32.xlu0 %v399, 88
    %v816 = vpop.permute.xlu0 %815
    %817 = vrot.lane.b32.xlu0 %v400, 88
    %v818 = vpop.permute.xlu0 %817
    %v821 = vsel %vm334, %v816, 0.0
    %822 = vadd.xlane.f32.xlu0 %v821
    %v823 = vpop.xlane.xlu0 %822
    %v824 = vsel %vm334, %v818, 0.0
    %825 = vadd.xlane.f32.xlu0 %v824
    %v826 = vpop.xlane.xlu0 %825
    %v827 = vrsqrt.pop %v823
    %v828 = vmul.f32 %v827, %v823
    %v829 = vmul.f32 %v828, %v827
    %v830 = vmul.f32 0.5, %v829
    %v831 = vsub.f32 1.5, %v830
    %v832 = vmul.f32 %v827, %v831
    %vm833 = vweird.f32 %v823
    %vm834 = vweird.f32 %v827
    %vm835 = vmor %vm833, %vm834
    %v836 = vsel %vm835, %v827, %v832
    %v837 = vrsqrt.pop %v826
    %v838 = vmul.f32 %v837, %v826
    %v839 = vmul.f32 %v838, %v837
    %v840 = vmul.f32 0.5, %v839
    %v841 = vsub.f32 1.5, %v840
    %v842 = vmul.f32 %v837, %v841
    %vm843 = vweird.f32 %v826
    %vm844 = vweird.f32 %v837
    %vm845 = vmor %vm843, %vm844
    %v846 = vsel %vm845, %v837, %v842
    %v847 = vmul.f32 %v237, %v836
    %v848 = vmul.f32 %v240, %v846
    %849 = vrot.lane.b32.xlu0 %v332, 56
    %v850 = vpop.permute.xlu0 %849
    %851 = vrot.lane.b32.xlu0 %v333, 56
    %v852 = vpop.permute.xlu0 %851
    %v855 = vsel %vm334, %v850, 0.0
    %856 = vadd.xlane.f32.xlu0 %v855
    %v857 = vpop.xlane.xlu0 %856
    %v858 = vsel %vm334, %v852, 0.0
    %859 = vadd.xlane.f32.xlu0 %v858
    %v860 = vpop.xlane.xlu0 %859
    %v861 = vrsqrt.pop %v857
    %v862 = vmul.f32 %v861, %v857
    %v863 = vmul.f32 %v862, %v861
    %v864 = vmul.f32 0.5, %v863
    %v865 = vsub.f32 1.5, %v864
    %v866 = vmul.f32 %v861, %v865
    %vm867 = vweird.f32 %v857
    %vm868 = vweird.f32 %v861
    %vm869 = vmor %vm867, %vm868
    %v870 = vsel %vm869, %v861, %v866
    %v871 = vrsqrt.pop %v860
    %v872 = vmul.f32 %v871, %v860
    %v873 = vmul.f32 %v872, %v871
    %v874 = vmul.f32 0.5, %v873
    %v875 = vsub.f32 1.5, %v874
    %v876 = vmul.f32 %v871, %v875
    %vm877 = vweird.f32 %v860
    %vm878 = vweird.f32 %v871
    %vm879 = vmor %vm877, %vm878
    %v880 = vsel %vm879, %v871, %v876
    %v881 = vmul.f32 %v204, %v870
    %v882 = vmul.f32 %v207, %v880
    %885 = vrot.lane.b32.xlu0 %v881, 56
    %v886 = vpop.permute.xlu0 %885
    %887 = vrot.lane.b32.xlu0 %v882, 56
    %v888 = vpop.permute.xlu0 %887
    %v889 = vsel %vm334, %v886, 0
    %v891 = vsel %vm334, %v888, 0
    %893 = vmatpush.xpose.msra.mxu0 0.0
    %894 = vmatpush.xpose.msra.mxu0 0.0
    %895 = vmatpush.xpose.msra.mxu0 0.0
    %896 = vmatpush.xpose.msra.mxu0 0.0
    %897 = vmatpush.xpose.msra.mxu0 0.0
    %898 = vmatpush.xpose.msra.mxu0 0.0
    %899 = vmatpush.xpose.msra.mxu0 0.0
    %900 = vmatpush.xpose.msra.mxu0 0.0
    %901 = vmatpush.xpose.msra.mxu0 0.0
    %902 = vmatpush.xpose.msra.mxu0 0.0
    %903 = vmatpush.xpose.msra.mxu0 0.0
    %904 = vmatpush.xpose.msra.mxu0 0.0
    %905 = vmatpush.xpose.msra.mxu0 0.0
    %906 = vmatpush.xpose.msra.mxu0 0.0
    %907 = vmatpush.xpose.msra.mxu0 %v891
    %908 = vmatpush.xpose.msra.mxu0 %v889
    %909 = vmatmul.f32.gmra.mxu0 %v889
    %v910 = vpop.f32.mrf.mxu0
    %v911 = vadd.f32 0.0, %v910
    %912 = vmatmul.f32.gmra.mxu0 %v891
    %v913 = vpop.f32.mrf.mxu0
    %v914 = vadd.f32 0.0, %v913
    %915 = vdwg.mxu0
    %918 = vrot.lane.b32.xlu0 %v497, 64
    %v919 = vpop.permute.xlu0 %918
    %920 = vrot.lane.b32.xlu0 %v498, 64
    %v921 = vpop.permute.xlu0 %920
    %v922 = vsel %vm334, %v919, 0
    %v924 = vsel %vm334, %v921, 0
    %926 = vmatpush.xpose.msra.mxu0 0.0
    %927 = vmatpush.xpose.msra.mxu0 0.0
    %928 = vmatpush.xpose.msra.mxu0 0.0
    %929 = vmatpush.xpose.msra.mxu0 0.0
    %930 = vmatpush.xpose.msra.mxu0 0.0
    %931 = vmatpush.xpose.msra.mxu0 0.0
    %932 = vmatpush.xpose.msra.mxu0 0.0
    %933 = vmatpush.xpose.msra.mxu0 0.0
    %934 = vmatpush.xpose.msra.mxu0 0.0
    %935 = vmatpush.xpose.msra.mxu0 0.0
    %936 = vmatpush.xpose.msra.mxu0 0.0
    %937 = vmatpush.xpose.msra.mxu0 0.0
    %938 = vmatpush.xpose.msra.mxu0 0.0
    %939 = vmatpush.xpose.msra.mxu0 0.0
    %940 = vmatpush.xpose.msra.mxu0 %v924
    %941 = vmatpush.xpose.msra.mxu0 %v922
    %942 = vmatmul.f32.gmra.mxu0 %v922
    %v943 = vpop.f32.mrf.mxu0
    %v944 = vadd.f32 %v911, %v943
    %945 = vmatmul.f32.gmra.mxu0 %v924
    %v946 = vpop.f32.mrf.mxu0
    %v947 = vadd.f32 %v914, %v946
    %948 = vdwg.mxu0
    %951 = vrot.lane.b32.xlu0 %v745, 120
    %v952 = vpop.permute.xlu0 %951
    %953 = vrot.lane.b32.xlu0 %v746, 120
    %v954 = vpop.permute.xlu0 %953
    %957 = vrot.lane.b32.xlu0 %v779, 88
    %v958 = vpop.permute.xlu0 %957
    %959 = vrot.lane.b32.xlu0 %v780, 88
    %v960 = vpop.permute.xlu0 %959
    %v961 = vsel %vm334, %v952, 0
    %v963 = vsel %vm334, %v954, 0
    %v965 = vsel %vm334, %v958, 0
    %v967 = vsel %vm334, %v960, 0
    %969 = vmatpush.xpose.msra.mxu0 0.0
    %970 = vmatpush.xpose.msra.mxu0 0.0
    %971 = vmatpush.xpose.msra.mxu0 0.0
    %972 = vmatpush.xpose.msra.mxu0 0.0
    %973 = vmatpush.xpose.msra.mxu0 0.0
    %974 = vmatpush.xpose.msra.mxu0 0.0
    %975 = vmatpush.xpose.msra.mxu0 0.0
    %976 = vmatpush.xpose.msra.mxu0 0.0
    %977 = vmatpush.xpose.msra.mxu0 0.0
    %978 = vmatpush.xpose.msra.mxu0 0.0
    %979 = vmatpush.xpose.msra.mxu0 0.0
    %980 = vmatpush.xpose.msra.mxu0 0.0
    %981 = vmatpush.xpose.msra.mxu0 0.0
    %982 = vmatpush.xpose.msra.mxu0 0.0
    %983 = vmatpush.xpose.msra.mxu0 %v967
    %984 = vmatpush.xpose.msra.mxu0 %v965
    %985 = vmatmul.f32.gmra.mxu0 %v961
    %v986 = vpop.f32.mrf.mxu0
    %v987 = vadd.f32 0.0, %v986
    %988 = vmatmul.f32.gmra.mxu0 %v963
    %v989 = vpop.f32.mrf.mxu0
    %v990 = vadd.f32 0.0, %v989
    %991 = vdwg.mxu0
    %v992 = vmul.f32 %v987, 25.0
    %v993 = vmul.f32 %v990, 25.0
    %v994 = vsel %vm540, %v992, -inf
    %995 = vmax.xlane.f32.xlu0 %v994
    %v996 = vpop.xlane.xlu0 %995
    %v997 = vsel %vm540, %v993, -inf
    %998 = vmax.xlane.f32.xlu0 %v997
    %v999 = vpop.xlane.xlu0 %998
    %v1000 = vsub.f32 %v992, %v996
    %v1001 = vsub.f32 %v993, %v999
    %v1002 = vmul.f32 %v1000, 1.442695
    %v1003 = vpow.pop %v1002
    %v1004 = vmul.f32 %v1001, 1.442695
    %v1005 = vpow.pop %v1004
    %v1006 = vsel %vm540, %v1003, 0.0
    %1007 = vadd.xlane.f32.xlu0 %v1006
    %v1008 = vpop.xlane.xlu0 %1007
    %v1009 = vsel %vm540, %v1005, 0.0
    %1010 = vadd.xlane.f32.xlu0 %v1009
    %v1011 = vpop.xlane.xlu0 %1010
    %v1012 = vrcp.pop %v1008
    %v1013 = vrcp.pop %v1011
    %v1014 = vmul.f32 %v1003, %v1012
    %v1015 = vmul.f32 %v1005, %v1013
    %1018 = vrot.lane.b32.xlu0 %v813, 120
    %v1019 = vpop.permute.xlu0 %1018
    %1020 = vrot.lane.b32.xlu0 %v814, 120
    %v1021 = vpop.permute.xlu0 %1020
    %1024 = vrot.lane.b32.xlu0 %v847, 88
    %v1025 = vpop.permute.xlu0 %1024
    %1026 = vrot.lane.b32.xlu0 %v848, 88
    %v1027 = vpop.permute.xlu0 %1026
    %v1028 = vsel %vm334, %v1019, 0
    %v1030 = vsel %vm334, %v1021, 0
    %v1032 = vsel %vm334, %v1025, 0
    %v1034 = vsel %vm334, %v1027, 0
    %1036 = vmatpush.xpose.msra.mxu0 0.0
    %1037 = vmatpush.xpose.msra.mxu0 0.0
    %1038 = vmatpush.xpose.msra.mxu0 0.0
    %1039 = vmatpush.xpose.msra.mxu0 0.0
    %1040 = vmatpush.xpose.msra.mxu0 0.0
    %1041 = vmatpush.xpose.msra.mxu0 0.0
    %1042 = vmatpush.xpose.msra.mxu0 0.0
    %1043 = vmatpush.xpose.msra.mxu0 0.0
    %1044 = vmatpush.xpose.msra.mxu0 0.0
    %1045 = vmatpush.xpose.msra.mxu0 0.0
    %1046 = vmatpush.xpose.msra.mxu0 0.0
    %1047 = vmatpush.xpose.msra.mxu0 0.0
    %1048 = vmatpush.xpose.msra.mxu0 0.0
    %1049 = vmatpush.xpose.msra.mxu0 0.0
    %1050 = vmatpush.xpose.msra.mxu0 %v1034
    %1051 = vmatpush.xpose.msra.mxu0 %v1032
    %1052 = vmatmul.f32.gmra.mxu0 %v1028
    %v1053 = vpop.f32.mrf.mxu0
    %v1054 = vadd.f32 0.0, %v1053
    %1055 = vmatmul.f32.gmra.mxu0 %v1030
    %v1056 = vpop.f32.mrf.mxu0
    %v1057 = vadd.f32 0.0, %v1056
    %1058 = vdwg.mxu0
    %v1059 = vmul.f32 %v1054, 25.0
    %v1060 = vmul.f32 %v1057, 25.0
    %v1061 = vsel %vm540, %v1059, -inf
    %1062 = vmax.xlane.f32.xlu0 %v1061
    %v1063 = vpop.xlane.xlu0 %1062
    %v1064 = vsel %vm540, %v1060, -inf
    %1065 = vmax.xlane.f32.xlu0 %v1064
    %v1066 = vpop.xlane.xlu0 %1065
    %v1067 = vsub.f32 %v1059, %v1063
    %v1068 = vsub.f32 %v1060, %v1066
    %v1069 = vmul.f32 %v1067, 1.442695
    %v1070 = vpow.pop %v1069
    %v1071 = vmul.f32 %v1068, 1.442695
    %v1072 = vpow.pop %v1071
    %v1073 = vsel %vm540, %v1070, 0.0
    %1074 = vadd.xlane.f32.xlu0 %v1073
    %v1075 = vpop.xlane.xlu0 %1074
    %v1076 = vsel %vm540, %v1072, 0.0
    %1077 = vadd.xlane.f32.xlu0 %v1076
    %v1078 = vpop.xlane.xlu0 %1077
    %v1079 = vrcp.pop %v1075
    %v1080 = vrcp.pop %v1078
    %v1081 = vmul.f32 %v1070, %v1079
    %v1082 = vmul.f32 %v1072, %v1080
    %v1083 = vadd.f32 %v1014, %v1081
    %v1084 = vadd.f32 %v1015, %v1082
    %v1085 = vmul.f32 %v1083, 0.5
    %v1086 = vmul.f32 %v1084, 0.5
    %v1087 = vadd.f32 %v630, %v1085
    %v1088 = vadd.f32 %v631, %v1086
    %v1089 = vpack.c.bf16 %v1086, %v1085
    %1090 = vrot.lane.b32.xlu0 %v258, 56
    %v1091 = vpop.permute.xlu0 %1090
    %v1094 = vsel %vm540, %v1089, 0
    %1096 = vmatpush.bf16.msra.mxu0 0
    %1097 = vmatpush.bf16.msra.mxu0 0
    %1098 = vmatpush.bf16.msra.mxu0 0
    %1099 = vmatpush.bf16.msra.mxu0 0
    %1100 = vmatpush.bf16.msra.mxu0 0
    %1101 = vmatpush.bf16.msra.mxu0 0
    %1102 = vmatpush.bf16.msra.mxu0 0
    %1103 = vmatpush.bf16.msra.mxu0 %v1091
    %1104 = vmatmul.bf16.gmra.mxu0 %v1094
    %v1105 = vpop.f32.mrf.mxu0
    %v1106 = vadd.f32 0.0, %v1105
    %v1107 = vpop.f32.mrf.mxu0
    %v1108 = vadd.f32 0.0, %v1107
    %1109 = vdwg.mxu0
    %v1110 = vpack.c.bf16 %v1108, %v1106
    %v1112 = vsel %vm334, %v1110, 0
    %v1115 = vsel %vm655, %v243, 0
    %1117 = vmatpush.bf16.msra.mxu0 0
    %1118 = vmatpush.bf16.msra.mxu0 0
    %1119 = vmatpush.bf16.msra.mxu0 0
    %1120 = vmatpush.bf16.msra.mxu0 0
    %1121 = vmatpush.bf16.msra.mxu0 0
    %1122 = vmatpush.bf16.msra.mxu0 0
    %1123 = vmatpush.bf16.msra.mxu0 0
    %1124 = vmatpush.bf16.msra.mxu0 %v1115
    %1125 = vmatmul.bf16.gmra.mxu0 %v1112
    %v1126 = vpop.f32.mrf.mxu0
    %v1127 = vadd.f32 0.0, %v1126
    %v1128 = vpop.f32.mrf.mxu0
    %v1129 = vadd.f32 0.0, %v1128
    %1130 = vdwg.mxu0
    %v1131 = vadd.f32 %v673, %v1127
    %v1132 = vadd.f32 %v674, %v1129
    %1133 = vrot.lane.b32.xlu0 %v295, 56
    %v1134 = vpop.permute.xlu0 %1133
    %1136 = vmatpush.bf16.msra.mxu0 0
    %1137 = vmatpush.bf16.msra.mxu0 0
    %1138 = vmatpush.bf16.msra.mxu0 0
    %1139 = vmatpush.bf16.msra.mxu0 0
    %1140 = vmatpush.bf16.msra.mxu0 0
    %1141 = vmatpush.bf16.msra.mxu0 0
    %1142 = vmatpush.bf16.msra.mxu0 0
    %1143 = vmatpush.bf16.msra.mxu0 %v1134
    %1144 = vmatmul.bf16.gmra.mxu0 %v1094
    %v1145 = vpop.f32.mrf.mxu0
    %v1146 = vadd.f32 0.0, %v1145
    %v1147 = vpop.f32.mrf.mxu0
    %v1148 = vadd.f32 0.0, %v1147
    %1149 = vdwg.mxu0
    %v1150 = vpack.c.bf16 %v1148, %v1146
    %v1152 = vsel %vm334, %v1150, 0
    %v1155 = vsel %vm655, %v251, 0
    %1157 = vmatpush.bf16.msra.mxu0 0
    %1158 = vmatpush.bf16.msra.mxu0 0
    %1159 = vmatpush.bf16.msra.mxu0 0
    %1160 = vmatpush.bf16.msra.mxu0 0
    %1161 = vmatpush.bf16.msra.mxu0 0
    %1162 = vmatpush.bf16.msra.mxu0 0
    %1163 = vmatpush.bf16.msra.mxu0 0
    %1164 = vmatpush.bf16.msra.mxu0 %v1155
    %1165 = vmatmul.bf16.gmra.mxu0 %v1152
    %v1166 = vpop.f32.mrf.mxu0
    %v1167 = vadd.f32 0.0, %v1166
    %v1168 = vpop.f32.mrf.mxu0
    %v1169 = vadd.f32 0.0, %v1168
    %1170 = vdwg.mxu0
    %v1171 = vadd.f32 %v711, %v1167
    %v1172 = vadd.f32 %v712, %v1169
    %1173 = vrot.lane.b32.xlu0 %v332, 112
    %v1174 = vpop.permute.xlu0 %1173
    %1175 = vrot.lane.b32.xlu0 %v333, 112
    %v1176 = vpop.permute.xlu0 %1175
    %v1179 = vsel %vm334, %v1174, 0.0
    %1180 = vadd.xlane.f32.xlu0 %v1179
    %v1181 = vpop.xlane.xlu0 %1180
    %v1182 = vsel %vm334, %v1176, 0.0
    %1183 = vadd.xlane.f32.xlu0 %v1182
    %v1184 = vpop.xlane.xlu0 %1183
    %v1185 = vrsqrt.pop %v1181
    %v1186 = vmul.f32 %v1185, %v1181
    %v1187 = vmul.f32 %v1186, %v1185
    %v1188 = vmul.f32 0.5, %v1187
    %v1189 = vsub.f32 1.5, %v1188
    %v1190 = vmul.f32 %v1185, %v1189
    %vm1191 = vweird.f32 %v1181
    %vm1192 = vweird.f32 %v1185
    %vm1193 = vmor %vm1191, %vm1192
    %v1194 = vsel %vm1193, %v1185, %v1190
    %v1195 = vrsqrt.pop %v1184
    %v1196 = vmul.f32 %v1195, %v1184
    %v1197 = vmul.f32 %v1196, %v1195
    %v1198 = vmul.f32 0.5, %v1197
    %v1199 = vsub.f32 1.5, %v1198
    %v1200 = vmul.f32 %v1195, %v1199
    %vm1201 = vweird.f32 %v1184
    %vm1202 = vweird.f32 %v1195
    %vm1203 = vmor %vm1201, %vm1202
    %v1204 = vsel %vm1203, %v1195, %v1200
    %v1205 = vmul.f32 %v204, %v1194
    %v1206 = vmul.f32 %v207, %v1204
    %1207 = vrot.lane.b32.xlu0 %v332, 80
    %v1208 = vpop.permute.xlu0 %1207
    %1209 = vrot.lane.b32.xlu0 %v333, 80
    %v1210 = vpop.permute.xlu0 %1209
    %v1213 = vsel %vm334, %v1208, 0.0
    %1214 = vadd.xlane.f32.xlu0 %v1213
    %v1215 = vpop.xlane.xlu0 %1214
    %v1216 = vsel %vm334, %v1210, 0.0
    %1217 = vadd.xlane.f32.xlu0 %v1216
    %v1218 = vpop.xlane.xlu0 %1217
    %v1219 = vrsqrt.pop %v1215
    %v1220 = vmul.f32 %v1219, %v1215
    %v1221 = vmul.f32 %v1220, %v1219
    %v1222 = vmul.f32 0.5, %v1221
    %v1223 = vsub.f32 1.5, %v1222
    %v1224 = vmul.f32 %v1219, %v1223
    %vm1225 = vweird.f32 %v1215
    %vm1226 = vweird.f32 %v1219
    %vm1227 = vmor %vm1225, %vm1226
    %v1228 = vsel %vm1227, %v1219, %v1224
    %v1229 = vrsqrt.pop %v1218
    %v1230 = vmul.f32 %v1229, %v1218
    %v1231 = vmul.f32 %v1230, %v1229
    %v1232 = vmul.f32 0.5, %v1231
    %v1233 = vsub.f32 1.5, %v1232
    %v1234 = vmul.f32 %v1229, %v1233
    %vm1235 = vweird.f32 %v1218
    %vm1236 = vweird.f32 %v1229
    %vm1237 = vmor %vm1235, %vm1236
    %v1238 = vsel %vm1237, %v1229, %v1234
    %v1239 = vmul.f32 %v204, %v1228
    %v1240 = vmul.f32 %v207, %v1238
    %1241 = vrot.lane.b32.xlu0 %v399, 112
    %v1242 = vpop.permute.xlu0 %1241
    %1243 = vrot.lane.b32.xlu0 %v400, 112
    %v1244 = vpop.permute.xlu0 %1243
    %v1247 = vsel %vm334, %v1242, 0.0
    %1248 = vadd.xlane.f32.xlu0 %v1247
    %v1249 = vpop.xlane.xlu0 %1248
    %v1250 = vsel %vm334, %v1244, 0.0
    %1251 = vadd.xlane.f32.xlu0 %v1250
    %v1252 = vpop.xlane.xlu0 %1251
    %v1253 = vrsqrt.pop %v1249
    %v1254 = vmul.f32 %v1253, %v1249
    %v1255 = vmul.f32 %v1254, %v1253
    %v1256 = vmul.f32 0.5, %v1255
    %v1257 = vsub.f32 1.5, %v1256
    %v1258 = vmul.f32 %v1253, %v1257
    %vm1259 = vweird.f32 %v1249
    %vm1260 = vweird.f32 %v1253
    %vm1261 = vmor %vm1259, %vm1260
    %v1262 = vsel %vm1261, %v1253, %v1258
    %v1263 = vrsqrt.pop %v1252
    %v1264 = vmul.f32 %v1263, %v1252
    %v1265 = vmul.f32 %v1264, %v1263
    %v1266 = vmul.f32 0.5, %v1265
    %v1267 = vsub.f32 1.5, %v1266
    %v1268 = vmul.f32 %v1263, %v1267
    %vm1269 = vweird.f32 %v1252
    %vm1270 = vweird.f32 %v1263
    %vm1271 = vmor %vm1269, %vm1270
    %v1272 = vsel %vm1271, %v1263, %v1268
    %v1273 = vmul.f32 %v237, %v1262
    %v1274 = vmul.f32 %v240, %v1272
    %1275 = vrot.lane.b32.xlu0 %v399, 80
    %v1276 = vpop.permute.xlu0 %1275
    %1277 = vrot.lane.b32.xlu0 %v400, 80
    %v1278 = vpop.permute.xlu0 %1277
    %v1281 = vsel %vm334, %v1276, 0.0
    %1282 = vadd.xlane.f32.xlu0 %v1281
    %v1283 = vpop.xlane.xlu0 %1282
    %v1284 = vsel %vm334, %v1278, 0.0
    %1285 = vadd.xlane.f32.xlu0 %v1284
    %v1286 = vpop.xlane.xlu0 %1285
    %v1287 = vrsqrt.pop %v1283
    %v1288 = vmul.f32 %v1287, %v1283
    %v1289 = vmul.f32 %v1288, %v1287
    %v1290 = vmul.f32 0.5, %v1289
    %v1291 = vsub.f32 1.5, %v1290
    %v1292 = vmul.f32 %v1287, %v1291
    %vm1293 = vweird.f32 %v1283
    %vm1294 = vweird.f32 %v1287
    %vm1295 = vmor %vm1293, %vm1294
    %v1296 = vsel %vm1295, %v1287, %v1292
    %v1297 = vrsqrt.pop %v1286
    %v1298 = vmul.f32 %v1297, %v1286
    %v1299 = vmul.f32 %v1298, %v1297
    %v1300 = vmul.f32 0.5, %v1299
    %v1301 = vsub.f32 1.5, %v1300
    %v1302 = vmul.f32 %v1297, %v1301
    %vm1303 = vweird.f32 %v1286
    %vm1304 = vweird.f32 %v1297
    %vm1305 = vmor %vm1303, %vm1304
    %v1306 = vsel %vm1305, %v1297, %v1302
    %v1307 = vmul.f32 %v237, %v1296
    %v1308 = vmul.f32 %v240, %v1306
    %1309 = vrot.lane.b32.xlu0 %v332, 48
    %v1310 = vpop.permute.xlu0 %1309
    %1311 = vrot.lane.b32.xlu0 %v333, 48
    %v1312 = vpop.permute.xlu0 %1311
    %v1315 = vsel %vm334, %v1310, 0.0
    %1316 = vadd.xlane.f32.xlu0 %v1315
    %v1317 = vpop.xlane.xlu0 %1316
    %v1318 = vsel %vm334, %v1312, 0.0
    %1319 = vadd.xlane.f32.xlu0 %v1318
    %v1320 = vpop.xlane.xlu0 %1319
    %v1321 = vrsqrt.pop %v1317
    %v1322 = vmul.f32 %v1321, %v1317
    %v1323 = vmul.f32 %v1322, %v1321
    %v1324 = vmul.f32 0.5, %v1323
    %v1325 = vsub.f32 1.5, %v1324
    %v1326 = vmul.f32 %v1321, %v1325
    %vm1327 = vweird.f32 %v1317
    %vm1328 = vweird.f32 %v1321
    %vm1329 = vmor %vm1327, %vm1328
    %v1330 = vsel %vm1329, %v1321, %v1326
    %v1331 = vrsqrt.pop %v1320
    %v1332 = vmul.f32 %v1331, %v1320
    %v1333 = vmul.f32 %v1332, %v1331
    %v1334 = vmul.f32 0.5, %v1333
    %v1335 = vsub.f32 1.5, %v1334
    %v1336 = vmul.f32 %v1331, %v1335
    %vm1337 = vweird.f32 %v1320
    %vm1338 = vweird.f32 %v1331
    %vm1339 = vmor %vm1337, %vm1338
    %v1340 = vsel %vm1339, %v1331, %v1336
    %v1341 = vmul.f32 %v204, %v1330
    %v1342 = vmul.f32 %v207, %v1340
    %1345 = vrot.lane.b32.xlu0 %v1341, 48
    %v1346 = vpop.permute.xlu0 %1345
    %1347 = vrot.lane.b32.xlu0 %v1342, 48
    %v1348 = vpop.permute.xlu0 %1347
    %v1349 = vsel %vm334, %v1346, 0
    %v1351 = vsel %vm334, %v1348, 0
    %1353 = vmatpush.xpose.msra.mxu0 0.0
    %1354 = vmatpush.xpose.msra.mxu0 0.0
    %1355 = vmatpush.xpose.msra.mxu0 0.0
    %1356 = vmatpush.xpose.msra.mxu0 0.0
    %1357 = vmatpush.xpose.msra.mxu0 0.0
    %1358 = vmatpush.xpose.msra.mxu0 0.0
    %1359 = vmatpush.xpose.msra.mxu0 0.0
    %1360 = vmatpush.xpose.msra.mxu0 0.0
    %1361 = vmatpush.xpose.msra.mxu0 0.0
    %1362 = vmatpush.xpose.msra.mxu0 0.0
    %1363 = vmatpush.xpose.msra.mxu0 0.0
    %1364 = vmatpush.xpose.msra.mxu0 0.0
    %1365 = vmatpush.xpose.msra.mxu0 0.0
    %1366 = vmatpush.xpose.msra.mxu0 0.0
    %1367 = vmatpush.xpose.msra.mxu0 %v1351
    %1368 = vmatpush.xpose.msra.mxu0 %v1349
    %1369 = vmatmul.f32.gmra.mxu0 %v1349
    %v1370 = vpop.f32.mrf.mxu0
    %v1371 = vadd.f32 0.0, %v1370
    %1372 = vmatmul.f32.gmra.mxu0 %v1351
    %v1373 = vpop.f32.mrf.mxu0
    %v1374 = vadd.f32 0.0, %v1373
    %1375 = vdwg.mxu0
    %v1376 = vadd.f32 %v944, %v1371
    %v1377 = vadd.f32 %v947, %v1374
    %1380 = vrot.lane.b32.xlu0 %v1205, 112
    %v1381 = vpop.permute.xlu0 %1380
    %1382 = vrot.lane.b32.xlu0 %v1206, 112
    %v1383 = vpop.permute.xlu0 %1382
    %1386 = vrot.lane.b32.xlu0 %v1239, 80
    %v1387 = vpop.permute.xlu0 %1386
    %1388 = vrot.lane.b32.xlu0 %v1240, 80
    %v1389 = vpop.permute.xlu0 %1388
    %v1390 = vsel %vm334, %v1381, 0
    %v1392 = vsel %vm334, %v1383, 0
    %v1394 = vsel %vm334, %v1387, 0
    %v1396 = vsel %vm334, %v1389, 0
    %1398 = vmatpush.xpose.msra.mxu0 0.0
    %1399 = vmatpush.xpose.msra.mxu0 0.0
    %1400 = vmatpush.xpose.msra.mxu0 0.0
    %1401 = vmatpush.xpose.msra.mxu0 0.0
    %1402 = vmatpush.xpose.msra.mxu0 0.0
    %1403 = vmatpush.xpose.msra.mxu0 0.0
    %1404 = vmatpush.xpose.msra.mxu0 0.0
    %1405 = vmatpush.xpose.msra.mxu0 0.0
    %1406 = vmatpush.xpose.msra.mxu0 0.0
    %1407 = vmatpush.xpose.msra.mxu0 0.0
    %1408 = vmatpush.xpose.msra.mxu0 0.0
    %1409 = vmatpush.xpose.msra.mxu0 0.0
    %1410 = vmatpush.xpose.msra.mxu0 0.0
    %1411 = vmatpush.xpose.msra.mxu0 0.0
    %1412 = vmatpush.xpose.msra.mxu0 %v1396
    %1413 = vmatpush.xpose.msra.mxu0 %v1394
    %1414 = vmatmul.f32.gmra.mxu0 %v1390
    %v1415 = vpop.f32.mrf.mxu0
    %v1416 = vadd.f32 0.0, %v1415
    %1417 = vmatmul.f32.gmra.mxu0 %v1392
    %v1418 = vpop.f32.mrf.mxu0
    %v1419 = vadd.f32 0.0, %v1418
    %1420 = vdwg.mxu0
    %v1421 = vmul.f32 %v1416, 25.0
    %v1422 = vmul.f32 %v1419, 25.0
    %v1423 = vsel %vm540, %v1421, -inf
    %1424 = vmax.xlane.f32.xlu0 %v1423
    %v1425 = vpop.xlane.xlu0 %1424
    %v1426 = vsel %vm540, %v1422, -inf
    %1427 = vmax.xlane.f32.xlu0 %v1426
    %v1428 = vpop.xlane.xlu0 %1427
    %v1429 = vsub.f32 %v1421, %v1425
    %v1430 = vsub.f32 %v1422, %v1428
    %v1431 = vmul.f32 %v1429, 1.442695
    %v1432 = vpow.pop %v1431
    %v1433 = vmul.f32 %v1430, 1.442695
    %v1434 = vpow.pop %v1433
    %v1435 = vsel %vm540, %v1432, 0.0
    %1436 = vadd.xlane.f32.xlu0 %v1435
    %v1437 = vpop.xlane.xlu0 %1436
    %v1438 = vsel %vm540, %v1434, 0.0
    %1439 = vadd.xlane.f32.xlu0 %v1438
    %v1440 = vpop.xlane.xlu0 %1439
    %v1441 = vrcp.pop %v1437
    %v1442 = vrcp.pop %v1440
    %v1443 = vmul.f32 %v1432, %v1441
    %v1444 = vmul.f32 %v1434, %v1442
    %1447 = vrot.lane.b32.xlu0 %v1273, 112
    %v1448 = vpop.permute.xlu0 %1447
    %1449 = vrot.lane.b32.xlu0 %v1274, 112
    %v1450 = vpop.permute.xlu0 %1449
    %1453 = vrot.lane.b32.xlu0 %v1307, 80
    %v1454 = vpop.permute.xlu0 %1453
    %1455 = vrot.lane.b32.xlu0 %v1308, 80
    %v1456 = vpop.permute.xlu0 %1455
    %v1457 = vsel %vm334, %v1448, 0
    %v1459 = vsel %vm334, %v1450, 0
    %v1461 = vsel %vm334, %v1454, 0
    %v1463 = vsel %vm334, %v1456, 0
    %1465 = vmatpush.xpose.msra.mxu0 0.0
    %1466 = vmatpush.xpose.msra.mxu0 0.0
    %1467 = vmatpush.xpose.msra.mxu0 0.0
    %1468 = vmatpush.xpose.msra.mxu0 0.0
    %1469 = vmatpush.xpose.msra.mxu0 0.0
    %1470 = vmatpush.xpose.msra.mxu0 0.0
    %1471 = vmatpush.xpose.msra.mxu0 0.0
    %1472 = vmatpush.xpose.msra.mxu0 0.0
    %1473 = vmatpush.xpose.msra.mxu0 0.0
    %1474 = vmatpush.xpose.msra.mxu0 0.0
    %1475 = vmatpush.xpose.msra.mxu0 0.0
    %1476 = vmatpush.xpose.msra.mxu0 0.0
    %1477 = vmatpush.xpose.msra.mxu0 0.0
    %1478 = vmatpush.xpose.msra.mxu0 0.0
    %1479 = vmatpush.xpose.msra.mxu0 %v1463
    %1480 = vmatpush.xpose.msra.mxu0 %v1461
    %1481 = vmatmul.f32.gmra.mxu0 %v1457
    %v1482 = vpop.f32.mrf.mxu0
    %v1483 = vadd.f32 0.0, %v1482
    %1484 = vmatmul.f32.gmra.mxu0 %v1459
    %v1485 = vpop.f32.mrf.mxu0
    %v1486 = vadd.f32 0.0, %v1485
    %1487 = vdwg.mxu0
    %v1488 = vmul.f32 %v1483, 25.0
    %v1489 = vmul.f32 %v1486, 25.0
    %v1490 = vsel %vm540, %v1488, -inf
    %1491 = vmax.xlane.f32.xlu0 %v1490
    %v1492 = vpop.xlane.xlu0 %1491
    %v1493 = vsel %vm540, %v1489, -inf
    %1494 = vmax.xlane.f32.xlu0 %v1493
    %v1495 = vpop.xlane.xlu0 %1494
    %v1496 = vsub.f32 %v1488, %v1492
    %v1497 = vsub.f32 %v1489, %v1495
    %v1498 = vmul.f32 %v1496, 1.442695
    %v1499 = vpow.pop %v1498
    %v1500 = vmul.f32 %v1497, 1.442695
    %v1501 = vpow.pop %v1500
    %v1502 = vsel %vm540, %v1499, 0.0
    %1503 = vadd.xlane.f32.xlu0 %v1502
    %v1504 = vpop.xlane.xlu0 %1503
    %v1505 = vsel %vm540, %v1501, 0.0
    %1506 = vadd.xlane.f32.xlu0 %v1505
    %v1507 = vpop.xlane.xlu0 %1506
    %v1508 = vrcp.pop %v1504
    %v1509 = vrcp.pop %v1507
    %v1510 = vmul.f32 %v1499, %v1508
    %v1511 = vmul.f32 %v1501, %v1509
    %v1512 = vadd.f32 %v1443, %v1510
    %v1513 = vadd.f32 %v1444, %v1511
    %v1514 = vmul.f32 %v1512, 0.5
    %v1515 = vmul.f32 %v1513, 0.5
    %v1516 = vadd.f32 %v1087, %v1514
    %v1517 = vadd.f32 %v1088, %v1515
    %v1518 = vpack.c.bf16 %v1515, %v1514
    %1519 = vrot.lane.b32.xlu0 %v258, 48
    %v1520 = vpop.permute.xlu0 %1519
    %v1523 = vsel %vm540, %v1518, 0
    %1525 = vmatpush.bf16.msra.mxu0 0
    %1526 = vmatpush.bf16.msra.mxu0 0
    %1527 = vmatpush.bf16.msra.mxu0 0
    %1528 = vmatpush.bf16.msra.mxu0 0
    %1529 = vmatpush.bf16.msra.mxu0 0
    %1530 = vmatpush.bf16.msra.mxu0 0
    %1531 = vmatpush.bf16.msra.mxu0 0
    %1532 = vmatpush.bf16.msra.mxu0 %v1520
    %1533 = vmatmul.bf16.gmra.mxu0 %v1523
    %v1534 = vpop.f32.mrf.mxu0
    %v1535 = vadd.f32 0.0, %v1534
    %v1536 = vpop.f32.mrf.mxu0
    %v1537 = vadd.f32 0.0, %v1536
    %1538 = vdwg.mxu0
    %v1539 = vpack.c.bf16 %v1537, %v1535
    %v1541 = vsel %vm334, %v1539, 0
    %v1544 = vsel %vm655, %v244, 0
    %1546 = vmatpush.bf16.msra.mxu0 0
    %1547 = vmatpush.bf16.msra.mxu0 0
    %1548 = vmatpush.bf16.msra.mxu0 0
    %1549 = vmatpush.bf16.msra.mxu0 0
    %1550 = vmatpush.bf16.msra.mxu0 0
    %1551 = vmatpush.bf16.msra.mxu0 0
    %1552 = vmatpush.bf16.msra.mxu0 0
    %1553 = vmatpush.bf16.msra.mxu0 %v1544
    %1554 = vmatmul.bf16.gmra.mxu0 %v1541
    %v1555 = vpop.f32.mrf.mxu0
    %v1556 = vadd.f32 0.0, %v1555
    %v1557 = vpop.f32.mrf.mxu0
    %v1558 = vadd.f32 0.0, %v1557
    %1559 = vdwg.mxu0
    %v1560 = vadd.f32 %v1131, %v1556
    %v1561 = vadd.f32 %v1132, %v1558
    %1562 = vrot.lane.b32.xlu0 %v295, 48
    %v1563 = vpop.permute.xlu0 %1562
    %1565 = vmatpush.bf16.msra.mxu0 0
    %1566 = vmatpush.bf16.msra.mxu0 0
    %1567 = vmatpush.bf16.msra.mxu0 0
    %1568 = vmatpush.bf16.msra.mxu0 0
    %1569 = vmatpush.bf16.msra.mxu0 0
    %1570 = vmatpush.bf16.msra.mxu0 0
    %1571 = vmatpush.bf16.msra.mxu0 0
    %1572 = vmatpush.bf16.msra.mxu0 %v1563
    %1573 = vmatmul.bf16.gmra.mxu0 %v1523
    %v1574 = vpop.f32.mrf.mxu0
    %v1575 = vadd.f32 0.0, %v1574
    %v1576 = vpop.f32.mrf.mxu0
    %v1577 = vadd.f32 0.0, %v1576
    %1578 = vdwg.mxu0
    %v1579 = vpack.c.bf16 %v1577, %v1575
    %v1581 = vsel %vm334, %v1579, 0
    %v1584 = vsel %vm655, %v252, 0
    %1586 = vmatpush.bf16.msra.mxu0 0
    %1587 = vmatpush.bf16.msra.mxu0 0
    %1588 = vmatpush.bf16.msra.mxu0 0
    %1589 = vmatpush.bf16.msra.mxu0 0
    %1590 = vmatpush.bf16.msra.mxu0 0
    %1591 = vmatpush.bf16.msra.mxu0 0
    %1592 = vmatpush.bf16.msra.mxu0 0
    %1593 = vmatpush.bf16.msra.mxu0 %v1584
    %1594 = vmatmul.bf16.gmra.mxu0 %v1581
    %v1595 = vpop.f32.mrf.mxu0
    %v1596 = vadd.f32 0.0, %v1595
    %v1597 = vpop.f32.mrf.mxu0
    %v1598 = vadd.f32 0.0, %v1597
    %1599 = vdwg.mxu0
    %v1600 = vadd.f32 %v1171, %v1596
    %v1601 = vadd.f32 %v1172, %v1598
    %1602 = vrot.lane.b32.xlu0 %v332, 104
    %v1603 = vpop.permute.xlu0 %1602
    %1604 = vrot.lane.b32.xlu0 %v333, 104
    %v1605 = vpop.permute.xlu0 %1604
    %v1608 = vsel %vm334, %v1603, 0.0
    %1609 = vadd.xlane.f32.xlu0 %v1608
    %v1610 = vpop.xlane.xlu0 %1609
    %v1611 = vsel %vm334, %v1605, 0.0
    %1612 = vadd.xlane.f32.xlu0 %v1611
    %v1613 = vpop.xlane.xlu0 %1612
    %v1614 = vrsqrt.pop %v1610
    %v1615 = vmul.f32 %v1614, %v1610
    %v1616 = vmul.f32 %v1615, %v1614
    %v1617 = vmul.f32 0.5, %v1616
    %v1618 = vsub.f32 1.5, %v1617
    %v1619 = vmul.f32 %v1614, %v1618
    %vm1620 = vweird.f32 %v1610
    %vm1621 = vweird.f32 %v1614
    %vm1622 = vmor %vm1620, %vm1621
    %v1623 = vsel %vm1622, %v1614, %v1619
    %v1624 = vrsqrt.pop %v1613
    %v1625 = vmul.f32 %v1624, %v1613
    %v1626 = vmul.f32 %v1625, %v1624
    %v1627 = vmul.f32 0.5, %v1626
    %v1628 = vsub.f32 1.5, %v1627
    %v1629 = vmul.f32 %v1624, %v1628
    %vm1630 = vweird.f32 %v1613
    %vm1631 = vweird.f32 %v1624
    %vm1632 = vmor %vm1630, %vm1631
    %v1633 = vsel %vm1632, %v1624, %v1629
    %v1634 = vmul.f32 %v204, %v1623
    %v1635 = vmul.f32 %v207, %v1633
    %1636 = vrot.lane.b32.xlu0 %v332, 72
    %v1637 = vpop.permute.xlu0 %1636
    %1638 = vrot.lane.b32.xlu0 %v333, 72
    %v1639 = vpop.permute.xlu0 %1638
    %v1642 = vsel %vm334, %v1637, 0.0
    %1643 = vadd.xlane.f32.xlu0 %v1642
    %v1644 = vpop.xlane.xlu0 %1643
    %v1645 = vsel %vm334, %v1639, 0.0
    %1646 = vadd.xlane.f32.xlu0 %v1645
    %v1647 = vpop.xlane.xlu0 %1646
    %v1648 = vrsqrt.pop %v1644
    %v1649 = vmul.f32 %v1648, %v1644
    %v1650 = vmul.f32 %v1649, %v1648
    %v1651 = vmul.f32 0.5, %v1650
    %v1652 = vsub.f32 1.5, %v1651
    %v1653 = vmul.f32 %v1648, %v1652
    %vm1654 = vweird.f32 %v1644
    %vm1655 = vweird.f32 %v1648
    %vm1656 = vmor %vm1654, %vm1655
    %v1657 = vsel %vm1656, %v1648, %v1653
    %v1658 = vrsqrt.pop %v1647
    %v1659 = vmul.f32 %v1658, %v1647
    %v1660 = vmul.f32 %v1659, %v1658
    %v1661 = vmul.f32 0.5, %v1660
    %v1662 = vsub.f32 1.5, %v1661
    %v1663 = vmul.f32 %v1658, %v1662
    %vm1664 = vweird.f32 %v1647
    %vm1665 = vweird.f32 %v1658
    %vm1666 = vmor %vm1664, %vm1665
    %v1667 = vsel %vm1666, %v1658, %v1663
    %v1668 = vmul.f32 %v204, %v1657
    %v1669 = vmul.f32 %v207, %v1667
    %1670 = vrot.lane.b32.xlu0 %v399, 104
    %v1671 = vpop.permute.xlu0 %1670
    %1672 = vrot.lane.b32.xlu0 %v400, 104
    %v1673 = vpop.permute.xlu0 %1672
    %v1676 = vsel %vm334, %v1671, 0.0
    %1677 = vadd.xlane.f32.xlu0 %v1676
    %v1678 = vpop.xlane.xlu0 %1677
    %v1679 = vsel %vm334, %v1673, 0.0
    %1680 = vadd.xlane.f32.xlu0 %v1679
    %v1681 = vpop.xlane.xlu0 %1680
    %v1682 = vrsqrt.pop %v1678
    %v1683 = vmul.f32 %v1682, %v1678
    %v1684 = vmul.f32 %v1683, %v1682
    %v1685 = vmul.f32 0.5, %v1684
    %v1686 = vsub.f32 1.5, %v1685
    %v1687 = vmul.f32 %v1682, %v1686
    %vm1688 = vweird.f32 %v1678
    %vm1689 = vweird.f32 %v1682
    %vm1690 = vmor %vm1688, %vm1689
    %v1691 = vsel %vm1690, %v1682, %v1687
    %v1692 = vrsqrt.pop %v1681
    %v1693 = vmul.f32 %v1692, %v1681
    %v1694 = vmul.f32 %v1693, %v1692
    %v1695 = vmul.f32 0.5, %v1694
    %v1696 = vsub.f32 1.5, %v1695
    %v1697 = vmul.f32 %v1692, %v1696
    %vm1698 = vweird.f32 %v1681
    %vm1699 = vweird.f32 %v1692
    %vm1700 = vmor %vm1698, %vm1699
    %v1701 = vsel %vm1700, %v1692, %v1697
    %v1702 = vmul.f32 %v237, %v1691
    %v1703 = vmul.f32 %v240, %v1701
    %1704 = vrot.lane.b32.xlu0 %v399, 72
    %v1705 = vpop.permute.xlu0 %1704
    %1706 = vrot.lane.b32.xlu0 %v400, 72
    %v1707 = vpop.permute.xlu0 %1706
    %v1710 = vsel %vm334, %v1705, 0.0
    %1711 = vadd.xlane.f32.xlu0 %v1710
    %v1712 = vpop.xlane.xlu0 %1711
    %v1713 = vsel %vm334, %v1707, 0.0
    %1714 = vadd.xlane.f32.xlu0 %v1713
    %v1715 = vpop.xlane.xlu0 %1714
    %v1716 = vrsqrt.pop %v1712
    %v1717 = vmul.f32 %v1716, %v1712
    %v1718 = vmul.f32 %v1717, %v1716
    %v1719 = vmul.f32 0.5, %v1718
    %v1720 = vsub.f32 1.5, %v1719
    %v1721 = vmul.f32 %v1716, %v1720
    %vm1722 = vweird.f32 %v1712
    %vm1723 = vweird.f32 %v1716
    %vm1724 = vmor %vm1722, %vm1723
    %v1725 = vsel %vm1724, %v1716, %v1721
    %v1726 = vrsqrt.pop %v1715
    %v1727 = vmul.f32 %v1726, %v1715
    %v1728 = vmul.f32 %v1727, %v1726
    %v1729 = vmul.f32 0.5, %v1728
    %v1730 = vsub.f32 1.5, %v1729
    %v1731 = vmul.f32 %v1726, %v1730
    %vm1732 = vweird.f32 %v1715
    %vm1733 = vweird.f32 %v1726
    %vm1734 = vmor %vm1732, %vm1733
    %v1735 = vsel %vm1734, %v1726, %v1731
    %v1736 = vmul.f32 %v237, %v1725
    %v1737 = vmul.f32 %v240, %v1735
    %1738 = vrot.lane.b32.xlu0 %v332, 40
    %v1739 = vpop.permute.xlu0 %1738
    %1740 = vrot.lane.b32.xlu0 %v333, 40
    %v1741 = vpop.permute.xlu0 %1740
    %v1744 = vsel %vm334, %v1739, 0.0
    %1745 = vadd.xlane.f32.xlu0 %v1744
    %v1746 = vpop.xlane.xlu0 %1745
    %v1747 = vsel %vm334, %v1741, 0.0
    %1748 = vadd.xlane.f32.xlu0 %v1747
    %v1749 = vpop.xlane.xlu0 %1748
    %v1750 = vrsqrt.pop %v1746
    %v1751 = vmul.f32 %v1750, %v1746
    %v1752 = vmul.f32 %v1751, %v1750
    %v1753 = vmul.f32 0.5, %v1752
    %v1754 = vsub.f32 1.5, %v1753
    %v1755 = vmul.f32 %v1750, %v1754
    %vm1756 = vweird.f32 %v1746
    %vm1757 = vweird.f32 %v1750
    %vm1758 = vmor %vm1756, %vm1757
    %v1759 = vsel %vm1758, %v1750, %v1755
    %v1760 = vrsqrt.pop %v1749
    %v1761 = vmul.f32 %v1760, %v1749
    %v1762 = vmul.f32 %v1761, %v1760
    %v1763 = vmul.f32 0.5, %v1762
    %v1764 = vsub.f32 1.5, %v1763
    %v1765 = vmul.f32 %v1760, %v1764
    %vm1766 = vweird.f32 %v1749
    %vm1767 = vweird.f32 %v1760
    %vm1768 = vmor %vm1766, %vm1767
    %v1769 = vsel %vm1768, %v1760, %v1765
    %v1770 = vmul.f32 %v204, %v1759
    %v1771 = vmul.f32 %v207, %v1769
    %1774 = vrot.lane.b32.xlu0 %v1770, 40
    %v1775 = vpop.permute.xlu0 %1774
    %1776 = vrot.lane.b32.xlu0 %v1771, 40
    %v1777 = vpop.permute.xlu0 %1776
    %v1778 = vsel %vm334, %v1775, 0
    %v1780 = vsel %vm334, %v1777, 0
    %1782 = vmatpush.xpose.msra.mxu0 0.0
    %1783 = vmatpush.xpose.msra.mxu0 0.0
    %1784 = vmatpush.xpose.msra.mxu0 0.0
    %1785 = vmatpush.xpose.msra.mxu0 0.0
    %1786 = vmatpush.xpose.msra.mxu0 0.0
    %1787 = vmatpush.xpose.msra.mxu0 0.0
    %1788 = vmatpush.xpose.msra.mxu0 0.0
    %1789 = vmatpush.xpose.msra.mxu0 0.0
    %1790 = vmatpush.xpose.msra.mxu0 0.0
    %1791 = vmatpush.xpose.msra.mxu0 0.0
    %1792 = vmatpush.xpose.msra.mxu0 0.0
    %1793 = vmatpush.xpose.msra.mxu0 0.0
    %1794 = vmatpush.xpose.msra.mxu0 0.0
    %1795 = vmatpush.xpose.msra.mxu0 0.0
    %1796 = vmatpush.xpose.msra.mxu0 %v1780
    %1797 = vmatpush.xpose.msra.mxu0 %v1778
    %1798 = vmatmul.f32.gmra.mxu0 %v1778
    %v1799 = vpop.f32.mrf.mxu0
    %v1800 = vadd.f32 0.0, %v1799
    %1801 = vmatmul.f32.gmra.mxu0 %v1780
    %v1802 = vpop.f32.mrf.mxu0
    %v1803 = vadd.f32 0.0, %v1802
    %1804 = vdwg.mxu0
    %v1805 = vadd.f32 %v1376, %v1800
    %v1806 = vadd.f32 %v1377, %v1803
    %1809 = vrot.lane.b32.xlu0 %v1634, 104
    %v1810 = vpop.permute.xlu0 %1809
    %1811 = vrot.lane.b32.xlu0 %v1635, 104
    %v1812 = vpop.permute.xlu0 %1811
    %1815 = vrot.lane.b32.xlu0 %v1668, 72
    %v1816 = vpop.permute.xlu0 %1815
    %1817 = vrot.lane.b32.xlu0 %v1669, 72
    %v1818 = vpop.permute.xlu0 %1817
    %v1819 = vsel %vm334, %v1810, 0
    %v1821 = vsel %vm334, %v1812, 0
    %v1823 = vsel %vm334, %v1816, 0
    %v1825 = vsel %vm334, %v1818, 0
    %1827 = vmatpush.xpose.msra.mxu0 0.0
    %1828 = vmatpush.xpose.msra.mxu0 0.0
    %1829 = vmatpush.xpose.msra.mxu0 0.0
    %1830 = vmatpush.xpose.msra.mxu0 0.0
    %1831 = vmatpush.xpose.msra.mxu0 0.0
    %1832 = vmatpush.xpose.msra.mxu0 0.0
    %1833 = vmatpush.xpose.msra.mxu0 0.0
    %1834 = vmatpush.xpose.msra.mxu0 0.0
    %1835 = vmatpush.xpose.msra.mxu0 0.0
    %1836 = vmatpush.xpose.msra.mxu0 0.0
    %1837 = vmatpush.xpose.msra.mxu0 0.0
    %1838 = vmatpush.xpose.msra.mxu0 0.0
    %1839 = vmatpush.xpose.msra.mxu0 0.0
    %1840 = vmatpush.xpose.msra.mxu0 0.0
    %1841 = vmatpush.xpose.msra.mxu0 %v1825
    %1842 = vmatpush.xpose.msra.mxu0 %v1823
    %1843 = vmatmul.f32.gmra.mxu0 %v1819
    %v1844 = vpop.f32.mrf.mxu0
    %v1845 = vadd.f32 0.0, %v1844
    %1846 = vmatmul.f32.gmra.mxu0 %v1821
    %v1847 = vpop.f32.mrf.mxu0
    %v1848 = vadd.f32 0.0, %v1847
    %1849 = vdwg.mxu0
    %v1850 = vmul.f32 %v1845, 25.0
    %v1851 = vmul.f32 %v1848, 25.0
    %v1852 = vsel %vm540, %v1850, -inf
    %1853 = vmax.xlane.f32.xlu0 %v1852
    %v1854 = vpop.xlane.xlu0 %1853
    %v1855 = vsel %vm540, %v1851, -inf
    %1856 = vmax.xlane.f32.xlu0 %v1855
    %v1857 = vpop.xlane.xlu0 %1856
    %v1858 = vsub.f32 %v1850, %v1854
    %v1859 = vsub.f32 %v1851, %v1857
    %v1860 = vmul.f32 %v1858, 1.442695
    %v1861 = vpow.pop %v1860
    %v1862 = vmul.f32 %v1859, 1.442695
    %v1863 = vpow.pop %v1862
    %v1864 = vsel %vm540, %v1861, 0.0
    %1865 = vadd.xlane.f32.xlu0 %v1864
    %v1866 = vpop.xlane.xlu0 %1865
    %v1867 = vsel %vm540, %v1863, 0.0
    %1868 = vadd.xlane.f32.xlu0 %v1867
    %v1869 = vpop.xlane.xlu0 %1868
    %v1870 = vrcp.pop %v1866
    %v1871 = vrcp.pop %v1869
    %v1872 = vmul.f32 %v1861, %v1870
    %v1873 = vmul.f32 %v1863, %v1871
    %1876 = vrot.lane.b32.xlu0 %v1702, 104
    %v1877 = vpop.permute.xlu0 %1876
    %1878 = vrot.lane.b32.xlu0 %v1703, 104
    %v1879 = vpop.permute.xlu0 %1878
    %1882 = vrot.lane.b32.xlu0 %v1736, 72
    %v1883 = vpop.permute.xlu0 %1882
    %1884 = vrot.lane.b32.xlu0 %v1737, 72
    %v1885 = vpop.permute.xlu0 %1884
    %v1886 = vsel %vm334, %v1877, 0
    %v1888 = vsel %vm334, %v1879, 0
    %v1890 = vsel %vm334, %v1883, 0
    %v1892 = vsel %vm334, %v1885, 0
    %1894 = vmatpush.xpose.msra.mxu0 0.0
    %1895 = vmatpush.xpose.msra.mxu0 0.0
    %1896 = vmatpush.xpose.msra.mxu0 0.0
    %1897 = vmatpush.xpose.msra.mxu0 0.0
    %1898 = vmatpush.xpose.msra.mxu0 0.0
    %1899 = vmatpush.xpose.msra.mxu0 0.0
    %1900 = vmatpush.xpose.msra.mxu0 0.0
    %1901 = vmatpush.xpose.msra.mxu0 0.0
    %1902 = vmatpush.xpose.msra.mxu0 0.0
    %1903 = vmatpush.xpose.msra.mxu0 0.0
    %1904 = vmatpush.xpose.msra.mxu0 0.0
    %1905 = vmatpush.xpose.msra.mxu0 0.0
    %1906 = vmatpush.xpose.msra.mxu0 0.0
    %1907 = vmatpush.xpose.msra.mxu0 0.0
    %1908 = vmatpush.xpose.msra.mxu0 %v1892
    %1909 = vmatpush.xpose.msra.mxu0 %v1890
    %1910 = vmatmul.f32.gmra.mxu0 %v1886
    %v1911 = vpop.f32.mrf.mxu0
    %v1912 = vadd.f32 0.0, %v1911
    %1913 = vmatmul.f32.gmra.mxu0 %v1888
    %v1914 = vpop.f32.mrf.mxu0
    %v1915 = vadd.f32 0.0, %v1914
    %1916 = vdwg.mxu0
    %v1917 = vmul.f32 %v1912, 25.0
    %v1918 = vmul.f32 %v1915, 25.0
    %v1919 = vsel %vm540, %v1917, -inf
    %1920 = vmax.xlane.f32.xlu0 %v1919
    %v1921 = vpop.xlane.xlu0 %1920
    %v1922 = vsel %vm540, %v1918, -inf
    %1923 = vmax.xlane.f32.xlu0 %v1922
    %v1924 = vpop.xlane.xlu0 %1923
    %v1925 = vsub.f32 %v1917, %v1921
    %v1926 = vsub.f32 %v1918, %v1924
    %v1927 = vmul.f32 %v1925, 1.442695
    %v1928 = vpow.pop %v1927
    %v1929 = vmul.f32 %v1926, 1.442695
    %v1930 = vpow.pop %v1929
    %v1931 = vsel %vm540, %v1928, 0.0
    %1932 = vadd.xlane.f32.xlu0 %v1931
    %v1933 = vpop.xlane.xlu0 %1932
    %v1934 = vsel %vm540, %v1930, 0.0
    %1935 = vadd.xlane.f32.xlu0 %v1934
    %v1936 = vpop.xlane.xlu0 %1935
    %v1937 = vrcp.pop %v1933
    %v1938 = vrcp.pop %v1936
    %v1939 = vmul.f32 %v1928, %v1937
    %v1940 = vmul.f32 %v1930, %v1938
    %v1941 = vadd.f32 %v1872, %v1939
    %v1942 = vadd.f32 %v1873, %v1940
    %v1943 = vmul.f32 %v1941, 0.5
    %v1944 = vmul.f32 %v1942, 0.5
    %v1945 = vadd.f32 %v1516, %v1943
    %v1946 = vadd.f32 %v1517, %v1944
    %v1947 = vpack.c.bf16 %v1944, %v1943
    %1948 = vrot.lane.b32.xlu0 %v258, 40
    %v1949 = vpop.permute.xlu0 %1948
    %v1952 = vsel %vm540, %v1947, 0
    %1954 = vmatpush.bf16.msra.mxu0 0
    %1955 = vmatpush.bf16.msra.mxu0 0
    %1956 = vmatpush.bf16.msra.mxu0 0
    %1957 = vmatpush.bf16.msra.mxu0 0
    %1958 = vmatpush.bf16.msra.mxu0 0
    %1959 = vmatpush.bf16.msra.mxu0 0
    %1960 = vmatpush.bf16.msra.mxu0 0
    %1961 = vmatpush.bf16.msra.mxu0 %v1949
    %1962 = vmatmul.bf16.gmra.mxu0 %v1952
    %v1963 = vpop.f32.mrf.mxu0
    %v1964 = vadd.f32 0.0, %v1963
    %v1965 = vpop.f32.mrf.mxu0
    %v1966 = vadd.f32 0.0, %v1965
    %1967 = vdwg.mxu0
    %v1968 = vpack.c.bf16 %v1966, %v1964
    %v1970 = vsel %vm334, %v1968, 0
    %v1973 = vsel %vm655, %v245, 0
    %1975 = vmatpush.bf16.msra.mxu0 0
    %1976 = vmatpush.bf16.msra.mxu0 0
    %1977 = vmatpush.bf16.msra.mxu0 0
    %1978 = vmatpush.bf16.msra.mxu0 0
    %1979 = vmatpush.bf16.msra.mxu0 0
    %1980 = vmatpush.bf16.msra.mxu0 0
    %1981 = vmatpush.bf16.msra.mxu0 0
    %1982 = vmatpush.bf16.msra.mxu0 %v1973
    %1983 = vmatmul.bf16.gmra.mxu0 %v1970
    %v1984 = vpop.f32.mrf.mxu0
    %v1985 = vadd.f32 0.0, %v1984
    %v1986 = vpop.f32.mrf.mxu0
    %v1987 = vadd.f32 0.0, %v1986
    %1988 = vdwg.mxu0
    %v1989 = vadd.f32 %v1560, %v1985
    %v1990 = vadd.f32 %v1561, %v1987
    %1991 = vrot.lane.b32.xlu0 %v295, 40
    %v1992 = vpop.permute.xlu0 %1991
    %1994 = vmatpush.bf16.msra.mxu0 0
    %1995 = vmatpush.bf16.msra.mxu0 0
    %1996 = vmatpush.bf16.msra.mxu0 0
    %1997 = vmatpush.bf16.msra.mxu0 0
    %1998 = vmatpush.bf16.msra.mxu0 0
    %1999 = vmatpush.bf16.msra.mxu0 0
    %2000 = vmatpush.bf16.msra.mxu0 0
    %2001 = vmatpush.bf16.msra.mxu0 %v1992
    %2002 = vmatmul.bf16.gmra.mxu0 %v1952
    %v2003 = vpop.f32.mrf.mxu0
    %v2004 = vadd.f32 0.0, %v2003
    %v2005 = vpop.f32.mrf.mxu0
    %v2006 = vadd.f32 0.0, %v2005
    %2007 = vdwg.mxu0
    %v2008 = vpack.c.bf16 %v2006, %v2004
    %v2010 = vsel %vm334, %v2008, 0
    %v2013 = vsel %vm655, %v253, 0
    %2015 = vmatpush.bf16.msra.mxu0 0
    %2016 = vmatpush.bf16.msra.mxu0 0
    %2017 = vmatpush.bf16.msra.mxu0 0
    %2018 = vmatpush.bf16.msra.mxu0 0
    %2019 = vmatpush.bf16.msra.mxu0 0
    %2020 = vmatpush.bf16.msra.mxu0 0
    %2021 = vmatpush.bf16.msra.mxu0 0
    %2022 = vmatpush.bf16.msra.mxu0 %v2013
    %2023 = vmatmul.bf16.gmra.mxu0 %v2010
    %v2024 = vpop.f32.mrf.mxu0
    %v2025 = vadd.f32 0.0, %v2024
    %v2026 = vpop.f32.mrf.mxu0
    %v2027 = vadd.f32 0.0, %v2026
    %2028 = vdwg.mxu0
    %v2029 = vadd.f32 %v1600, %v2025
    %v2030 = vadd.f32 %v1601, %v2027
    %v2031 = vmul.f32 %v1805, 0.25
    %v2032 = vmul.f32 %v1806, 0.25
    %vm2033 = vcmp.gt.f32.partialorder %v2031, 0.75
    %vm2034 = vcmp.gt.f32.partialorder %v2032, 0.75
    %v2035 = vsel %vm2033, 1.0, 0.0
    %v2036 = vsel %vm2034, 1.0, 0.0
    %v2037 = vmul.f32 %v1945, 0.25
    %v2038 = vmul.f32 %v1946, 0.25
    %v2039 = vsel %vm540, %v2037, -inf
    %2040 = vmax.xlane.f32.xlu0 %v2039
    %v2041 = vpop.xlane.xlu0 %2040
    %v2042 = vsel %vm540, %v2038, -inf
    %2043 = vmax.xlane.f32.xlu0 %v2042
    %v2044 = vpop.xlane.xlu0 %2043
    %v2045 = vsub.f32 %v2037, %v2041
    %v2046 = vsub.f32 %v2038, %v2044
    %v2047 = vmul.f32 %v2045, 1.442695
    %v2048 = vpow.pop %v2047
    %v2049 = vmul.f32 %v2046, 1.442695
    %v2050 = vpow.pop %v2049
    %v2051 = vsel %vm540, %v2048, 0.0
    %2052 = vadd.xlane.f32.xlu0 %v2051
    %v2053 = vpop.xlane.xlu0 %2052
    %v2054 = vsel %vm540, %v2050, 0.0
    %2055 = vadd.xlane.f32.xlu0 %v2054
    %v2056 = vpop.xlane.xlu0 %2055
    %v2057 = vrcp.pop %v2053
    %v2058 = vrcp.pop %v2056
    %v2059 = vmul.f32 %v2048, %v2057
    %v2060 = vmul.f32 %v2050, %v2058
    %v2061 = vmul.f32 %v2035, %v2059
    %v2062 = vmul.f32 %v2036, %v2060
    %v2063 = vsel %vm540, %v2061, 0.0
    %2064 = vadd.xlane.f32.xlu0 %v2063
    %v2065 = vpop.xlane.xlu0 %2064
    %v2066 = vsel %vm540, %v2062, 0.0
    %2067 = vadd.xlane.f32.xlu0 %v2066
    %v2068 = vpop.xlane.xlu0 %2067
    %v2069 = vrcp.pop %v2065
    %v2070 = vrcp.pop %v2068
    %v2071 = vmul.f32 %v2061, %v2069
    %v2072 = vmul.f32 %v2062, %v2070
    %v2073 = vld [vmem:[#allocation13] sm:$0xf]
    %v2074 = vld [vmem:[#allocation13 + $0x4] sm:$0xf]
    %v2075 = vld [vmem:[#allocation13 + $0x8] sm:$0xf]
    %v2076 = vld [vmem:[#allocation13 + $0xc] sm:$0xf]
    %v2077 = vld [vmem:[#allocation13 + $0x10] sm:$0xf]
    %v2078 = vld [vmem:[#allocation13 + $0x14] sm:$0xf]
    %v2079 = vld [vmem:[#allocation13 + $0x18] sm:$0xf]
    %v2080 = vld [vmem:[#allocation13 + $0x1c] sm:$0xf]
    %v2081 = vld [vmem:[#allocation13 + $0x20] sm:$0xf]
    %v2082 = vld [vmem:[#allocation13 + $0x24] sm:$0xf]
    %v2083 = vld [vmem:[#allocation13 + $0x28] sm:$0xf]
    %v2084 = vld [vmem:[#allocation13 + $0x2c] sm:$0xf]
    %v2085 = vld [vmem:[#allocation13 + $0x30] sm:$0xf]
    %v2086 = vld [vmem:[#allocation13 + $0x34] sm:$0xf]
    %v2087 = vld [vmem:[#allocation13 + $0x38] sm:$0xf]
    %v2088 = vld [vmem:[#allocation13 + $0x3c] sm:$0xf]
    %v2089 = vld [vmem:[#allocation14] sm:$0xf]
    %v2090 = vld [vmem:[#allocation14 + $0x4] sm:$0xf]
    %v2091 = vld [vmem:[#allocation14 + $0x8] sm:$0xf]
    %v2092 = vld [vmem:[#allocation14 + $0xc] sm:$0xf]
    %v2093 = vld [vmem:[#allocation14 + $0x10] sm:$0xf]
    %v2094 = vld [vmem:[#allocation14 + $0x14] sm:$0xf]
    %v2095 = vld [vmem:[#allocation14 + $0x18] sm:$0xf]
    %v2096 = vld [vmem:[#allocation14 + $0x1c] sm:$0xf]
    %v2097 = vld [vmem:[#allocation14 + $0x20] sm:$0xf]
    %v2098 = vld [vmem:[#allocation14 + $0x24] sm:$0xf]
    %v2099 = vld [vmem:[#allocation14 + $0x28] sm:$0xf]
    %v2100 = vld [vmem:[#allocation14 + $0x2c] sm:$0xf]
    %v2101 = vld [vmem:[#allocation14 + $0x30] sm:$0xf]
    %v2102 = vld [vmem:[#allocation14 + $0x34] sm:$0xf]
    %v2103 = vld [vmem:[#allocation14 + $0x38] sm:$0xf]
    %v2104 = vld [vmem:[#allocation14 + $0x3c] sm:$0xf]
    %v2105 = vpack.c.bf16 %v2072, %v2071
    %v2106 = vpack.c.bf16 %v1990, %v1989
    %v2108 = vsel %vm540, %v2105, 0
    %2110 = vmatpush.bf16.msra.mxu0 0
    %2111 = vmatpush.bf16.msra.mxu0 0
    %2112 = vmatpush.bf16.msra.mxu0 0
    %2113 = vmatpush.bf16.msra.mxu0 0
    %2114 = vmatpush.bf16.msra.mxu0 0
    %2115 = vmatpush.bf16.msra.mxu0 0
    %2116 = vmatpush.bf16.msra.mxu0 0
    %2117 = vmatpush.bf16.msra.mxu0 %v2106
    %2118 = vmatmul.bf16.gmra.mxu0 %v2108
    %v2119 = vpop.f32.mrf.mxu0
    %v2120 = vadd.f32 0.0, %v2119
    %v2121 = vpop.f32.mrf.mxu0
    %v2122 = vadd.f32 0.0, %v2121
    %2123 = vdwg.mxu0
    %v2124 = vpack.c.bf16 %v2030, %v2029
    %2125 = vmatpush.bf16.msra.mxu0 0
    %2126 = vmatpush.bf16.msra.mxu0 0
    %2127 = vmatpush.bf16.msra.mxu0 0
    %2128 = vmatpush.bf16.msra.mxu0 0
    %2129 = vmatpush.bf16.msra.mxu0 0
    %2130 = vmatpush.bf16.msra.mxu0 0
    %2131 = vmatpush.bf16.msra.mxu0 0
    %2132 = vmatpush.bf16.msra.mxu0 %v2124
    %2133 = vmatmul.bf16.gmra.mxu0 %v2108
    %v2134 = vpop.f32.mrf.mxu0
    %v2135 = vadd.f32 0.0, %v2134
    %v2136 = vpop.f32.mrf.mxu0
    %v2137 = vadd.f32 0.0, %v2136
    %2138 = vdwg.mxu0
    %v2139 = vpack.c.bf16 %v2122, %v2120
    %v2148 = vunpack.c.l.b16 %v2081
    %v2149 = vunpack.c.l.b16 %v2082
    %v2150 = vunpack.c.l.b16 %v2083
    %v2151 = vunpack.c.l.b16 %v2084
    %v2152 = vunpack.c.l.b16 %v2085
    %v2153 = vunpack.c.l.b16 %v2086
    %v2154 = vunpack.c.l.b16 %v2087
    %v2155 = vunpack.c.l.b16 %v2088
    %v2156 = vpack.c.b16 %v2149, %v2148
    %v2157 = vpack.c.b16 %v2151, %v2150
    %v2158 = vpack.c.b16 %v2153, %v2152
    %v2159 = vpack.c.b16 %v2155, %v2154
    %vm2164 = vcmask 523264
    %v2166 = vsel %vm2164, %v2106, 0
    %2168 = vmatpush.bf16.msra.mxu0 0
    %2169 = vmatpush.bf16.msra.mxu0 0
    %2170 = vmatpush.bf16.msra.mxu0 0
    %2171 = vmatpush.bf16.msra.mxu0 0
    %2172 = vmatpush.bf16.msra.mxu0 %v2159
    %2173 = vmatpush.bf16.msra.mxu0 %v2158
    %2174 = vmatpush.bf16.msra.mxu0 %v2157
    %2175 = vmatpush.bf16.msra.mxu0 %v2156
    %2176 = vmatmul.bf16.gmra.mxu0 %v2166
    %v2177 = vpop.f32.mrf.mxu0
    %v2178 = vadd.f32 0.0, %v2177
    %v2179 = vpop.f32.mrf.mxu0
    %v2180 = vadd.f32 0.0, %v2179
    %2181 = vdwg.mxu0
    %v2190 = vunpack.c.l.b16 %v2073
    %v2191 = vunpack.c.l.b16 %v2074
    %v2192 = vunpack.c.l.b16 %v2075
    %v2193 = vunpack.c.l.b16 %v2076
    %v2194 = vunpack.c.l.b16 %v2077
    %v2195 = vunpack.c.l.b16 %v2078
    %v2196 = vunpack.c.l.b16 %v2079
    %v2197 = vunpack.c.l.b16 %v2080
    %v2198 = vpack.c.b16 %v2191, %v2190
    %v2199 = vpack.c.b16 %v2193, %v2192
    %v2200 = vpack.c.b16 %v2195, %v2194
    %v2201 = vpack.c.b16 %v2197, %v2196
    %v2207 = vsel %vm2164, %v2139, 0
    %2209 = vmatpush.bf16.msra.mxu0 0
    %2210 = vmatpush.bf16.msra.mxu0 0
    %2211 = vmatpush.bf16.msra.mxu0 0
    %2212 = vmatpush.bf16.msra.mxu0 0
    %2213 = vmatpush.bf16.msra.mxu0 %v2201
    %2214 = vmatpush.bf16.msra.mxu0 %v2200
    %2215 = vmatpush.bf16.msra.mxu0 %v2199
    %2216 = vmatpush.bf16.msra.mxu0 %v2198
    %2217 = vmatmul.bf16.gmra.mxu0 %v2207
    %v2218 = vpop.f32.mrf.mxu0
    %v2219 = vadd.f32 %v2178, %v2218
    %v2220 = vpop.f32.mrf.mxu0
    %v2221 = vadd.f32 %v2180, %v2220
    %2222 = vdwg.mxu0
    %v2223 = vld [vmem:[%s9] sm:$0x1]
    %v2225 = vperm.slane %v2223, 0
    %v2227 = vadd.f32 %v2219, %v2225
    %v2228 = vadd.f32 %v2221, %v2225
    %2229 = vst [vmem:[#allocation16] sm:$0xff] %v2227
    %2230 = vst [vmem:[#allocation16 + $0x8] sm:$0xff] %v2228
    %v2231 = vpack.c.bf16 %v2137, %v2135
    %v2240 = vunpack.c.l.b16 %v2097
    %v2241 = vunpack.c.l.b16 %v2098
    %v2242 = vunpack.c.l.b16 %v2099
    %v2243 = vunpack.c.l.b16 %v2100
    %v2244 = vunpack.c.l.b16 %v2101
    %v2245 = vunpack.c.l.b16 %v2102
    %v2246 = vunpack.c.l.b16 %v2103
    %v2247 = vunpack.c.l.b16 %v2104
    %v2248 = vpack.c.b16 %v2241, %v2240
    %v2249 = vpack.c.b16 %v2243, %v2242
    %v2250 = vpack.c.b16 %v2245, %v2244
    %v2251 = vpack.c.b16 %v2247, %v2246
    %v2257 = vsel %vm2164, %v2124, 0
    %2259 = vmatpush.bf16.msra.mxu0 0
    %2260 = vmatpush.bf16.msra.mxu0 0
    %2261 = vmatpush.bf16.msra.mxu0 0
    %2262 = vmatpush.bf16.msra.mxu0 0
    %2263 = vmatpush.bf16.msra.mxu0 %v2251
    %2264 = vmatpush.bf16.msra.mxu0 %v2250
    %2265 = vmatpush.bf16.msra.mxu0 %v2249
    %2266 = vmatpush.bf16.msra.mxu0 %v2248
    %2267 = vmatmul.bf16.gmra.mxu0 %v2257
    %v2268 = vpop.f32.mrf.mxu0
    %v2269 = vadd.f32 0.0, %v2268
    %v2270 = vpop.f32.mrf.mxu0
    %v2271 = vadd.f32 0.0, %v2270
    %2272 = vdwg.mxu0
    %v2281 = vunpack.c.l.b16 %v2089
    %v2282 = vunpack.c.l.b16 %v2090
    %v2283 = vunpack.c.l.b16 %v2091
    %v2284 = vunpack.c.l.b16 %v2092
    %v2285 = vunpack.c.l.b16 %v2093
    %v2286 = vunpack.c.l.b16 %v2094
    %v2287 = vunpack.c.l.b16 %v2095
    %v2288 = vunpack.c.l.b16 %v2096
    %v2289 = vpack.c.b16 %v2282, %v2281
    %v2290 = vpack.c.b16 %v2284, %v2283
    %v2291 = vpack.c.b16 %v2286, %v2285
    %v2292 = vpack.c.b16 %v2288, %v2287
    %v2298 = vsel %vm2164, %v2231, 0
    %2300 = vmatpush.bf16.msra.mxu0 0
    %2301 = vmatpush.bf16.msra.mxu0 0
    %2302 = vmatpush.bf16.msra.mxu0 0
    %2303 = vmatpush.bf16.msra.mxu0 0
    %2304 = vmatpush.bf16.msra.mxu0 %v2292
    %2305 = vmatpush.bf16.msra.mxu0 %v2291
    %2306 = vmatpush.bf16.msra.mxu0 %v2290
    %2307 = vmatpush.bf16.msra.mxu0 %v2289
    %2308 = vmatmul.bf16.gmra.mxu0 %v2298
    %v2309 = vpop.f32.mrf.mxu0
    %v2310 = vadd.f32 %v2269, %v2309
    %v2311 = vpop.f32.mrf.mxu0
    %v2312 = vadd.f32 %v2271, %v2311
    %2313 = vdwg.mxu0
    %v2314 = vld [vmem:[%s11] sm:$0x1]
    %v2316 = vperm.slane %v2314, 0
    %v2318 = vadd.f32 %v2310, %v2316
    %v2319 = vadd.f32 %v2312, %v2316
    %2320 = vst [vmem:[#allocation17] sm:$0xff] %v2318
    %2321 = vst [vmem:[#allocation17 + $0x8] sm:$0xff] %v2319
    // Predicated region
    $region82: #{msa_yolov_forward.1} parent=1 // pred_check
      _
    $region83: #{msa_yolov_forward.1} parent=1 // pred_check_branch
      %2323 = sbr.rel (0) target = $region85
    $region84: #{msa_yolov_forward.1} parent=1 // pred_region
      %2325 = vsyncadd [#allocation4], 0
      %s2326 = sshll.u32 [#allocation16], 4
      %s2327 = int_to_ptr.vmem [resolvable:$true] %s2326
      %s2328 = sshll.u32 %s12, 4
      %s2329 = int_to_ptr.hbm [resolvable:$true] %s2328
      %2334 = dma.vmem_to_hbm [thread:$0]  %s2327, 256, %s2329, [#allocation4], 128, 128, 8
    $region85: #{msa_yolov_forward.1} parent=1 // pred_fallthru
      _
    // Predicated region
    $region86: #{msa_yolov_forward.1} parent=1 // pred_check
      _
    $region87: #{msa_yolov_forward.1} parent=1 // pred_check_branch
      %2336 = sbr.rel (0) target = $region89
    $region88: #{msa_yolov_forward.1} parent=1 // pred_region
      %2338 = vsyncadd [#allocation18], 0
      %s2339 = sshll.u32 [#allocation17], 4
      %s2340 = int_to_ptr.vmem [resolvable:$true] %s2339
      %s2341 = sshll.u32 %s13, 4
      %s2342 = int_to_ptr.hbm [resolvable:$true] %s2341
      %2347 = dma.vmem_to_hbm [thread:$0]  %s2340, 256, %s2342, [#allocation18], 128, 128, 8
    $region89: #{msa_yolov_forward.1} parent=1 // pred_fallthru
      _
    // Predicated region
    $region90: #{msa_yolov_forward.1} parent=1 // pred_check
      _
    $region91: #{msa_yolov_forward.1} parent=1 // pred_check_branch
      %2349 = sbr.rel (0) target = $region93
    $region92: #{msa_yolov_forward.1} parent=1 // pred_region
      %2351 = dma.done [#allocation4], 256
    $region93: #{msa_yolov_forward.1} parent=1 // pred_fallthru
      _
    // Predicated region
    $region94: #{msa_yolov_forward.1} parent=1 // pred_check
      _
    $region95: #{msa_yolov_forward.1} parent=1 // pred_check_branch
      %2353 = sbr.rel (0) target = $region97
    $region96: #{msa_yolov_forward.1} parent=1 // pred_region
      %2355 = dma.done [#allocation18], 256
    $region97: #{msa_yolov_forward.1} parent=1 // pred_fallthru
      _
    %2356 = vsyncpa [#allocation3], 1
    %2357 = vsyncpa [#allocation6], 1
    %2358 = vsyncpa [#allocation9], 1
    %2359 = vsyncpa [#allocation12], 1
    %2360 = vsyncpa [#allocation15], 1
    %2361 = vsyncpa [#allocation4], 1
    %2362 = vsyncpa [#allocation18], 1

</llo_original>
